<compile_context>
chip_gen: v5e
topology: v5e:2x2
jax: 0.10.0
libtpu: 0.0.40
codegen_flags: <defaults>
</compile_context>

<pallas_src>
import functools

import jax
import jax.numpy as jnp
from jax.experimental import pallas as pl
from jax.experimental.pallas import tpu as pltpu


# ---------------------------------------------------------------------------
# Fused per-image kernel (grid over batch)
# ---------------------------------------------------------------------------
def _fused_kernel(xt_ref, w1_ref, b1_ref, w2_ref, b2_ref, w3_ref, b3_ref,
                  tw1_ref, tb1_ref, tw2_ref, tb2_ref, tw3_ref, tb3_ref,
                  out_ref,
                  pad2_ref, hv2_ref, pad3_ref, hv3_ref, d3_ref,
                  *, H, W):
    f32, bf16 = jnp.float32, jnp.bfloat16

    # Static per-image geometry.
    H2, W2 = H // 2, W // 2
    H4, W4 = H // 4, W // 4
    H8, W8 = H // 8, W // 8
    Hp2, Wp2 = H2 + 2, W2 + 2
    Hp3, Wp3 = H4 + 2, W4 + 2
    M2, M3 = Wp2 + 1, Wp3 + 1          # read margin = max |tap row offset|
    R2, R3 = Hp2 * Wp2, Hp3 * Wp3
    L2, L3 = R2 - Wp2 - 1, R3 - Wp3 - 1
    Rlat = H8 * W8

    # Zero pad rings + margins (small bf16 slabs; interiors are fully
    # rewritten below before they are read).
    pad2_ref[...] = jnp.zeros_like(pad2_ref)
    pad3_ref[...] = jnp.zeros_like(pad3_ref)

    # ------------------------------ stage 1 -------------------------------
    # conv1 + ReLU: one MXU matmul over host-built 9-tap columns (K padded to
    # 16).  Rows are ordered (pool-corner, i2, j2).
    y1 = jnp.maximum(
        jnp.dot(xt_ref[...], w1_ref[...], preferred_element_type=f32)
        + b1_ref[...], 0.0)                                    # (H*W, 32) f32
    # 2x2 max-pool: the four corners are four contiguous quarter slabs.
    q = H2 * W2
    p1 = jnp.maximum(jnp.maximum(y1[0:q], y1[q:2 * q]),
                     jnp.maximum(y1[2 * q:3 * q], y1[3 * q:4 * q]))
    p1 = p1.astype(bf16)                                       # (H2*W2, 32)
    # Scatter pooled rows into conv2's zero-padded bf16 input slab.
    for i2 in range(H2):
        d0 = M2 + (i2 + 1) * Wp2 + 1
        pad2_ref[d0:d0 + W2, :] = p1[i2 * W2:(i2 + 1) * W2, :]

    # ------------------------------ stage 2 -------------------------------
    # conv2 + ReLU: single K=9*32=288 matmul over every padded position
    # (border rows are garbage but never read downstream).
    taps2 = jnp.concatenate(
        [pad2_ref[M2 + (di - 1) * Wp2 + (dj - 1):
                  M2 + (di - 1) * Wp2 + (dj - 1) + R2, :]
         for di in range(3) for dj in range(3)], axis=1)       # (R2, 288) bf16
    y2 = jnp.maximum(
        jnp.dot(taps2, w2_ref[...], preferred_element_type=f32)
        + b2_ref[...], 0.0)                                    # (R2, 64) f32
    # Slab-level 2x2 max (vertical + horizontal shifts), then one stride-2
    # read + one store per pooled row.
    hv2_ref[...] = jnp.maximum(
        jnp.maximum(y2[0:L2], y2[1:1 + L2]),
        jnp.maximum(y2[Wp2:Wp2 + L2], y2[Wp2 + 1:Wp2 + 1 + L2]))
    for i2 in range(H4):
        s0 = (2 * i2 + 1) * Wp2 + 1
        d0 = M3 + (i2 + 1) * Wp3 + 1
        pad3_ref[d0:d0 + W4, :] = (
            hv2_ref[pl.ds(s0, W4, stride=2), :].astype(bf16))

    # ------------------------------ stage 3 -------------------------------
    taps3 = jnp.concatenate(
        [pad3_ref[M3 + (di - 1) * Wp3 + (dj - 1):
                  M3 + (di - 1) * Wp3 + (dj - 1) + R3, :]
         for di in range(3) for dj in range(3)], axis=1)       # (R3, 576) bf16
    y3 = jnp.maximum(
        jnp.dot(taps3, w3_ref[...], preferred_element_type=f32)
        + b3_ref[...], 0.0)                                    # (R3, 128) f32
    hv3_ref[...] = jnp.maximum(
        jnp.maximum(y3[0:L3], y3[1:1 + L3]),
        jnp.maximum(y3[Wp3:Wp3 + L3], y3[Wp3 + 1:Wp3 + 1 + L3]))
    # Latent code: rows (i8, j8), 128 lanes.
    z = jnp.concatenate(
        [hv3_ref[pl.ds((2 * i8 + 1) * Wp3 + 1, W8, stride=2), :]
         for i8 in range(H8)], axis=0)                         # (H8*W8, 128)

    # ------------------------------ decoder -------------------------------
    # Each ConvTranspose2d(2, stride=2) is a per-pixel matmul; the 2x2 pixel
    # shuffle is folded into (block-diagonal) weight columns.
    d1 = jnp.maximum(jnp.dot(z.astype(bf16), tw1_ref[...],
                             preferred_element_type=f32) + tb1_ref[...], 0.0)
    d2 = jnp.maximum(jnp.dot(d1.astype(bf16), tw2_ref[...],
                             preferred_element_type=f32) + tb2_ref[...], 0.0)
    d3_ref[...] = jnp.dot(d2.astype(bf16), tw3_ref[...],
                          preferred_element_type=f32) + tb3_ref[...]
    # Lane-dense (128-wide) output: pack two adjacent latent pixels per row;
    # sigmoid = EUP exp + approx reciprocal (off the VPU).
    d3p = jnp.concatenate(
        [d3_ref[pl.ds(0, Rlat // 2, stride=2), :],
         d3_ref[pl.ds(1, Rlat // 2, stride=2), :]], axis=1)    # (Rlat/2, 128)
    out_ref[...] = pl.reciprocal(1.0 + jnp.exp(-d3p), approx=True)


# ---------------------------------------------------------------------------
# Host-side parameter / input re-layout (layout glue only)
# ---------------------------------------------------------------------------
def _conv_w_flat(w):
    """Conv2d weight (Cout, Cin, 3, 3) -> (9*Cin, Cout), K ordered (tap, cin)."""
    cout, cin = w.shape[0], w.shape[1]
    return jnp.transpose(w, (2, 3, 1, 0)).reshape(9 * cin, cout)


def _tconv_w_flat(w):
    """ConvTranspose2d weight (Cin, Cout, 2, 2) -> (Cin, 4*Cout), cols (a,b,co)."""
    cin, cout = w.shape[0], w.shape[1]
    return jnp.transpose(w, (0, 2, 3, 1)).reshape(cin, 4 * cout)


def prepare_params(params):
    bf16, f32 = jnp.bfloat16, jnp.float32

    w1 = jnp.pad(_conv_w_flat(params["conv1_w"]), ((0, 7), (0, 0)))  # (16, 32)
    t2 = jnp.kron(jnp.eye(4, dtype=f32), _tconv_w_flat(params["tconv2_w"]))
    t3 = jnp.kron(jnp.eye(16, dtype=f32), _tconv_w_flat(params["tconv3_w"]))
    # Reorder tconv3 output columns from (a1,b1,a2,b2,a3,b3) to
    # (a1,a2,a3,b1,b2,b3): each output lane becomes (row_bits, col_bits) of the
    # 8x8 block a latent pixel expands into.
    perm = [a1 * 32 + b1 * 16 + a2 * 8 + b2 * 4 + a3 * 2 + b3
            for a1 in range(2) for a2 in range(2) for a3 in range(2)
            for b1 in range(2) for b2 in range(2) for b3 in range(2)]
    t3 = t3[:, jnp.array(perm)]

    return {
        "w1": w1.astype(bf16),                                       # (16, 32)
        "b1": params["conv1_b"].reshape(1, -1).astype(f32),
        "w2": _conv_w_flat(params["conv2_w"]).astype(bf16),          # (288, 64)
        "b2": params["conv2_b"].reshape(1, -1).astype(f32),
        "w3": _conv_w_flat(params["conv3_w"]).astype(bf16),          # (576, 128)
        "b3": params["conv3_b"].reshape(1, -1).astype(f32),
        "tw1": _tconv_w_flat(params["tconv1_w"]).astype(bf16),       # (128, 256)
        "tb1": jnp.tile(params["tconv1_b"], 4).reshape(1, -1).astype(f32),
        "tw2": t2.astype(bf16),                                      # (256, 512)
        "tb2": jnp.tile(params["tconv2_b"], 16).reshape(1, -1).astype(f32),
        "tw3": t3.astype(bf16),                                      # (512, 64)
        "tb3": jnp.tile(params["tconv3_b"], 64).reshape(1, -1).astype(f32),
    }


def _build_conv1_taps(x_nchw):
    """(N,1,H,W) f32 -> (N, H*W, 16) bf16 9-tap columns (K padded to 16), rows
    ordered (pool corner, i//2, j//2) so conv1's 2x2 pool is 4 contiguous
    quarter slabs in the kernel."""
    N, _, H, W = x_nchw.shape
    H2, W2 = H // 2, W // 2
    xp = jnp.pad(x_nchw[:, 0], ((0, 0), (1, 1), (1, 1)))          # (N, H+2, W+2)
    taps = jnp.stack([xp[:, di:di + H, dj:dj + W]
                      for di in range(3) for dj in range(3)], axis=-1)
    taps = taps.reshape(N, H2, 2, W2, 2, 9).transpose(0, 2, 4, 1, 3, 5)
    taps = taps.reshape(N, H * W, 9)
    taps = jnp.pad(taps, ((0, 0), (0, 0), (0, 7)))                # K 9 -> 16
    return taps.astype(jnp.bfloat16)


def _vmem_limit_bytes(H, W):
    """Rough per-step working set (128-lane padded), with headroom."""
    H2, W2, H4, W4, H8, W8 = H // 2, W // 2, H // 4, W // 4, H // 8, W // 8
    Wp2, Wp3 = W2 + 2, W4 + 2
    R2, R3 = (H2 + 2) * Wp2, (H4 + 2) * Wp3
    est = 2 * 2 * H * W * 128                               # x_taps (2 buffers)
    est += (R2 + 2 * (Wp2 + 1)) * 128 * 2 + R2 * 128 * 4    # pad2 + hv2
    est += (R3 + 2 * (Wp3 + 1)) * 128 * 2 + R3 * 128 * 4    # pad3 + hv3
    est += H8 * W8 * 128 * 4 + 2 * (H8 * W8 // 2) * 128 * 4
    est += H * W * 128 * 4 + R2 * (512 * 2 + 128 * 4) + R3 * (640 * 2 + 128 * 4)
    est += 4 << 20                                          # weights + misc
    return min(max(2 * est, 16 << 20), 64 << 20)


# ---------------------------------------------------------------------------
# Forward pass wrapper
# ---------------------------------------------------------------------------
def deep_conv_autoencoder(prep, x_nchw):
    """x_nchw: (N, 1, H, W) f32 -> (N, 1, H, W) f32."""
    N, C, H, W = x_nchw.shape
    assert C == 1 and H % 8 == 0 and W % 16 == 0
    H2, W2 = H // 2, W // 2
    H4, W4 = H // 4, W // 4
    H8, W8 = H // 8, W // 8
    Hp2, Wp2, Hp3, Wp3 = H2 + 2, W2 + 2, H4 + 2, W4 + 2
    M2, M3 = Wp2 + 1, Wp3 + 1
    R2, R3 = Hp2 * Wp2, Hp3 * Wp3
    L2, L3 = R2 - Wp2 - 1, R3 - Wp3 - 1
    Rlat = H8 * W8

    x_taps = _build_conv1_taps(x_nchw)                       # (N, H*W, 16) bf16

    full = lambda a: pl.BlockSpec(a.shape, lambda n: (0,) * a.ndim)
    per_img = lambda rows, lanes: pl.BlockSpec((None, rows, lanes),
                                               lambda n: (n, 0, 0))

    out = pl.pallas_call(
        functools.partial(_fused_kernel, H=H, W=W),
        grid=(N,),
        in_specs=[per_img(H * W, 16),
                  full(prep["w1"]), full(prep["b1"]),
                  full(prep["w2"]), full(prep["b2"]),
                  full(prep["w3"]), full(prep["b3"]),
                  full(prep["tw1"]), full(prep["tb1"]),
                  full(prep["tw2"]), full(prep["tb2"]),
                  full(prep["tw3"]), full(prep["tb3"])],
        out_specs=per_img(Rlat // 2, 128),
        out_shape=jax.ShapeDtypeStruct((N, Rlat // 2, 128), jnp.float32),
        scratch_shapes=[
            pltpu.VMEM((R2 + 2 * M2, 32), jnp.bfloat16),     # padded conv2 in
            pltpu.VMEM((L2, 64), jnp.float32),               # stage-2 2x2 max
            pltpu.VMEM((R3 + 2 * M3, 64), jnp.bfloat16),     # padded conv3 in
            pltpu.VMEM((L3, 128), jnp.float32),              # stage-3 2x2 max
            pltpu.VMEM((Rlat, 64), jnp.float32),             # decoder output
        ],
        compiler_params=pltpu.CompilerParams(
            dimension_semantics=("parallel",),
            vmem_limit_bytes=_vmem_limit_bytes(H, W)),
    )(x_taps,
      prep["w1"], prep["b1"], prep["w2"], prep["b2"], prep["w3"], prep["b3"],
      prep["tw1"], prep["tb1"], prep["tw2"], prep["tb2"],
      prep["tw3"], prep["tb3"])

    # Depth-to-space: row = (i8, j8_pair), lanes = (pair, row_bits, col_bits).
    y = out.reshape(N, H8, W8 // 2, 2, 8, 8).transpose(0, 1, 4, 2, 3, 5)
    return y.reshape(N, 1, H, W)


forward = jax.jit(deep_conv_autoencoder)


# ---------------------------------------------------------------------------
# Parameters + pure-XLA reference (numerical cross-check)
# ---------------------------------------------------------------------------
def init_params(key):
    ks = jax.random.split(key, 12)

    def conv_w(k, cout, cin, kh, kw, scale=0.1):
        return (scale * jax.random.normal(k, (cout, cin, kh, kw))).astype(jnp.float32)

    def tconv_w(k, cin, cout, kh, kw, scale=0.1):
        return (scale * jax.random.normal(k, (cin, cout, kh, kw))).astype(jnp.float32)

    def bias(k, c, scale=0.05):
        return (scale * jax.random.normal(k, (c,))).astype(jnp.float32)

    return {
        "conv1_w": conv_w(ks[0], 32, 1, 3, 3),   "conv1_b": bias(ks[1], 32),
        "conv2_w": conv_w(ks[2], 64, 32, 3, 3),  "conv2_b": bias(ks[3], 64),
        "conv3_w": conv_w(ks[4], 128, 64, 3, 3), "conv3_b": bias(ks[5], 128),
        "tconv1_w": tconv_w(ks[6], 128, 64, 2, 2), "tconv1_b": bias(ks[7], 64),
        "tconv2_w": tconv_w(ks[8], 64, 32, 2, 2),  "tconv2_b": bias(ks[9], 32),
        "tconv3_w": tconv_w(ks[10], 32, 1, 2, 2),  "tconv3_b": bias(ks[11], 1),
    }


def reference_forward(params, x):
    def conv(h, w, b):
        y = jax.lax.conv_general_dilated(
            h, w, window_strides=(1, 1), padding=((1, 1), (1, 1)),
            dimension_numbers=("NCHW", "OIHW", "NCHW"))
        return jax.nn.relu(y + b[None, :, None, None])

    def pool(h):
        return jax.lax.reduce_window(h, -jnp.inf, jax.lax.max,
                                     (1, 1, 2, 2), (1, 1, 2, 2), "VALID")

    def tconv(h, w, b):
        n, _, hh, ww = h.shape
        co = w.shape[1]
        y = jnp.einsum("ncij,cdab->ndiajb", h, w).reshape(n, co, 2 * hh, 2 * ww)
        return y + b[None, :, None, None]

    h = pool(conv(x, params["conv1_w"], params["conv1_b"]))
    h = pool(conv(h, params["conv2_w"], params["conv2_b"]))
    h = pool(conv(h, params["conv3_w"], params["conv3_b"]))
    h = jax.nn.relu(tconv(h, params["tconv1_w"], params["tconv1_b"]))
    h = jax.nn.relu(tconv(h, params["tconv2_w"], params["tconv2_b"]))
    return jax.nn.sigmoid(tconv(h, params["tconv3_w"], params["tconv3_b"]))


# ---------------------------------------------------------------------------
# Main
# ---------------------------------------------------------------------------
if __name__ == "__main__":
    N, C, H, W = 2, 1, 16, 16
    x = jax.random.uniform(jax.random.PRNGKey(0), (N, C, H, W),
                           dtype=jnp.float32)
    params = init_params(jax.random.PRNGKey(42))
    prep = prepare_params(params)

    y = jax.block_until_ready(forward(prep, x))

    assert y.shape == (N, C, H, W), y.shape
    assert y.dtype == jnp.float32
    assert bool(jnp.all((y >= 0.0) & (y <= 1.0)))

    # Cross-check against a pure-XLA f32 reference (kernel uses bf16 MXU
    # operands -> loose tolerance).
    y_ref = reference_forward(params, x)
    max_err = float(jnp.max(jnp.abs(y - y_ref)))
    assert max_err < 0.05, max_err

    print("KERNEL_OK")
</pallas_src>

<mosaic_0001>
module attributes {stable_mosaic.version = 11 : i64} {
  func.func @_fused_kernel(%arg0: i32, %arg1: memref<1x256x16xbf16, #tpu.memory_space<vmem>>, %arg2: memref<16x32xbf16, #tpu.memory_space<vmem>>, %arg3: memref<1x32xf32, #tpu.memory_space<vmem>>, %arg4: memref<288x64xbf16, #tpu.memory_space<vmem>>, %arg5: memref<1x64xf32, #tpu.memory_space<vmem>>, %arg6: memref<576x128xbf16, #tpu.memory_space<vmem>>, %arg7: memref<1x128xf32, #tpu.memory_space<vmem>>, %arg8: memref<128x256xbf16, #tpu.memory_space<vmem>>, %arg9: memref<1x256xf32, #tpu.memory_space<vmem>>, %arg10: memref<256x512xbf16, #tpu.memory_space<vmem>>, %arg11: memref<1x512xf32, #tpu.memory_space<vmem>>, %arg12: memref<512x64xbf16, #tpu.memory_space<vmem>>, %arg13: memref<1x64xf32, #tpu.memory_space<vmem>>, %arg14: memref<1x2x128xf32, #tpu.memory_space<vmem>>, %arg15: memref<122x32xbf16, #tpu.memory_space<vmem>>, %arg16: memref<89x64xf32, #tpu.memory_space<vmem>>, %arg17: memref<50x64xbf16, #tpu.memory_space<vmem>>, %arg18: memref<29x128xf32, #tpu.memory_space<vmem>>, %arg19: memref<4x64xf32, #tpu.memory_space<vmem>>) attributes {dimension_semantics = [#tpu.dimension_semantics<parallel>], iteration_bounds = array<i64: 2>, scalar_prefetch = 0 : i64, scratch_operands = 5 : i64, tpu.core_type = #tpu.core_type<tc>, window_params = [{transform_indices = @transform_0, window_bounds = array<i64: 1, 256, 16>}, {pipeline_mode = #tpu.pipeline_mode<synchronous>, transform_indices = @transform_1, window_bounds = array<i64: 16, 32>}, {pipeline_mode = #tpu.pipeline_mode<synchronous>, transform_indices = @transform_2, window_bounds = array<i64: 1, 32>}, {pipeline_mode = #tpu.pipeline_mode<synchronous>, transform_indices = @transform_3, window_bounds = array<i64: 288, 64>}, {pipeline_mode = #tpu.pipeline_mode<synchronous>, transform_indices = @transform_4, window_bounds = array<i64: 1, 64>}, {pipeline_mode = #tpu.pipeline_mode<synchronous>, transform_indices = @transform_5, window_bounds = array<i64: 576, 128>}, {pipeline_mode = #tpu.pipeline_mode<synchronous>, transform_indices = @transform_6, window_bounds = array<i64: 1, 128>}, {pipeline_mode = #tpu.pipeline_mode<synchronous>, transform_indices = @transform_7, window_bounds = array<i64: 128, 256>}, {pipeline_mode = #tpu.pipeline_mode<synchronous>, transform_indices = @transform_8, window_bounds = array<i64: 1, 256>}, {pipeline_mode = #tpu.pipeline_mode<synchronous>, transform_indices = @transform_9, window_bounds = array<i64: 256, 512>}, {pipeline_mode = #tpu.pipeline_mode<synchronous>, transform_indices = @transform_10, window_bounds = array<i64: 1, 512>}, {pipeline_mode = #tpu.pipeline_mode<synchronous>, transform_indices = @transform_11, window_bounds = array<i64: 512, 64>}, {pipeline_mode = #tpu.pipeline_mode<synchronous>, transform_indices = @transform_12, window_bounds = array<i64: 1, 64>}, {transform_indices = @transform_13, window_bounds = array<i64: 1, 2, 128>}]} {
    %cst = arith.constant 0.000000e+00 : bf16
    %0 = vector.broadcast %cst : bf16 to vector<122x32xbf16>
    %c0 = arith.constant 0 : index
    %c0_0 = arith.constant 0 : index
    %1 = vector.load %arg15[%c0, %c0_0] : memref<122x32xbf16, #tpu.memory_space<vmem>>, vector<122x32xbf16>
    tpu.vector_store %arg15[%c0, %c0_0], %0 {strides = array<i32>} : memref<122x32xbf16, #tpu.memory_space<vmem>>, vector<122x32xbf16>,
    %cst_1 = arith.constant 0.000000e+00 : bf16
    %2 = vector.broadcast %cst_1 : bf16 to vector<50x64xbf16>
    %c0_2 = arith.constant 0 : index
    %c0_3 = arith.constant 0 : index
    %3 = vector.load %arg17[%c0_2, %c0_3] : memref<50x64xbf16, #tpu.memory_space<vmem>>, vector<50x64xbf16>
    tpu.vector_store %arg17[%c0_2, %c0_3], %2 {strides = array<i32>} : memref<50x64xbf16, #tpu.memory_space<vmem>>, vector<50x64xbf16>,
    %c0_4 = arith.constant 0 : index
    %c0_5 = arith.constant 0 : index
    %c0_6 = arith.constant 0 : index
    %4 = vector.load %arg1[%c0_4, %c0_5, %c0_6] : memref<1x256x16xbf16, #tpu.memory_space<vmem>>, vector<1x256x16xbf16>
    %5 = vector.shape_cast %4 : vector<1x256x16xbf16> to vector<256x16xbf16>
    %c0_7 = arith.constant 0 : index
    %c0_8 = arith.constant 0 : index
    %6 = vector.load %arg2[%c0_7, %c0_8] : memref<16x32xbf16, #tpu.memory_space<vmem>>, vector<16x32xbf16>
    %cst_9 = arith.constant dense<0.000000e+00> : vector<256x32xf32>
    %7 = tpu.matmul %5, %6, %cst_9 {dimension_numbers = #tpu.dot_dimension_numbers<[1], [0], [0], [1], [0, 0, 1, 1], [], []>} : vector<256x16xbf16>, vector<16x32xbf16>, vector<256x32xf32> -> vector<256x32xf32>
    %c0_10 = arith.constant 0 : index
    %c0_11 = arith.constant 0 : index
    %8 = vector.load %arg3[%c0_10, %c0_11] : memref<1x32xf32, #tpu.memory_space<vmem>>, vector<1x32xf32>
    %9 = vector.broadcast %8 : vector<1x32xf32> to vector<256x32xf32>
    %10 = arith.addf %7, %9 : vector<256x32xf32>
    %cst_12 = arith.constant 0.000000e+00 : f32
    %11 = vector.broadcast %cst_12 : f32 to vector<256x32xf32>
    %12 = arith.maximumf %10, %11 : vector<256x32xf32>
    %13 = vector.extract_strided_slice %12 {offsets = [0, 0], sizes = [64, 32], strides = [1, 1]} : vector<256x32xf32> to vector<64x32xf32>
    %14 = vector.extract_strided_slice %12 {offsets = [64, 0], sizes = [64, 32], strides = [1, 1]} : vector<256x32xf32> to vector<64x32xf32>
    %15 = arith.maximumf %13, %14 : vector<64x32xf32>
    %16 = vector.extract_strided_slice %12 {offsets = [128, 0], sizes = [64, 32], strides = [1, 1]} : vector<256x32xf32> to vector<64x32xf32>
    %17 = vector.extract_strided_slice %12 {offsets = [192, 0], sizes = [64, 32], strides = [1, 1]} : vector<256x32xf32> to vector<64x32xf32>
    %18 = arith.maximumf %16, %17 : vector<64x32xf32>
    %19 = arith.maximumf %15, %18 : vector<64x32xf32>
    %20 = arith.truncf %19 : vector<64x32xf32> to vector<64x32xbf16>
    %21 = vector.extract_strided_slice %20 {offsets = [0, 0], sizes = [8, 32], strides = [1, 1]} : vector<64x32xbf16> to vector<8x32xbf16>
    %c22 = arith.constant 22 : index
    %c0_13 = arith.constant 0 : index
    %22 = vector.load %arg15[%c22, %c0_13] : memref<122x32xbf16, #tpu.memory_space<vmem>>, vector<8x32xbf16>
    tpu.vector_store %arg15[%c22, %c0_13], %21 {strides = array<i32>} : memref<122x32xbf16, #tpu.memory_space<vmem>>, vector<8x32xbf16>,
    %23 = vector.extract_strided_slice %20 {offsets = [8, 0], sizes = [8, 32], strides = [1, 1]} : vector<64x32xbf16> to vector<8x32xbf16>
    %c32 = arith.constant 32 : index
    %c0_14 = arith.constant 0 : index
    %24 = vector.load %arg15[%c32, %c0_14] : memref<122x32xbf16, #tpu.memory_space<vmem>>, vector<8x32xbf16>
    tpu.vector_store %arg15[%c32, %c0_14], %23 {strides = array<i32>} : memref<122x32xbf16, #tpu.memory_space<vmem>>, vector<8x32xbf16>,
    %25 = vector.extract_strided_slice %20 {offsets = [16, 0], sizes = [8, 32], strides = [1, 1]} : vector<64x32xbf16> to vector<8x32xbf16>
    %c42 = arith.constant 42 : index
    %c0_15 = arith.constant 0 : index
    %26 = vector.load %arg15[%c42, %c0_15] : memref<122x32xbf16, #tpu.memory_space<vmem>>, vector<8x32xbf16>
    tpu.vector_store %arg15[%c42, %c0_15], %25 {strides = array<i32>} : memref<122x32xbf16, #tpu.memory_space<vmem>>, vector<8x32xbf16>,
    %27 = vector.extract_strided_slice %20 {offsets = [24, 0], sizes = [8, 32], strides = [1, 1]} : vector<64x32xbf16> to vector<8x32xbf16>
    %c52 = arith.constant 52 : index
    %c0_16 = arith.constant 0 : index
    %28 = vector.load %arg15[%c52, %c0_16] : memref<122x32xbf16, #tpu.memory_space<vmem>>, vector<8x32xbf16>
    tpu.vector_store %arg15[%c52, %c0_16], %27 {strides = array<i32>} : memref<122x32xbf16, #tpu.memory_space<vmem>>, vector<8x32xbf16>,
    %29 = vector.extract_strided_slice %20 {offsets = [32, 0], sizes = [8, 32], strides = [1, 1]} : vector<64x32xbf16> to vector<8x32xbf16>
    %c62 = arith.constant 62 : index
    %c0_17 = arith.constant 0 : index
    %30 = vector.load %arg15[%c62, %c0_17] : memref<122x32xbf16, #tpu.memory_space<vmem>>, vector<8x32xbf16>
    tpu.vector_store %arg15[%c62, %c0_17], %29 {strides = array<i32>} : memref<122x32xbf16, #tpu.memory_space<vmem>>, vector<8x32xbf16>,
    %31 = vector.extract_strided_slice %20 {offsets = [40, 0], sizes = [8, 32], strides = [1, 1]} : vector<64x32xbf16> to vector<8x32xbf16>
    %c72 = arith.constant 72 : index
    %c0_18 = arith.constant 0 : index
    %32 = vector.load %arg15[%c72, %c0_18] : memref<122x32xbf16, #tpu.memory_space<vmem>>, vector<8x32xbf16>
    tpu.vector_store %arg15[%c72, %c0_18], %31 {strides = array<i32>} : memref<122x32xbf16, #tpu.memory_space<vmem>>, vector<8x32xbf16>,
    %33 = vector.extract_strided_slice %20 {offsets = [48, 0], sizes = [8, 32], strides = [1, 1]} : vector<64x32xbf16> to vector<8x32xbf16>
    %c82 = arith.constant 82 : index
    %c0_19 = arith.constant 0 : index
    %34 = vector.load %arg15[%c82, %c0_19] : memref<122x32xbf16, #tpu.memory_space<vmem>>, vector<8x32xbf16>
    tpu.vector_store %arg15[%c82, %c0_19], %33 {strides = array<i32>} : memref<122x32xbf16, #tpu.memory_space<vmem>>, vector<8x32xbf16>,
    %35 = vector.extract_strided_slice %20 {offsets = [56, 0], sizes = [8, 32], strides = [1, 1]} : vector<64x32xbf16> to vector<8x32xbf16>
    %c92 = arith.constant 92 : index
    %c0_20 = arith.constant 0 : index
    %36 = vector.load %arg15[%c92, %c0_20] : memref<122x32xbf16, #tpu.memory_space<vmem>>, vector<8x32xbf16>
    tpu.vector_store %arg15[%c92, %c0_20], %35 {strides = array<i32>} : memref<122x32xbf16, #tpu.memory_space<vmem>>, vector<8x32xbf16>,
    %c0_21 = arith.constant 0 : index
    %c0_22 = arith.constant 0 : index
    %37 = vector.load %arg15[%c0_21, %c0_22] : memref<122x32xbf16, #tpu.memory_space<vmem>>, vector<100x32xbf16>
    %c1 = arith.constant 1 : index
    %c0_23 = arith.constant 0 : index
    %38 = vector.load %arg15[%c1, %c0_23] : memref<122x32xbf16, #tpu.memory_space<vmem>>, vector<100x32xbf16>
    %c2 = arith.constant 2 : index
    %c0_24 = arith.constant 0 : index
    %39 = vector.load %arg15[%c2, %c0_24] : memref<122x32xbf16, #tpu.memory_space<vmem>>, vector<100x32xbf16>
    %c10 = arith.constant 10 : index
    %c0_25 = arith.constant 0 : index
    %40 = vector.load %arg15[%c10, %c0_25] : memref<122x32xbf16, #tpu.memory_space<vmem>>, vector<100x32xbf16>
    %c11 = arith.constant 11 : index
    %c0_26 = arith.constant 0 : index
    %41 = vector.load %arg15[%c11, %c0_26] : memref<122x32xbf16, #tpu.memory_space<vmem>>, vector<100x32xbf16>
    %c12 = arith.constant 12 : index
    %c0_27 = arith.constant 0 : index
    %42 = vector.load %arg15[%c12, %c0_27] : memref<122x32xbf16, #tpu.memory_space<vmem>>, vector<100x32xbf16>
    %c20 = arith.constant 20 : index
    %c0_28 = arith.constant 0 : index
    %43 = vector.load %arg15[%c20, %c0_28] : memref<122x32xbf16, #tpu.memory_space<vmem>>, vector<100x32xbf16>
    %c21 = arith.constant 21 : index
    %c0_29 = arith.constant 0 : index
    %44 = vector.load %arg15[%c21, %c0_29] : memref<122x32xbf16, #tpu.memory_space<vmem>>, vector<100x32xbf16>
    %c22_30 = arith.constant 22 : index
    %c0_31 = arith.constant 0 : index
    %45 = vector.load %arg15[%c22_30, %c0_31] : memref<122x32xbf16, #tpu.memory_space<vmem>>, vector<100x32xbf16>
    %46 = tpu.concatenate %37, %38, %39, %40, %41, %42, %43, %44, %45 in 1 : vector<100x32xbf16>, vector<100x32xbf16>, vector<100x32xbf16>, vector<100x32xbf16>, vector<100x32xbf16>, vector<100x32xbf16>, vector<100x32xbf16>, vector<100x32xbf16>, vector<100x32xbf16> -> vector<100x288xbf16>
    %c0_32 = arith.constant 0 : index
    %c0_33 = arith.constant 0 : index
    %47 = vector.load %arg4[%c0_32, %c0_33] : memref<288x64xbf16, #tpu.memory_space<vmem>>, vector<288x64xbf16>
    %cst_34 = arith.constant dense<0.000000e+00> : vector<100x64xf32>
    %48 = tpu.matmul %46, %47, %cst_34 {dimension_numbers = #tpu.dot_dimension_numbers<[1], [0], [0], [1], [0, 0, 1, 1], [], []>} : vector<100x288xbf16>, vector<288x64xbf16>, vector<100x64xf32> -> vector<100x64xf32>
    %c0_35 = arith.constant 0 : index
    %c0_36 = arith.constant 0 : index
    %49 = vector.load %arg5[%c0_35, %c0_36] : memref<1x64xf32, #tpu.memory_space<vmem>>, vector<1x64xf32>
    %50 = vector.broadcast %49 : vector<1x64xf32> to vector<100x64xf32>
    %51 = arith.addf %48, %50 : vector<100x64xf32>
    %cst_37 = arith.constant 0.000000e+00 : f32
    %52 = vector.broadcast %cst_37 : f32 to vector<100x64xf32>
    %53 = arith.maximumf %51, %52 : vector<100x64xf32>
    %54 = vector.extract_strided_slice %53 {offsets = [0, 0], sizes = [89, 64], strides = [1, 1]} : vector<100x64xf32> to vector<89x64xf32>
    %55 = vector.extract_strided_slice %53 {offsets = [1, 0], sizes = [89, 64], strides = [1, 1]} : vector<100x64xf32> to vector<89x64xf32>
    %56 = arith.maximumf %54, %55 : vector<89x64xf32>
    %57 = vector.extract_strided_slice %53 {offsets = [10, 0], sizes = [89, 64], strides = [1, 1]} : vector<100x64xf32> to vector<89x64xf32>
    %58 = vector.extract_strided_slice %53 {offsets = [11, 0], sizes = [89, 64], strides = [1, 1]} : vector<100x64xf32> to vector<89x64xf32>
    %59 = arith.maximumf %57, %58 : vector<89x64xf32>
    %60 = arith.maximumf %56, %59 : vector<89x64xf32>
    %c0_38 = arith.constant 0 : index
    %c0_39 = arith.constant 0 : index
    %61 = vector.load %arg16[%c0_38, %c0_39] : memref<89x64xf32, #tpu.memory_space<vmem>>, vector<89x64xf32>
    tpu.vector_store %arg16[%c0_38, %c0_39], %60 {strides = array<i32>} : memref<89x64xf32, #tpu.memory_space<vmem>>, vector<89x64xf32>,
    %c11_40 = arith.constant 11 : index
    %c0_41 = arith.constant 0 : index
    %62 = tpu.strided_load %arg16[%c11_40, %c0_41] {strides = array<i32: 2, 1>} : memref<89x64xf32, #tpu.memory_space<vmem>>, vector<4x64xf32>
    %63 = arith.truncf %62 : vector<4x64xf32> to vector<4x64xbf16>
    %c14 = arith.constant 14 : index
    %c0_42 = arith.constant 0 : index
    %64 = vector.load %arg17[%c14, %c0_42] : memref<50x64xbf16, #tpu.memory_space<vmem>>, vector<4x64xbf16>
    tpu.vector_store %arg17[%c14, %c0_42], %63 {strides = array<i32>} : memref<50x64xbf16, #tpu.memory_space<vmem>>, vector<4x64xbf16>,
    %c31 = arith.constant 31 : index
    %c0_43 = arith.constant 0 : index
    %65 = tpu.strided_load %arg16[%c31, %c0_43] {strides = array<i32: 2, 1>} : memref<89x64xf32, #tpu.memory_space<vmem>>, vector<4x64xf32>
    %66 = arith.truncf %65 : vector<4x64xf32> to vector<4x64xbf16>
    %c20_44 = arith.constant 20 : index
    %c0_45 = arith.constant 0 : index
    %67 = vector.load %arg17[%c20_44, %c0_45] : memref<50x64xbf16, #tpu.memory_space<vmem>>, vector<4x64xbf16>
    tpu.vector_store %arg17[%c20_44, %c0_45], %66 {strides = array<i32>} : memref<50x64xbf16, #tpu.memory_space<vmem>>, vector<4x64xbf16>,
    %c51 = arith.constant 51 : index
    %c0_46 = arith.constant 0 : index
    %68 = tpu.strided_load %arg16[%c51, %c0_46] {strides = array<i32: 2, 1>} : memref<89x64xf32, #tpu.memory_space<vmem>>, vector<4x64xf32>
    %69 = arith.truncf %68 : vector<4x64xf32> to vector<4x64xbf16>
    %c26 = arith.constant 26 : index
    %c0_47 = arith.constant 0 : index
    %70 = vector.load %arg17[%c26, %c0_47] : memref<50x64xbf16, #tpu.memory_space<vmem>>, vector<4x64xbf16>
    tpu.vector_store %arg17[%c26, %c0_47], %69 {strides = array<i32>} : memref<50x64xbf16, #tpu.memory_space<vmem>>, vector<4x64xbf16>,
    %c71 = arith.constant 71 : index
    %c0_48 = arith.constant 0 : index
    %71 = tpu.strided_load %arg16[%c71, %c0_48] {strides = array<i32: 2, 1>} : memref<89x64xf32, #tpu.memory_space<vmem>>, vector<4x64xf32>
    %72 = arith.truncf %71 : vector<4x64xf32> to vector<4x64xbf16>
    %c32_49 = arith.constant 32 : index
    %c0_50 = arith.constant 0 : index
    %73 = vector.load %arg17[%c32_49, %c0_50] : memref<50x64xbf16, #tpu.memory_space<vmem>>, vector<4x64xbf16>
    tpu.vector_store %arg17[%c32_49, %c0_50], %72 {strides = array<i32>} : memref<50x64xbf16, #tpu.memory_space<vmem>>, vector<4x64xbf16>,
    %c0_51 = arith.constant 0 : index
    %c0_52 = arith.constant 0 : index
    %74 = vector.load %arg17[%c0_51, %c0_52] : memref<50x64xbf16, #tpu.memory_space<vmem>>, vector<36x64xbf16>
    %c1_53 = arith.constant 1 : index
    %c0_54 = arith.constant 0 : index
    %75 = vector.load %arg17[%c1_53, %c0_54] : memref<50x64xbf16, #tpu.memory_space<vmem>>, vector<36x64xbf16>
    %c2_55 = arith.constant 2 : index
    %c0_56 = arith.constant 0 : index
    %76 = vector.load %arg17[%c2_55, %c0_56] : memref<50x64xbf16, #tpu.memory_space<vmem>>, vector<36x64xbf16>
    %c6 = arith.constant 6 : index
    %c0_57 = arith.constant 0 : index
    %77 = vector.load %arg17[%c6, %c0_57] : memref<50x64xbf16, #tpu.memory_space<vmem>>, vector<36x64xbf16>
    %c7 = arith.constant 7 : index
    %c0_58 = arith.constant 0 : index
    %78 = vector.load %arg17[%c7, %c0_58] : memref<50x64xbf16, #tpu.memory_space<vmem>>, vector<36x64xbf16>
    %c8 = arith.constant 8 : index
    %c0_59 = arith.constant 0 : index
    %79 = vector.load %arg17[%c8, %c0_59] : memref<50x64xbf16, #tpu.memory_space<vmem>>, vector<36x64xbf16>
    %c12_60 = arith.constant 12 : index
    %c0_61 = arith.constant 0 : index
    %80 = vector.load %arg17[%c12_60, %c0_61] : memref<50x64xbf16, #tpu.memory_space<vmem>>, vector<36x64xbf16>
    %c13 = arith.constant 13 : index
    %c0_62 = arith.constant 0 : index
    %81 = vector.load %arg17[%c13, %c0_62] : memref<50x64xbf16, #tpu.memory_space<vmem>>, vector<36x64xbf16>
    %c14_63 = arith.constant 14 : index
    %c0_64 = arith.constant 0 : index
    %82 = vector.load %arg17[%c14_63, %c0_64] : memref<50x64xbf16, #tpu.memory_space<vmem>>, vector<36x64xbf16>
    %83 = tpu.concatenate %74, %75, %76, %77, %78, %79, %80, %81, %82 in 1 : vector<36x64xbf16>, vector<36x64xbf16>, vector<36x64xbf16>, vector<36x64xbf16>, vector<36x64xbf16>, vector<36x64xbf16>, vector<36x64xbf16>, vector<36x64xbf16>, vector<36x64xbf16> -> vector<36x576xbf16>
    %c0_65 = arith.constant 0 : index
    %c0_66 = arith.constant 0 : index
    %84 = vector.load %arg6[%c0_65, %c0_66] : memref<576x128xbf16, #tpu.memory_space<vmem>>, vector<576x128xbf16>
    %cst_67 = arith.constant dense<0.000000e+00> : vector<36x128xf32>
    %85 = tpu.matmul %83, %84, %cst_67 {dimension_numbers = #tpu.dot_dimension_numbers<[1], [0], [0], [1], [0, 0, 1, 1], [], []>} : vector<36x576xbf16>, vector<576x128xbf16>, vector<36x128xf32> -> vector<36x128xf32>
    %c0_68 = arith.constant 0 : index
    %c0_69 = arith.constant 0 : index
    %86 = vector.load %arg7[%c0_68, %c0_69] : memref<1x128xf32, #tpu.memory_space<vmem>>, vector<1x128xf32>
    %87 = vector.broadcast %86 : vector<1x128xf32> to vector<36x128xf32>
    %88 = arith.addf %85, %87 : vector<36x128xf32>
    %cst_70 = arith.constant 0.000000e+00 : f32
    %89 = vector.broadcast %cst_70 : f32 to vector<36x128xf32>
    %90 = arith.maximumf %88, %89 : vector<36x128xf32>
    %91 = vector.extract_strided_slice %90 {offsets = [0, 0], sizes = [29, 128], strides = [1, 1]} : vector<36x128xf32> to vector<29x128xf32>
    %92 = vector.extract_strided_slice %90 {offsets = [1, 0], sizes = [29, 128], strides = [1, 1]} : vector<36x128xf32> to vector<29x128xf32>
    %93 = arith.maximumf %91, %92 : vector<29x128xf32>
    %94 = vector.extract_strided_slice %90 {offsets = [6, 0], sizes = [29, 128], strides = [1, 1]} : vector<36x128xf32> to vector<29x128xf32>
    %95 = vector.extract_strided_slice %90 {offsets = [7, 0], sizes = [29, 128], strides = [1, 1]} : vector<36x128xf32> to vector<29x128xf32>
    %96 = arith.maximumf %94, %95 : vector<29x128xf32>
    %97 = arith.maximumf %93, %96 : vector<29x128xf32>
    %c0_71 = arith.constant 0 : index
    %c0_72 = arith.constant 0 : index
    %98 = vector.load %arg18[%c0_71, %c0_72] : memref<29x128xf32, #tpu.memory_space<vmem>>, vector<29x128xf32>
    tpu.vector_store %arg18[%c0_71, %c0_72], %97 {strides = array<i32>} : memref<29x128xf32, #tpu.memory_space<vmem>>, vector<29x128xf32>,
    %c7_73 = arith.constant 7 : index
    %c0_74 = arith.constant 0 : index
    %99 = tpu.strided_load %arg18[%c7_73, %c0_74] {strides = array<i32: 2, 1>} : memref<29x128xf32, #tpu.memory_space<vmem>>, vector<2x128xf32>
    %c19 = arith.constant 19 : index
    %c0_75 = arith.constant 0 : index
    %100 = tpu.strided_load %arg18[%c19, %c0_75] {strides = array<i32: 2, 1>} : memref<29x128xf32, #tpu.memory_space<vmem>>, vector<2x128xf32>
    %101 = tpu.concatenate %99, %100 in 0 : vector<2x128xf32>, vector<2x128xf32> -> vector<4x128xf32>
    %102 = arith.truncf %101 : vector<4x128xf32> to vector<4x128xbf16>
    %c0_76 = arith.constant 0 : index
    %c0_77 = arith.constant 0 : index
    %103 = vector.load %arg8[%c0_76, %c0_77] : memref<128x256xbf16, #tpu.memory_space<vmem>>, vector<128x256xbf16>
    %cst_78 = arith.constant dense<0.000000e+00> : vector<4x256xf32>
    %104 = tpu.matmul %102, %103, %cst_78 {dimension_numbers = #tpu.dot_dimension_numbers<[1], [0], [0], [1], [0, 0, 1, 1], [], []>} : vector<4x128xbf16>, vector<128x256xbf16>, vector<4x256xf32> -> vector<4x256xf32>
    %c0_79 = arith.constant 0 : index
    %c0_80 = arith.constant 0 : index
    %105 = vector.load %arg9[%c0_79, %c0_80] : memref<1x256xf32, #tpu.memory_space<vmem>>, vector<1x256xf32>
    %106 = vector.broadcast %105 : vector<1x256xf32> to vector<4x256xf32>
    %107 = arith.addf %104, %106 : vector<4x256xf32>
    %cst_81 = arith.constant 0.000000e+00 : f32
    %108 = vector.broadcast %cst_81 : f32 to vector<4x256xf32>
    %109 = arith.maximumf %107, %108 : vector<4x256xf32>
    %110 = arith.truncf %109 : vector<4x256xf32> to vector<4x256xbf16>
    %c0_82 = arith.constant 0 : index
    %c0_83 = arith.constant 0 : index
    %111 = vector.load %arg10[%c0_82, %c0_83] : memref<256x512xbf16, #tpu.memory_space<vmem>>, vector<256x512xbf16>
    %cst_84 = arith.constant dense<0.000000e+00> : vector<4x512xf32>
    %112 = tpu.matmul %110, %111, %cst_84 {dimension_numbers = #tpu.dot_dimension_numbers<[1], [0], [0], [1], [0, 0, 1, 1], [], []>} : vector<4x256xbf16>, vector<256x512xbf16>, vector<4x512xf32> -> vector<4x512xf32>
    %c0_85 = arith.constant 0 : index
    %c0_86 = arith.constant 0 : index
    %113 = vector.load %arg11[%c0_85, %c0_86] : memref<1x512xf32, #tpu.memory_space<vmem>>, vector<1x512xf32>
    %114 = vector.broadcast %113 : vector<1x512xf32> to vector<4x512xf32>
    %115 = arith.addf %112, %114 : vector<4x512xf32>
    %cst_87 = arith.constant 0.000000e+00 : f32
    %116 = vector.broadcast %cst_87 : f32 to vector<4x512xf32>
    %117 = arith.maximumf %115, %116 : vector<4x512xf32>
    %118 = arith.truncf %117 : vector<4x512xf32> to vector<4x512xbf16>
    %c0_88 = arith.constant 0 : index
    %c0_89 = arith.constant 0 : index
    %119 = vector.load %arg12[%c0_88, %c0_89] : memref<512x64xbf16, #tpu.memory_space<vmem>>, vector<512x64xbf16>
    %cst_90 = arith.constant dense<0.000000e+00> : vector<4x64xf32>
    %120 = tpu.matmul %118, %119, %cst_90 {dimension_numbers = #tpu.dot_dimension_numbers<[1], [0], [0], [1], [0, 0, 1, 1], [], []>} : vector<4x512xbf16>, vector<512x64xbf16>, vector<4x64xf32> -> vector<4x64xf32>
    %c0_91 = arith.constant 0 : index
    %c0_92 = arith.constant 0 : index
    %121 = vector.load %arg13[%c0_91, %c0_92] : memref<1x64xf32, #tpu.memory_space<vmem>>, vector<1x64xf32>
    %122 = vector.broadcast %121 : vector<1x64xf32> to vector<4x64xf32>
    %123 = arith.addf %120, %122 : vector<4x64xf32>
    %c0_93 = arith.constant 0 : index
    %c0_94 = arith.constant 0 : index
    %124 = vector.load %arg19[%c0_93, %c0_94] : memref<4x64xf32, #tpu.memory_space<vmem>>, vector<4x64xf32>
    tpu.vector_store %arg19[%c0_93, %c0_94], %123 {strides = array<i32>} : memref<4x64xf32, #tpu.memory_space<vmem>>, vector<4x64xf32>,
    %c0_95 = arith.constant 0 : index
    %c0_96 = arith.constant 0 : index
    %125 = tpu.strided_load %arg19[%c0_95, %c0_96] {strides = array<i32: 2, 1>} : memref<4x64xf32, #tpu.memory_space<vmem>>, vector<2x64xf32>
    %c1_97 = arith.constant 1 : index
    %c0_98 = arith.constant 0 : index
    %126 = tpu.strided_load %arg19[%c1_97, %c0_98] {strides = array<i32: 2, 1>} : memref<4x64xf32, #tpu.memory_space<vmem>>, vector<2x64xf32>
    %127 = tpu.concatenate %125, %126 in 1 : vector<2x64xf32>, vector<2x64xf32> -> vector<2x128xf32>
    %cst_99 = arith.constant 0.000000e+00 : f32
    %128 = vector.broadcast %cst_99 : f32 to vector<2x128xf32>
    %129 = arith.subf %128, %127 : vector<2x128xf32>
    %130 = math.exp %129 : vector<2x128xf32>
    %cst_100 = arith.constant 1.000000e+00 : f32
    %131 = vector.broadcast %cst_100 : f32 to vector<2x128xf32>
    %132 = arith.addf %131, %130 : vector<2x128xf32>
    %133 = tpu.reciprocal %132 {approx = true} : vector<2x128xf32> -> vector<2x128xf32>
    %c0_101 = arith.constant 0 : index
    %c0_102 = arith.constant 0 : index
    %c0_103 = arith.constant 0 : index
    %134 = vector.load %arg14[%c0_101, %c0_102, %c0_103] : memref<1x2x128xf32, #tpu.memory_space<vmem>>, vector<1x2x128xf32>
    %135 = vector.shape_cast %134 : vector<1x2x128xf32> to vector<2x128xf32>
    %136 = vector.shape_cast %133 : vector<2x128xf32> to vector<1x2x128xf32>
    tpu.vector_store %arg14[%c0_101, %c0_102, %c0_103], %136 {strides = array<i32>} : memref<1x2x128xf32, #tpu.memory_space<vmem>>, vector<1x2x128xf32>,
    return
  }
  func.func @transform_0(%arg0: i32) -> (i32, i32, i32) {
    %c0_i32 = arith.constant 0 : i32
    %c0_i32_0 = arith.constant 0 : i32
    %c0_i32_1 = arith.constant 0 : i32
    return %arg0, %c0_i32, %c0_i32_0 : i32, i32, i32
  }
  func.func @transform_1(%arg0: i32) -> (i32, i32) {
    %c0_i32 = arith.constant 0 : i32
    %c0_i32_0 = arith.constant 0 : i32
    %c0_i32_1 = arith.constant 0 : i32
    return %c0_i32, %c0_i32_0 : i32, i32
  }
  func.func @transform_2(%arg0: i32) -> (i32, i32) {
    %c0_i32 = arith.constant 0 : i32
    %c0_i32_0 = arith.constant 0 : i32
    %c0_i32_1 = arith.constant 0 : i32
    return %c0_i32, %c0_i32_0 : i32, i32
  }
  func.func @transform_3(%arg0: i32) -> (i32, i32) {
    %c0_i32 = arith.constant 0 : i32
    %c0_i32_0 = arith.constant 0 : i32
    %c0_i32_1 = arith.constant 0 : i32
    return %c0_i32, %c0_i32_0 : i32, i32
  }
  func.func @transform_4(%arg0: i32) -> (i32, i32) {
    %c0_i32 = arith.constant 0 : i32
    %c0_i32_0 = arith.constant 0 : i32
    %c0_i32_1 = arith.constant 0 : i32
    return %c0_i32, %c0_i32_0 : i32, i32
  }
  func.func @transform_5(%arg0: i32) -> (i32, i32) {
    %c0_i32 = arith.constant 0 : i32
    %c0_i32_0 = arith.constant 0 : i32
    %c0_i32_1 = arith.constant 0 : i32
    return %c0_i32, %c0_i32_0 : i32, i32
  }
  func.func @transform_6(%arg0: i32) -> (i32, i32) {
    %c0_i32 = arith.constant 0 : i32
    %c0_i32_0 = arith.constant 0 : i32
    %c0_i32_1 = arith.constant 0 : i32
    return %c0_i32, %c0_i32_0 : i32, i32
  }
  func.func @transform_7(%arg0: i32) -> (i32, i32) {
    %c0_i32 = arith.constant 0 : i32
    %c0_i32_0 = arith.constant 0 : i32
    %c0_i32_1 = arith.constant 0 : i32
    return %c0_i32, %c0_i32_0 : i32, i32
  }
  func.func @transform_8(%arg0: i32) -> (i32, i32) {
    %c0_i32 = arith.constant 0 : i32
    %c0_i32_0 = arith.constant 0 : i32
    %c0_i32_1 = arith.constant 0 : i32
    return %c0_i32, %c0_i32_0 : i32, i32
  }
  func.func @transform_9(%arg0: i32) -> (i32, i32) {
    %c0_i32 = arith.constant 0 : i32
    %c0_i32_0 = arith.constant 0 : i32
    %c0_i32_1 = arith.constant 0 : i32
    return %c0_i32, %c0_i32_0 : i32, i32
  }
  func.func @transform_10(%arg0: i32) -> (i32, i32) {
    %c0_i32 = arith.constant 0 : i32
    %c0_i32_0 = arith.constant 0 : i32
    %c0_i32_1 = arith.constant 0 : i32
    return %c0_i32, %c0_i32_0 : i32, i32
  }
  func.func @transform_11(%arg0: i32) -> (i32, i32) {
    %c0_i32 = arith.constant 0 : i32
    %c0_i32_0 = arith.constant 0 : i32
    %c0_i32_1 = arith.constant 0 : i32
    return %c0_i32, %c0_i32_0 : i32, i32
  }
  func.func @transform_12(%arg0: i32) -> (i32, i32) {
    %c0_i32 = arith.constant 0 : i32
    %c0_i32_0 = arith.constant 0 : i32
    %c0_i32_1 = arith.constant 0 : i32
    return %c0_i32, %c0_i32_0 : i32, i32
  }
  func.func @transform_13(%arg0: i32) -> (i32, i32, i32) {
    %c0_i32 = arith.constant 0 : i32
    %c0_i32_0 = arith.constant 0 : i32
    %c0_i32_1 = arith.constant 0 : i32
    return %arg0, %c0_i32, %c0_i32_0 : i32, i32, i32
  }
}

</mosaic_0001>

<llo_original>
// kernel: deep_conv_autoencoder.1
$region0: #{deep_conv_autoencoder.1}
  #allocation0 [shape = 'u32[]', space=smem, size = 0x4, offset = 0x4, fixed_abs, tag = 'smem constant byte address 0x4 - core index']
  #allocation1 [shape = 'u32[72,128]{1,0:T(1,128)}', space=vmem, size = 0x9000, scoped, tag = 'internal scratch']
  #allocation2 [shape = 'bf16[122,32]{1,0:T(8,128)(2,1)}', space=vmem, size = 0x8000, scoped, tag = 'scratch operand']
  #allocation3 [shape = 'f32[89,64]{1,0:T(8,128)}', space=vmem, size = 0xc000, scoped, tag = 'scratch operand']
  #allocation4 [shape = 'bf16[50,64]{1,0:T(8,128)(2,1)}', space=vmem, size = 0x3800, scoped, tag = 'scratch operand']
  #allocation5 [shape = 'f32[29,128]{1,0:T(8,128)}', space=vmem, size = 0x4000, scoped, tag = 'scratch operand']
  #allocation6 [shape = 'f32[4,64]{1,0:T(4,128)}', space=vmem, size = 0x800, scoped, tag = 'scratch operand']
  %s0 = inlined_call_operand.vmem [shape: bf16[2,256,16], index: 0, kind: input, shape index: {}]
  %s1 = inlined_call_operand.vmem [shape: bf16[16,32], index: 1, kind: input, shape index: {}]
  %s2 = inlined_call_operand.vmem [shape: f32[1,32], index: 2, kind: input, shape index: {}]
  %s3 = inlined_call_operand.vmem [shape: bf16[288,64], index: 3, kind: input, shape index: {}]
  %s4 = inlined_call_operand.vmem [shape: f32[1,64], index: 4, kind: input, shape index: {}]
  %s5 = inlined_call_operand.vmem [shape: bf16[576,128], index: 5, kind: input, shape index: {}]
  %s6 = inlined_call_operand.vmem [shape: f32[1,128], index: 6, kind: input, shape index: {}]
  %s7 = inlined_call_operand.vmem [shape: bf16[128,256], index: 7, kind: input, shape index: {}]
  %s8 = inlined_call_operand.vmem [shape: f32[1,256], index: 8, kind: input, shape index: {}]
  %s9 = inlined_call_operand.vmem [shape: bf16[256,512], index: 9, kind: input, shape index: {}]
  %s10 = inlined_call_operand.vmem [shape: f32[1,512], index: 10, kind: input, shape index: {}]
  %s11 = inlined_call_operand.vmem [shape: bf16[512,64], index: 11, kind: input, shape index: {}]
  %s12 = inlined_call_operand.vmem [shape: f32[1,64], index: 12, kind: input, shape index: {}]
  %s13 = inlined_call_operand.vmem [shape: f32[2,2,128], index: 13, kind: output, shape index: {}]
  %s14 = sld [smem:[#allocation0]]
  $region85: #{deep_conv_autoencoder.1} parent=0
    _
  %s16 = ssub.s32 1, %s14
  %s17 = scalar_select 0, %s16, %s14
  loop: start=0, step=1, limit=4
  $region2: #{deep_conv_autoencoder.1} parent=0 // loop_pre_header
    _
  $region3: #{deep_conv_autoencoder.1} parent=0 // loop_header
    %s19 = sphi 0, %s23
    %p20 = scmp.ge.s32.totalorder %s19, 4
    %s29 = sphi 0, %s31
    %s32 = sphi 0, %s29
    %s33 = sphi 0, %s32
    %s49 = sphi 0, %s33
    %s53 = sphi 0, %s53
    %s55 = sphi 0, %s53
    %s56 = sphi 0, %s55
    %s70 = sphi 0, %s56
    %s74 = sphi 0, %s74
    %s76 = sphi 0, %s74
    %s77 = sphi 0, %s76
    %s91 = sphi 0, %s77
    %s95 = sphi 0, %s95
    %s97 = sphi 0, %s95
    %s98 = sphi 0, %s97
    %s112 = sphi 0, %s98
    %s116 = sphi 0, %s116
    %s118 = sphi 0, %s116
    %s119 = sphi 0, %s118
    %s133 = sphi 0, %s119
    %s137 = sphi 0, %s137
    %s139 = sphi 0, %s137
    %s140 = sphi 0, %s139
    %s154 = sphi 0, %s140
    %s158 = sphi 0, %s158
    %s160 = sphi 0, %s158
    %s161 = sphi 0, %s160
    %s175 = sphi 0, %s161
    %s179 = sphi 0, %s179
    %s181 = sphi 0, %s179
    %s182 = sphi 0, %s181
    %s196 = sphi 0, %s182
    %s200 = sphi 0, %s200
    %s202 = sphi 0, %s200
    %s203 = sphi 0, %s202
    %s217 = sphi 0, %s203
    %s221 = sphi 0, %s221
    %s223 = sphi 0, %s221
    %s224 = sphi 0, %s223
    %s238 = sphi 0, %s224
    %s242 = sphi 0, %s242
    %s244 = sphi 0, %s242
    %s245 = sphi 0, %s244
    %s259 = sphi 0, %s245
    %s263 = sphi 0, %s263
    %s265 = sphi 0, %s263
    %s266 = sphi 0, %s265
    %s280 = sphi 0, %s266
    %s284 = sphi 0, %s284
    %s286 = sphi 0, %s284
    %s287 = sphi 0, %s286
    %s301 = sphi 0, %s287
    %s307 = sphi 0, %s309
    %s310 = sphi 0, %s307
    %s311 = sphi 0, %s310
    %s327 = sphi 0, %s311
  $region4: #{deep_conv_autoencoder.1} parent=0 // loop_header_branch
    %22 = sbr.rel (%p20) target = $region8
  $region5: #{deep_conv_autoencoder.1} parent=0 // loop_body
    %s24 = ssub.s32 %s19, 1
    %s25 = ssub.s32 %s19, 2
    %s26 = sadd.s32 %s19, 1
    %s27 = ssub.s32 %s19, %s26
    %p28 = scmp.eq.s32.totalorder %s27, 0
    %s30 = sadd.s32 %s29, 1
    %s31 = scalar_select %p28, %s29, %s30
    %p34 = pneg %p28
    %p35 = scmp.eq.s32.totalorder %s19, 1
    %p36 = por %p34, %p35
    %p37 = scmp.ne.s32.totalorder %s29, %s32
    %p38 = scmp.eq.s32.totalorder %s19, 0
    %p39 = por %p37, %p38
    %p40 = scmp.ne.s32.totalorder %s29, %s32
    %p41 = scmp.eq.s32.totalorder %s24, 1
    %p42 = por %p40, %p41
    %p43 = scmp.ne.s32.totalorder %s32, %s33
    %p44 = scmp.eq.s32.totalorder %s24, 0
    %p45 = por %p43, %p44
    %p46 = scmp.ne.s32.totalorder %s32, %s33
    %p47 = scmp.eq.s32.totalorder %s25, 1
    %p48 = por %p46, %p47
    %p50 = scmp.ne.s32.totalorder %s33, %s49
    %p51 = scmp.eq.s32.totalorder %s25, 0
    %p52 = por %p50, %p51
    %s54 = sadd.s32 %s53, 1
    %p57 = scmp.eq.s32.totalorder %s19, 1
    %p58 = scmp.ne.s32.totalorder %s53, %s55
    %p59 = scmp.eq.s32.totalorder %s19, 0
    %p60 = por %p58, %p59
    %p61 = scmp.ne.s32.totalorder %s53, %s55
    %p62 = scmp.eq.s32.totalorder %s24, 1
    %p63 = por %p61, %p62
    %p64 = scmp.ne.s32.totalorder %s55, %s56
    %p65 = scmp.eq.s32.totalorder %s24, 0
    %p66 = por %p64, %p65
    %p67 = scmp.ne.s32.totalorder %s55, %s56
    %p68 = scmp.eq.s32.totalorder %s25, 1
    %p69 = por %p67, %p68
    %p71 = scmp.ne.s32.totalorder %s56, %s70
    %p72 = scmp.eq.s32.totalorder %s25, 0
    %p73 = por %p71, %p72
    %s75 = sadd.s32 %s74, 1
    %p78 = scmp.eq.s32.totalorder %s19, 1
    %p79 = scmp.ne.s32.totalorder %s74, %s76
    %p80 = scmp.eq.s32.totalorder %s19, 0
    %p81 = por %p79, %p80
    %p82 = scmp.ne.s32.totalorder %s74, %s76
    %p83 = scmp.eq.s32.totalorder %s24, 1
    %p84 = por %p82, %p83
    %p85 = scmp.ne.s32.totalorder %s76, %s77
    %p86 = scmp.eq.s32.totalorder %s24, 0
    %p87 = por %p85, %p86
    %p88 = scmp.ne.s32.totalorder %s76, %s77
    %p89 = scmp.eq.s32.totalorder %s25, 1
    %p90 = por %p88, %p89
    %p92 = scmp.ne.s32.totalorder %s77, %s91
    %p93 = scmp.eq.s32.totalorder %s25, 0
    %p94 = por %p92, %p93
    %s96 = sadd.s32 %s95, 1
    %p99 = scmp.eq.s32.totalorder %s19, 1
    %p100 = scmp.ne.s32.totalorder %s95, %s97
    %p101 = scmp.eq.s32.totalorder %s19, 0
    %p102 = por %p100, %p101
    %p103 = scmp.ne.s32.totalorder %s95, %s97
    %p104 = scmp.eq.s32.totalorder %s24, 1
    %p105 = por %p103, %p104
    %p106 = scmp.ne.s32.totalorder %s97, %s98
    %p107 = scmp.eq.s32.totalorder %s24, 0
    %p108 = por %p106, %p107
    %p109 = scmp.ne.s32.totalorder %s97, %s98
    %p110 = scmp.eq.s32.totalorder %s25, 1
    %p111 = por %p109, %p110
    %p113 = scmp.ne.s32.totalorder %s98, %s112
    %p114 = scmp.eq.s32.totalorder %s25, 0
    %p115 = por %p113, %p114
    %s117 = sadd.s32 %s116, 1
    %p120 = scmp.eq.s32.totalorder %s19, 1
    %p121 = scmp.ne.s32.totalorder %s116, %s118
    %p122 = scmp.eq.s32.totalorder %s19, 0
    %p123 = por %p121, %p122
    %p124 = scmp.ne.s32.totalorder %s116, %s118
    %p125 = scmp.eq.s32.totalorder %s24, 1
    %p126 = por %p124, %p125
    %p127 = scmp.ne.s32.totalorder %s118, %s119
    %p128 = scmp.eq.s32.totalorder %s24, 0
    %p129 = por %p127, %p128
    %p130 = scmp.ne.s32.totalorder %s118, %s119
    %p131 = scmp.eq.s32.totalorder %s25, 1
    %p132 = por %p130, %p131
    %p134 = scmp.ne.s32.totalorder %s119, %s133
    %p135 = scmp.eq.s32.totalorder %s25, 0
    %p136 = por %p134, %p135
    %s138 = sadd.s32 %s137, 1
    %p141 = scmp.eq.s32.totalorder %s19, 1
    %p142 = scmp.ne.s32.totalorder %s137, %s139
    %p143 = scmp.eq.s32.totalorder %s19, 0
    %p144 = por %p142, %p143
    %p145 = scmp.ne.s32.totalorder %s137, %s139
    %p146 = scmp.eq.s32.totalorder %s24, 1
    %p147 = por %p145, %p146
    %p148 = scmp.ne.s32.totalorder %s139, %s140
    %p149 = scmp.eq.s32.totalorder %s24, 0
    %p150 = por %p148, %p149
    %p151 = scmp.ne.s32.totalorder %s139, %s140
    %p152 = scmp.eq.s32.totalorder %s25, 1
    %p153 = por %p151, %p152
    %p155 = scmp.ne.s32.totalorder %s140, %s154
    %p156 = scmp.eq.s32.totalorder %s25, 0
    %p157 = por %p155, %p156
    %s159 = sadd.s32 %s158, 1
    %p162 = scmp.eq.s32.totalorder %s19, 1
    %p163 = scmp.ne.s32.totalorder %s158, %s160
    %p164 = scmp.eq.s32.totalorder %s19, 0
    %p165 = por %p163, %p164
    %p166 = scmp.ne.s32.totalorder %s158, %s160
    %p167 = scmp.eq.s32.totalorder %s24, 1
    %p168 = por %p166, %p167
    %p169 = scmp.ne.s32.totalorder %s160, %s161
    %p170 = scmp.eq.s32.totalorder %s24, 0
    %p171 = por %p169, %p170
    %p172 = scmp.ne.s32.totalorder %s160, %s161
    %p173 = scmp.eq.s32.totalorder %s25, 1
    %p174 = por %p172, %p173
    %p176 = scmp.ne.s32.totalorder %s161, %s175
    %p177 = scmp.eq.s32.totalorder %s25, 0
    %p178 = por %p176, %p177
    %s180 = sadd.s32 %s179, 1
    %p183 = scmp.eq.s32.totalorder %s19, 1
    %p184 = scmp.ne.s32.totalorder %s179, %s181
    %p185 = scmp.eq.s32.totalorder %s19, 0
    %p186 = por %p184, %p185
    %p187 = scmp.ne.s32.totalorder %s179, %s181
    %p188 = scmp.eq.s32.totalorder %s24, 1
    %p189 = por %p187, %p188
    %p190 = scmp.ne.s32.totalorder %s181, %s182
    %p191 = scmp.eq.s32.totalorder %s24, 0
    %p192 = por %p190, %p191
    %p193 = scmp.ne.s32.totalorder %s181, %s182
    %p194 = scmp.eq.s32.totalorder %s25, 1
    %p195 = por %p193, %p194
    %p197 = scmp.ne.s32.totalorder %s182, %s196
    %p198 = scmp.eq.s32.totalorder %s25, 0
    %p199 = por %p197, %p198
    %s201 = sadd.s32 %s200, 1
    %p204 = scmp.eq.s32.totalorder %s19, 1
    %p205 = scmp.ne.s32.totalorder %s200, %s202
    %p206 = scmp.eq.s32.totalorder %s19, 0
    %p207 = por %p205, %p206
    %p208 = scmp.ne.s32.totalorder %s200, %s202
    %p209 = scmp.eq.s32.totalorder %s24, 1
    %p210 = por %p208, %p209
    %p211 = scmp.ne.s32.totalorder %s202, %s203
    %p212 = scmp.eq.s32.totalorder %s24, 0
    %p213 = por %p211, %p212
    %p214 = scmp.ne.s32.totalorder %s202, %s203
    %p215 = scmp.eq.s32.totalorder %s25, 1
    %p216 = por %p214, %p215
    %p218 = scmp.ne.s32.totalorder %s203, %s217
    %p219 = scmp.eq.s32.totalorder %s25, 0
    %p220 = por %p218, %p219
    %s222 = sadd.s32 %s221, 1
    %p225 = scmp.eq.s32.totalorder %s19, 1
    %p226 = scmp.ne.s32.totalorder %s221, %s223
    %p227 = scmp.eq.s32.totalorder %s19, 0
    %p228 = por %p226, %p227
    %p229 = scmp.ne.s32.totalorder %s221, %s223
    %p230 = scmp.eq.s32.totalorder %s24, 1
    %p231 = por %p229, %p230
    %p232 = scmp.ne.s32.totalorder %s223, %s224
    %p233 = scmp.eq.s32.totalorder %s24, 0
    %p234 = por %p232, %p233
    %p235 = scmp.ne.s32.totalorder %s223, %s224
    %p236 = scmp.eq.s32.totalorder %s25, 1
    %p237 = por %p235, %p236
    %p239 = scmp.ne.s32.totalorder %s224, %s238
    %p240 = scmp.eq.s32.totalorder %s25, 0
    %p241 = por %p239, %p240
    %s243 = sadd.s32 %s242, 1
    %p246 = scmp.eq.s32.totalorder %s19, 1
    %p247 = scmp.ne.s32.totalorder %s242, %s244
    %p248 = scmp.eq.s32.totalorder %s19, 0
    %p249 = por %p247, %p248
    %p250 = scmp.ne.s32.totalorder %s242, %s244
    %p251 = scmp.eq.s32.totalorder %s24, 1
    %p252 = por %p250, %p251
    %p253 = scmp.ne.s32.totalorder %s244, %s245
    %p254 = scmp.eq.s32.totalorder %s24, 0
    %p255 = por %p253, %p254
    %p256 = scmp.ne.s32.totalorder %s244, %s245
    %p257 = scmp.eq.s32.totalorder %s25, 1
    %p258 = por %p256, %p257
    %p260 = scmp.ne.s32.totalorder %s245, %s259
    %p261 = scmp.eq.s32.totalorder %s25, 0
    %p262 = por %p260, %p261
    %s264 = sadd.s32 %s263, 1
    %p267 = scmp.eq.s32.totalorder %s19, 1
    %p268 = scmp.ne.s32.totalorder %s263, %s265
    %p269 = scmp.eq.s32.totalorder %s19, 0
    %p270 = por %p268, %p269
    %p271 = scmp.ne.s32.totalorder %s263, %s265
    %p272 = scmp.eq.s32.totalorder %s24, 1
    %p273 = por %p271, %p272
    %p274 = scmp.ne.s32.totalorder %s265, %s266
    %p275 = scmp.eq.s32.totalorder %s24, 0
    %p276 = por %p274, %p275
    %p277 = scmp.ne.s32.totalorder %s265, %s266
    %p278 = scmp.eq.s32.totalorder %s25, 1
    %p279 = por %p277, %p278
    %p281 = scmp.ne.s32.totalorder %s266, %s280
    %p282 = scmp.eq.s32.totalorder %s25, 0
    %p283 = por %p281, %p282
    %s285 = sadd.s32 %s284, 1
    %p288 = scmp.eq.s32.totalorder %s19, 1
    %p289 = scmp.ne.s32.totalorder %s284, %s286
    %p290 = scmp.eq.s32.totalorder %s19, 0
    %p291 = por %p289, %p290
    %p292 = scmp.ne.s32.totalorder %s284, %s286
    %p293 = scmp.eq.s32.totalorder %s24, 1
    %p294 = por %p292, %p293
    %p295 = scmp.ne.s32.totalorder %s286, %s287
    %p296 = scmp.eq.s32.totalorder %s24, 0
    %p297 = por %p295, %p296
    %p298 = scmp.ne.s32.totalorder %s286, %s287
    %p299 = scmp.eq.s32.totalorder %s25, 1
    %p300 = por %p298, %p299
    %p302 = scmp.ne.s32.totalorder %s287, %s301
    %p303 = scmp.eq.s32.totalorder %s25, 0
    %p304 = por %p302, %p303
    %s305 = ssub.s32 %s19, %s26
    %p306 = scmp.eq.s32.totalorder %s305, 0
    %s308 = sadd.s32 %s307, 1
    %s309 = scalar_select %p306, %s307, %s308
    %p312 = pneg %p306
    %p313 = scmp.eq.s32.totalorder %s19, 1
    %p314 = por %p312, %p313
    %p315 = scmp.ne.s32.totalorder %s307, %s310
    %p316 = scmp.eq.s32.totalorder %s19, 0
    %p317 = por %p315, %p316
    %p318 = scmp.ne.s32.totalorder %s307, %s310
    %p319 = scmp.eq.s32.totalorder %s24, 1
    %p320 = por %p318, %p319
    %p321 = scmp.ne.s32.totalorder %s310, %s311
    %p322 = scmp.eq.s32.totalorder %s24, 0
    %p323 = por %p321, %p322
    %p324 = scmp.ne.s32.totalorder %s310, %s311
    %p325 = scmp.eq.s32.totalorder %s25, 1
    %p326 = por %p324, %p325
    %p328 = scmp.ne.s32.totalorder %s311, %s327
    %p329 = scmp.eq.s32.totalorder %s25, 0
    %p330 = por %p328, %p329
    %p331 = scmp.le.s32.totalorder 1, %s19
    %p332 = scmp.lt.s32.totalorder %s19, 3
    %p333 = pnand %p331, %p332
    %p334 = pneg %p333
    // Predicated region
    $region9: #{deep_conv_autoencoder.1} parent=5 // pred_check
      _
    $region10: #{deep_conv_autoencoder.1} parent=5 // pred_check_branch
      %336 = sbr.rel (%p333) target = $region12
    $region11: #{deep_conv_autoencoder.1} parent=5 // pred_region
      %s337 = ssub.s32 %s19, 1
      // Predicated region
      $region13: #{deep_conv_autoencoder.1} parent=11 // pred_check
        %p338 = pneg %p66
      $region14: #{deep_conv_autoencoder.1} parent=11 // pred_check_branch
        %340 = sbr.rel (%p338) target = $region16
      $region15: #{deep_conv_autoencoder.1} parent=11 // pred_region
        _
      $region16: #{deep_conv_autoencoder.1} parent=11 // pred_fallthru
        _
      // Predicated region
      $region17: #{deep_conv_autoencoder.1} parent=11 // pred_check
        %p341 = pneg %p87
      $region18: #{deep_conv_autoencoder.1} parent=11 // pred_check_branch
        %343 = sbr.rel (%p341) target = $region20
      $region19: #{deep_conv_autoencoder.1} parent=11 // pred_region
        _
      $region20: #{deep_conv_autoencoder.1} parent=11 // pred_fallthru
        _
      // Predicated region
      $region21: #{deep_conv_autoencoder.1} parent=11 // pred_check
        %p344 = pneg %p108
      $region22: #{deep_conv_autoencoder.1} parent=11 // pred_check_branch
        %346 = sbr.rel (%p344) target = $region24
      $region23: #{deep_conv_autoencoder.1} parent=11 // pred_region
        _
      $region24: #{deep_conv_autoencoder.1} parent=11 // pred_fallthru
        _
      // Predicated region
      $region25: #{deep_conv_autoencoder.1} parent=11 // pred_check
        %p347 = pneg %p129
      $region26: #{deep_conv_autoencoder.1} parent=11 // pred_check_branch
        %349 = sbr.rel (%p347) target = $region28
      $region27: #{deep_conv_autoencoder.1} parent=11 // pred_region
        _
      $region28: #{deep_conv_autoencoder.1} parent=11 // pred_fallthru
        _
      // Predicated region
      $region29: #{deep_conv_autoencoder.1} parent=11 // pred_check
        %p350 = pneg %p150
      $region30: #{deep_conv_autoencoder.1} parent=11 // pred_check_branch
        %352 = sbr.rel (%p350) target = $region32
      $region31: #{deep_conv_autoencoder.1} parent=11 // pred_region
        _
      $region32: #{deep_conv_autoencoder.1} parent=11 // pred_fallthru
        _
      // Predicated region
      $region33: #{deep_conv_autoencoder.1} parent=11 // pred_check
        %p353 = pneg %p171
      $region34: #{deep_conv_autoencoder.1} parent=11 // pred_check_branch
        %355 = sbr.rel (%p353) target = $region36
      $region35: #{deep_conv_autoencoder.1} parent=11 // pred_region
        _
      $region36: #{deep_conv_autoencoder.1} parent=11 // pred_fallthru
        _
      // Predicated region
      $region37: #{deep_conv_autoencoder.1} parent=11 // pred_check
        %p356 = pneg %p192
      $region38: #{deep_conv_autoencoder.1} parent=11 // pred_check_branch
        %358 = sbr.rel (%p356) target = $region40
      $region39: #{deep_conv_autoencoder.1} parent=11 // pred_region
        _
      $region40: #{deep_conv_autoencoder.1} parent=11 // pred_fallthru
        _
      // Predicated region
      $region41: #{deep_conv_autoencoder.1} parent=11 // pred_check
        %p359 = pneg %p213
      $region42: #{deep_conv_autoencoder.1} parent=11 // pred_check_branch
        %361 = sbr.rel (%p359) target = $region44
      $region43: #{deep_conv_autoencoder.1} parent=11 // pred_region
        _
      $region44: #{deep_conv_autoencoder.1} parent=11 // pred_fallthru
        _
      // Predicated region
      $region45: #{deep_conv_autoencoder.1} parent=11 // pred_check
        %p362 = pneg %p234
      $region46: #{deep_conv_autoencoder.1} parent=11 // pred_check_branch
        %364 = sbr.rel (%p362) target = $region48
      $region47: #{deep_conv_autoencoder.1} parent=11 // pred_region
        _
      $region48: #{deep_conv_autoencoder.1} parent=11 // pred_fallthru
        _
      // Predicated region
      $region49: #{deep_conv_autoencoder.1} parent=11 // pred_check
        %p365 = pneg %p255
      $region50: #{deep_conv_autoencoder.1} parent=11 // pred_check_branch
        %367 = sbr.rel (%p365) target = $region52
      $region51: #{deep_conv_autoencoder.1} parent=11 // pred_region
        _
      $region52: #{deep_conv_autoencoder.1} parent=11 // pred_fallthru
        _
      // Predicated region
      $region53: #{deep_conv_autoencoder.1} parent=11 // pred_check
        %p368 = pneg %p276
      $region54: #{deep_conv_autoencoder.1} parent=11 // pred_check_branch
        %370 = sbr.rel (%p368) target = $region56
      $region55: #{deep_conv_autoencoder.1} parent=11 // pred_region
        _
      $region56: #{deep_conv_autoencoder.1} parent=11 // pred_fallthru
        _
      // Predicated region
      $region57: #{deep_conv_autoencoder.1} parent=11 // pred_check
        %p371 = pneg %p297
      $region58: #{deep_conv_autoencoder.1} parent=11 // pred_check_branch
        %373 = sbr.rel (%p371) target = $region60
      $region59: #{deep_conv_autoencoder.1} parent=11 // pred_region
        _
      $region60: #{deep_conv_autoencoder.1} parent=11 // pred_fallthru
        _
    $region12: #{deep_conv_autoencoder.1} parent=5 // pred_fallthru
      _
    %p374 = scmp.lt.s32.totalorder %s19, 2
    // Predicated region
    $region61: #{deep_conv_autoencoder.1} parent=5 // pred_check
      %p375 = pneg %p374
    $region62: #{deep_conv_autoencoder.1} parent=5 // pred_check_branch
      %377 = sbr.rel (%p375) target = $region64
    $region63: #{deep_conv_autoencoder.1} parent=5 // pred_region
      // Predicated region
      $region65: #{deep_conv_autoencoder.1} parent=63 // pred_check
        %p378 = pneg %p39
      $region66: #{deep_conv_autoencoder.1} parent=63 // pred_check_branch
        %380 = sbr.rel (%p378) target = $region68
      $region67: #{deep_conv_autoencoder.1} parent=63 // pred_region
        %p381 = scmp.lt.s32.totalorder %s19, 1
        %s382 = scalar_select %p381, %s19, 1
        %s383 = smul.addr %s382, 32
        %s384 = smul.addr %s383, 4
        %s385 = scalar_lea.vmem %s0, %s384
      $region68: #{deep_conv_autoencoder.1} parent=63 // pred_fallthru
        _
    $region64: #{deep_conv_autoencoder.1} parent=5 // pred_fallthru
      _
    %p386 = scmp.le.s32.totalorder 1, %s19
    %p387 = scmp.lt.s32.totalorder %s19, 3
    %p388 = pnand %p386, %p387
    %p389 = pneg %p388
    // Predicated region
    $region69: #{deep_conv_autoencoder.1} parent=5 // pred_check
      _
    $region70: #{deep_conv_autoencoder.1} parent=5 // pred_check_branch
      %391 = sbr.rel (%p388) target = $region72
    $region71: #{deep_conv_autoencoder.1} parent=5 // pred_region
      %s392 = ssub.s32 %s19, 1
      %p393 = scmp.lt.s32.totalorder %s24, 1
      %s394 = scalar_select %p393, %s24, 1
      %s395 = smul.addr %s394, 32
      %s396 = smul.addr %s395, 4
      %s397 = scalar_lea.vmem %s0, %s396
      %p398 = pneg %p45
      %p399 = pneg %p42
      %p400 = pneg %p66
      %p401 = pneg %p63
      %p402 = pneg %p87
      %p403 = pneg %p84
      %p404 = pneg %p108
      %p405 = pneg %p105
      %p406 = pneg %p129
      %p407 = pneg %p126
      %p408 = pneg %p150
      %p409 = pneg %p147
      %p410 = pneg %p171
      %p411 = pneg %p168
      %p412 = pneg %p192
      %p413 = pneg %p189
      %p414 = pneg %p213
      %p415 = pneg %p210
      %p416 = pneg %p234
      %p417 = pneg %p231
      %p418 = pneg %p255
      %p419 = pneg %p252
      %p420 = pneg %p276
      %p421 = pneg %p273
      %p422 = pneg %p297
      %p423 = pneg %p294
      %p424 = pneg %p323
      %p425 = pneg %p320
      %p426 = scmp.lt.s32.totalorder %s24, 1
      %s427 = scalar_select %p426, %s24, 1
      %s428 = smul.addr %s427, 2
      %s429 = scalar_lea.vmem %s13, %s428
      %p430 = scmp.lt.s32.totalorder %s24, 1
      %s431 = scalar_select %p430, %s24, 1
      %s432 = smul.addr %s431, 32
      %s433 = smul.addr %s432, 4
      %s434 = scalar_lea.vmem %s0, %s433
      %p435 = scmp.lt.s32.totalorder %s24, 1
      %s436 = scalar_select %p435, %s24, 1
      %s437 = smul.addr %s436, 2
      %s438 = scalar_lea.vmem %s13, %s437
      %vm440 = vcmask 257024
      %441 = vst.msk [vmem:[#allocation2] sm:$0xf] %vm440, 0
      %442 = vst.msk [vmem:[#allocation2 + $0x4] sm:$0xf] %vm440, 0
      %443 = vst.msk [vmem:[#allocation2 + $0x8] sm:$0xf] %vm440, 0
      %444 = vst.msk [vmem:[#allocation2 + $0xc] sm:$0xf] %vm440, 0
      %445 = vst.msk [vmem:[#allocation2 + $0x10] sm:$0xf] %vm440, 0
      %446 = vst.msk [vmem:[#allocation2 + $0x14] sm:$0xf] %vm440, 0
      %447 = vst.msk [vmem:[#allocation2 + $0x18] sm:$0xf] %vm440, 0
      %448 = vst.msk [vmem:[#allocation2 + $0x1c] sm:$0xf] %vm440, 0
      %449 = vst.msk [vmem:[#allocation2 + $0x20] sm:$0xf] %vm440, 0
      %450 = vst.msk [vmem:[#allocation2 + $0x24] sm:$0xf] %vm440, 0
      %451 = vst.msk [vmem:[#allocation2 + $0x28] sm:$0xf] %vm440, 0
      %452 = vst.msk [vmem:[#allocation2 + $0x2c] sm:$0xf] %vm440, 0
      %453 = vst.msk [vmem:[#allocation2 + $0x30] sm:$0xf] %vm440, 0
      %454 = vst.msk [vmem:[#allocation2 + $0x34] sm:$0xf] %vm440, 0
      %455 = vst.msk [vmem:[#allocation2 + $0x38] sm:$0xf] %vm440, 0
      %vm456 = vcmask 253952
      %457 = vst.msk [vmem:[#allocation2 + $0x3c] sm:$0x1] %vm456, 0
      %vm458 = vcmask 519168
      %459 = vst.msk [vmem:[#allocation4] sm:$0xf] %vm458, 0
      %460 = vst.msk [vmem:[#allocation4 + $0x4] sm:$0xf] %vm458, 0
      %461 = vst.msk [vmem:[#allocation4 + $0x8] sm:$0xf] %vm458, 0
      %462 = vst.msk [vmem:[#allocation4 + $0xc] sm:$0xf] %vm458, 0
      %463 = vst.msk [vmem:[#allocation4 + $0x10] sm:$0xf] %vm458, 0
      %464 = vst.msk [vmem:[#allocation4 + $0x14] sm:$0xf] %vm458, 0
      %vm465 = vcmask 516096
      %466 = vst.msk [vmem:[#allocation4 + $0x18] sm:$0x1] %vm465, 0
      %v467 = vld [vmem:[%s434] sm:$0xf]
      %v468 = vld [vmem:[%s434 + $0x4] sm:$0xf]
      %v469 = vld [vmem:[%s434 + $0x8] sm:$0xf]
      %v470 = vld [vmem:[%s434 + $0xc] sm:$0xf]
      %v471 = vld [vmem:[%s434 + $0x10] sm:$0xf]
      %v472 = vld [vmem:[%s434 + $0x14] sm:$0xf]
      %v473 = vld [vmem:[%s434 + $0x18] sm:$0xf]
      %v474 = vld [vmem:[%s434 + $0x1c] sm:$0xf]
      %v475 = vld [vmem:[%s434 + $0x20] sm:$0xf]
      %v476 = vld [vmem:[%s434 + $0x24] sm:$0xf]
      %v477 = vld [vmem:[%s434 + $0x28] sm:$0xf]
      %v478 = vld [vmem:[%s434 + $0x2c] sm:$0xf]
      %v479 = vld [vmem:[%s434 + $0x30] sm:$0xf]
      %v480 = vld [vmem:[%s434 + $0x34] sm:$0xf]
      %v481 = vld [vmem:[%s434 + $0x38] sm:$0xf]
      %v482 = vld [vmem:[%s434 + $0x3c] sm:$0xf]
      %v483 = vld [vmem:[%s434 + $0x40] sm:$0xf]
      %v484 = vld [vmem:[%s434 + $0x44] sm:$0xf]
      %v485 = vld [vmem:[%s434 + $0x48] sm:$0xf]
      %v486 = vld [vmem:[%s434 + $0x4c] sm:$0xf]
      %v487 = vld [vmem:[%s434 + $0x50] sm:$0xf]
      %v488 = vld [vmem:[%s434 + $0x54] sm:$0xf]
      %v489 = vld [vmem:[%s434 + $0x58] sm:$0xf]
      %v490 = vld [vmem:[%s434 + $0x5c] sm:$0xf]
      %v491 = vld [vmem:[%s434 + $0x60] sm:$0xf]
      %v492 = vld [vmem:[%s434 + $0x64] sm:$0xf]
      %v493 = vld [vmem:[%s434 + $0x68] sm:$0xf]
      %v494 = vld [vmem:[%s434 + $0x6c] sm:$0xf]
      %v495 = vld [vmem:[%s434 + $0x70] sm:$0xf]
      %v496 = vld [vmem:[%s434 + $0x74] sm:$0xf]
      %v497 = vld [vmem:[%s434 + $0x78] sm:$0xf]
      %v498 = vld [vmem:[%s434 + $0x7c] sm:$0xf]
      %v499 = vld [vmem:[%s1] sm:$0xf]
      %v500 = vld [vmem:[%s1 + $0x4] sm:$0xf]
      %v501 = vld [vmem:[%s2] sm:$0x1]
      %v503 = vperm.slane %v501, 0
      %v537 = vunpack.c.l.b16 %v467
      %v538 = vunpack.c.l.b16 %v468
      %v539 = vunpack.c.l.b16 %v469
      %v540 = vunpack.c.l.b16 %v470
      %v541 = vunpack.c.l.b16 %v471
      %v542 = vunpack.c.l.b16 %v472
      %v543 = vunpack.c.l.b16 %v473
      %v544 = vunpack.c.l.b16 %v474
      %v545 = vunpack.c.l.b16 %v475
      %v546 = vunpack.c.l.b16 %v476
      %v547 = vunpack.c.l.b16 %v477
      %v548 = vunpack.c.l.b16 %v478
      %v549 = vunpack.c.l.b16 %v479
      %v550 = vunpack.c.l.b16 %v480
      %v551 = vunpack.c.l.b16 %v481
      %v552 = vunpack.c.l.b16 %v482
      %v553 = vunpack.c.l.b16 %v483
      %v554 = vunpack.c.l.b16 %v484
      %v555 = vunpack.c.l.b16 %v485
      %v556 = vunpack.c.l.b16 %v486
      %v557 = vunpack.c.l.b16 %v487
      %v558 = vunpack.c.l.b16 %v488
      %v559 = vunpack.c.l.b16 %v489
      %v560 = vunpack.c.l.b16 %v490
      %v561 = vunpack.c.l.b16 %v491
      %v562 = vunpack.c.l.b16 %v492
      %v563 = vunpack.c.l.b16 %v493
      %v564 = vunpack.c.l.b16 %v494
      %v565 = vunpack.c.l.b16 %v495
      %v566 = vunpack.c.l.b16 %v496
      %v567 = vunpack.c.l.b16 %v497
      %v568 = vunpack.c.l.b16 %v498
      %v569 = vpack.c.b16 %v538, %v537
      %v570 = vpack.c.b16 %v540, %v539
      %v571 = vpack.c.b16 %v542, %v541
      %v572 = vpack.c.b16 %v544, %v543
      %v573 = vpack.c.b16 %v546, %v545
      %v574 = vpack.c.b16 %v548, %v547
      %v575 = vpack.c.b16 %v550, %v549
      %v576 = vpack.c.b16 %v552, %v551
      %v577 = vpack.c.b16 %v554, %v553
      %v578 = vpack.c.b16 %v556, %v555
      %v579 = vpack.c.b16 %v558, %v557
      %v580 = vpack.c.b16 %v560, %v559
      %v581 = vpack.c.b16 %v562, %v561
      %v582 = vpack.c.b16 %v564, %v563
      %v583 = vpack.c.b16 %v566, %v565
      %v584 = vpack.c.b16 %v568, %v567
      %v587 = vunpack.c.l.b16 %v499
      %v588 = vunpack.c.l.b16 %v500
      %v589 = vpack.c.b16 %v588, %v587
      %vm591 = vcmask 130048
      %v593 = vsel %vm591, %v569, 0
      %v596 = vsel %vm591, %v570, 0
      %v599 = vsel %vm591, %v571, 0
      %v602 = vsel %vm591, %v572, 0
      %v605 = vsel %vm591, %v573, 0
      %v608 = vsel %vm591, %v574, 0
      %v611 = vsel %vm591, %v575, 0
      %v614 = vsel %vm591, %v576, 0
      %v617 = vsel %vm591, %v577, 0
      %v620 = vsel %vm591, %v578, 0
      %v623 = vsel %vm591, %v579, 0
      %v626 = vsel %vm591, %v580, 0
      %v629 = vsel %vm591, %v581, 0
      %v632 = vsel %vm591, %v582, 0
      %v635 = vsel %vm591, %v583, 0
      %v638 = vsel %vm591, %v584, 0
      %640 = vmatpush.bf16.msra.mxu0 0
      %641 = vmatpush.bf16.msra.mxu0 0
      %642 = vmatpush.bf16.msra.mxu0 0
      %643 = vmatpush.bf16.msra.mxu0 0
      %644 = vmatpush.bf16.msra.mxu0 0
      %645 = vmatpush.bf16.msra.mxu0 0
      %646 = vmatpush.bf16.msra.mxu0 0
      %647 = vmatpush.bf16.msra.mxu0 %v589
      %648 = vmatmul.bf16.gmra.mxu0 %v593
      %v649 = vpop.f32.mrf.mxu0
      %v650 = vadd.f32 %v503, %v649
      %v651 = vpop.f32.mrf.mxu0
      %v652 = vadd.f32 %v503, %v651
      %653 = vmatmul.bf16.gmra.mxu0 %v596
      %v654 = vpop.f32.mrf.mxu0
      %v655 = vadd.f32 %v503, %v654
      %v656 = vpop.f32.mrf.mxu0
      %v657 = vadd.f32 %v503, %v656
      %658 = vmatmul.bf16.gmra.mxu0 %v599
      %v659 = vpop.f32.mrf.mxu0
      %v660 = vadd.f32 %v503, %v659
      %v661 = vpop.f32.mrf.mxu0
      %v662 = vadd.f32 %v503, %v661
      %663 = vmatmul.bf16.gmra.mxu0 %v602
      %v664 = vpop.f32.mrf.mxu0
      %v665 = vadd.f32 %v503, %v664
      %v666 = vpop.f32.mrf.mxu0
      %v667 = vadd.f32 %v503, %v666
      %668 = vmatmul.bf16.gmra.mxu0 %v605
      %v669 = vpop.f32.mrf.mxu0
      %v670 = vadd.f32 %v503, %v669
      %v671 = vpop.f32.mrf.mxu0
      %v672 = vadd.f32 %v503, %v671
      %673 = vmatmul.bf16.gmra.mxu0 %v608
      %v674 = vpop.f32.mrf.mxu0
      %v675 = vadd.f32 %v503, %v674
      %v676 = vpop.f32.mrf.mxu0
      %v677 = vadd.f32 %v503, %v676
      %678 = vmatmul.bf16.gmra.mxu0 %v611
      %v679 = vpop.f32.mrf.mxu0
      %v680 = vadd.f32 %v503, %v679
      %v681 = vpop.f32.mrf.mxu0
      %v682 = vadd.f32 %v503, %v681
      %683 = vmatmul.bf16.gmra.mxu0 %v614
      %v684 = vpop.f32.mrf.mxu0
      %v685 = vadd.f32 %v503, %v684
      %v686 = vpop.f32.mrf.mxu0
      %v687 = vadd.f32 %v503, %v686
      %688 = vmatmul.bf16.gmra.mxu0 %v617
      %v689 = vpop.f32.mrf.mxu0
      %v690 = vadd.f32 %v503, %v689
      %v691 = vpop.f32.mrf.mxu0
      %v692 = vadd.f32 %v503, %v691
      %693 = vmatmul.bf16.gmra.mxu0 %v620
      %v694 = vpop.f32.mrf.mxu0
      %v695 = vadd.f32 %v503, %v694
      %v696 = vpop.f32.mrf.mxu0
      %v697 = vadd.f32 %v503, %v696
      %698 = vmatmul.bf16.gmra.mxu0 %v623
      %v699 = vpop.f32.mrf.mxu0
      %v700 = vadd.f32 %v503, %v699
      %v701 = vpop.f32.mrf.mxu0
      %v702 = vadd.f32 %v503, %v701
      %703 = vmatmul.bf16.gmra.mxu0 %v626
      %v704 = vpop.f32.mrf.mxu0
      %v705 = vadd.f32 %v503, %v704
      %v706 = vpop.f32.mrf.mxu0
      %v707 = vadd.f32 %v503, %v706
      %708 = vmatmul.bf16.gmra.mxu0 %v629
      %v709 = vpop.f32.mrf.mxu0
      %v710 = vadd.f32 %v503, %v709
      %v711 = vpop.f32.mrf.mxu0
      %v712 = vadd.f32 %v503, %v711
      %713 = vmatmul.bf16.gmra.mxu0 %v632
      %v714 = vpop.f32.mrf.mxu0
      %v715 = vadd.f32 %v503, %v714
      %v716 = vpop.f32.mrf.mxu0
      %v717 = vadd.f32 %v503, %v716
      %718 = vmatmul.bf16.gmra.mxu0 %v635
      %v719 = vpop.f32.mrf.mxu0
      %v720 = vadd.f32 %v503, %v719
      %v721 = vpop.f32.mrf.mxu0
      %v722 = vadd.f32 %v503, %v721
      %723 = vmatmul.bf16.gmra.mxu0 %v638
      %v724 = vpop.f32.mrf.mxu0
      %v725 = vadd.f32 %v503, %v724
      %v726 = vpop.f32.mrf.mxu0
      %v727 = vadd.f32 %v503, %v726
      %728 = vdwg.mxu0
      %v729 = vmax.f32 %v650, 0.0
      %v730 = vmax.f32 %v652, 0.0
      %v731 = vmax.f32 %v655, 0.0
      %v732 = vmax.f32 %v657, 0.0
      %v733 = vmax.f32 %v660, 0.0
      %v734 = vmax.f32 %v662, 0.0
      %v735 = vmax.f32 %v665, 0.0
      %v736 = vmax.f32 %v667, 0.0
      %v737 = vmax.f32 %v670, 0.0
      %v738 = vmax.f32 %v672, 0.0
      %v739 = vmax.f32 %v675, 0.0
      %v740 = vmax.f32 %v677, 0.0
      %v741 = vmax.f32 %v680, 0.0
      %v742 = vmax.f32 %v682, 0.0
      %v743 = vmax.f32 %v685, 0.0
      %v744 = vmax.f32 %v687, 0.0
      %v745 = vmax.f32 %v690, 0.0
      %v746 = vmax.f32 %v692, 0.0
      %v747 = vmax.f32 %v695, 0.0
      %v748 = vmax.f32 %v697, 0.0
      %v749 = vmax.f32 %v700, 0.0
      %v750 = vmax.f32 %v702, 0.0
      %v751 = vmax.f32 %v705, 0.0
      %v752 = vmax.f32 %v707, 0.0
      %v753 = vmax.f32 %v710, 0.0
      %v754 = vmax.f32 %v712, 0.0
      %v755 = vmax.f32 %v715, 0.0
      %v756 = vmax.f32 %v717, 0.0
      %v757 = vmax.f32 %v720, 0.0
      %v758 = vmax.f32 %v722, 0.0
      %v759 = vmax.f32 %v725, 0.0
      %v760 = vmax.f32 %v727, 0.0
      %v761 = vmax.f32 %v729, %v737
      %v762 = vmax.f32 %v730, %v738
      %v763 = vmax.f32 %v731, %v739
      %v764 = vmax.f32 %v732, %v740
      %v765 = vmax.f32 %v733, %v741
      %v766 = vmax.f32 %v734, %v742
      %v767 = vmax.f32 %v735, %v743
      %v768 = vmax.f32 %v736, %v744
      %v769 = vmax.f32 %v745, %v753
      %v770 = vmax.f32 %v746, %v754
      %v771 = vmax.f32 %v747, %v755
      %v772 = vmax.f32 %v748, %v756
      %v773 = vmax.f32 %v749, %v757
      %v774 = vmax.f32 %v750, %v758
      %v775 = vmax.f32 %v751, %v759
      %v776 = vmax.f32 %v752, %v760
      %v777 = vmax.f32 %v761, %v769
      %v778 = vmax.f32 %v762, %v770
      %v779 = vmax.f32 %v763, %v771
      %v780 = vmax.f32 %v764, %v772
      %v781 = vmax.f32 %v765, %v773
      %v782 = vmax.f32 %v766, %v774
      %v783 = vmax.f32 %v767, %v775
      %v784 = vmax.f32 %v768, %v776
      %v785 = vpack.c.bf16 %v777, %v777
      %v786 = vpack.c.bf16 %v778, %v778
      %v787 = vpack.c.bf16 %v779, %v779
      %v788 = vpack.c.bf16 %v780, %v780
      %v789 = vpack.c.bf16 %v781, %v781
      %v790 = vpack.c.bf16 %v782, %v782
      %v791 = vpack.c.bf16 %v783, %v783
      %v792 = vpack.c.bf16 %v784, %v784
      %v794 = vrot.slane %v785, 5
      %v795 = vrot.slane %v794, 4
      %vm798 = vcmask 257027
      %799 = vst.msk [vmem:[#allocation2 + $0x8] sm:$0x8] %vm798, %v794
      %vm800 = vcmask 256000
      %801 = vst.msk [vmem:[#allocation2 + $0xc] sm:$0x7] %vm800, %v795
      %802 = vst.msk [vmem:[#allocation2 + $0x10] sm:$0xf] %vm440, %v786
      %v804 = vrot.slane %v787, 7
      %v805 = vrot.slane %v804, 4
      %vm808 = vcmask 257025
      %809 = vst.msk [vmem:[#allocation2 + $0x14] sm:$0xe] %vm808, %v804
      %810 = vst.msk [vmem:[#allocation2 + $0x18] sm:$0x1] %vm456, %v805
      %v812 = vrot.slane %v788, 6
      %v813 = vrot.slane %v812, 4
      %vm816 = vcmask 257026
      %817 = vst.msk [vmem:[#allocation2 + $0x18] sm:$0xc] %vm816, %v812
      %vm818 = vcmask 254976
      %819 = vst.msk [vmem:[#allocation2 + $0x1c] sm:$0x3] %vm818, %v813
      %v821 = vrot.slane %v789, 5
      %v822 = vrot.slane %v821, 4
      %825 = vst.msk [vmem:[#allocation2 + $0x1c] sm:$0x8] %vm798, %v821
      %826 = vst.msk [vmem:[#allocation2 + $0x20] sm:$0x7] %vm800, %v822
      %827 = vst.msk [vmem:[#allocation2 + $0x24] sm:$0xf] %vm440, %v790
      %v829 = vrot.slane %v791, 7
      %v830 = vrot.slane %v829, 4
      %833 = vst.msk [vmem:[#allocation2 + $0x28] sm:$0xe] %vm808, %v829
      %834 = vst.msk [vmem:[#allocation2 + $0x2c] sm:$0x1] %vm456, %v830
      %v836 = vrot.slane %v792, 6
      %v837 = vrot.slane %v836, 4
      %840 = vst.msk [vmem:[#allocation2 + $0x2c] sm:$0xc] %vm816, %v836
      %841 = vst.msk [vmem:[#allocation2 + $0x30] sm:$0x3] %vm818, %v837
      %v842 = vld [vmem:[#allocation2] sm:$0xf]
      %v843 = vld [vmem:[#allocation2 + $0x4] sm:$0xf]
      %v844 = vld [vmem:[#allocation2 + $0x8] sm:$0xf]
      %v845 = vld [vmem:[#allocation2 + $0xc] sm:$0xf]
      %v846 = vld [vmem:[#allocation2 + $0x10] sm:$0xf]
      %v847 = vld [vmem:[#allocation2 + $0x14] sm:$0xf]
      %v848 = vld [vmem:[#allocation2 + $0x18] sm:$0xf]
      %v849 = vld [vmem:[#allocation2 + $0x1c] sm:$0xf]
      %v850 = vld [vmem:[#allocation2 + $0x20] sm:$0xf]
      %v851 = vld [vmem:[#allocation2 + $0x24] sm:$0xf]
      %v852 = vld [vmem:[#allocation2 + $0x28] sm:$0xf]
      %v853 = vld [vmem:[#allocation2 + $0x2c] sm:$0xf]
      %v854 = vld [vmem:[#allocation2 + $0x30] sm:$0x3]
      %v855 = vld [vmem:[#allocation2 + $0x30] sm:$0x7]
      %v856 = vld [vmem:[#allocation2] sm:$0xe]
      %v857 = vld [vmem:[#allocation2 + $0x4] sm:$0xe]
      %v858 = vld [vmem:[#allocation2 + $0x30] sm:$0xf]
      %v859 = vld [vmem:[#allocation2 + $0x34] sm:$0x7]
      %v860 = vld [vmem:[#allocation2 + $0x34] sm:$0xf]
      %v861 = vld [vmem:[#allocation2 + $0x4] sm:$0xc]
      %v862 = vld [vmem:[#allocation2 + $0x8] sm:$0xc]
      %v863 = vld [vmem:[#allocation2 + $0x38] sm:$0xf]
      %v864 = vld [vmem:[#allocation2 + $0x3c] sm:$0x1]
      %v865 = vld [vmem:[#allocation2 + $0x8] sm:$0x8]
      %v879 = vunpack.c.l.b16 %v842
      %v880 = vunpack.c.l.b16 %v843
      %v881 = vunpack.c.l.b16 %v844
      %v882 = vunpack.c.l.b16 %v845
      %v883 = vunpack.c.l.b16 %v846
      %v884 = vunpack.c.l.b16 %v847
      %v885 = vunpack.c.l.b16 %v848
      %v886 = vunpack.c.l.b16 %v849
      %v887 = vunpack.c.l.b16 %v850
      %v888 = vunpack.c.l.b16 %v851
      %v889 = vunpack.c.l.b16 %v852
      %v890 = vunpack.c.l.b16 %v853
      %v891 = vunpack.c.l.b16 %v854
      %v892 = vpack.c.b16 %v880, %v879
      %v893 = vpack.c.b16 %v882, %v881
      %v894 = vpack.c.b16 %v884, %v883
      %v895 = vpack.c.b16 %v886, %v885
      %v896 = vpack.c.b16 %v888, %v887
      %v897 = vpack.c.b16 %v890, %v889
      %v898 = vpack.c.b16 %v891, %v891
      %v900 = vunpack.c.l.b16 %v855
      %v901 = vpack.c.b16 %v900, %v900
      %vm902 = vsmask.f32 7424
      %v904 = vshrl.u32 %v892, 16
      %v906 = vshll.u32 %v892, 16
      %v908 = vrot.slane %v906, 1
      %v909 = vor.u32 %v904, %v908
      %v911 = vshll.u32 %v893, 16
      %v913 = vrot.slane %v911, 1
      %v914 = vsel %vm902, %v909, %v913
      %v915 = vshrl.u32 %v893, 16
      %v917 = vor.u32 %v915, %v913
      %v919 = vshll.u32 %v894, 16
      %v921 = vrot.slane %v919, 1
      %v922 = vsel %vm902, %v917, %v921
      %v923 = vshrl.u32 %v894, 16
      %v925 = vor.u32 %v923, %v921
      %v927 = vshll.u32 %v895, 16
      %v929 = vrot.slane %v927, 1
      %v930 = vsel %vm902, %v925, %v929
      %v931 = vshrl.u32 %v895, 16
      %v933 = vor.u32 %v931, %v929
      %v935 = vshll.u32 %v896, 16
      %v937 = vrot.slane %v935, 1
      %v938 = vsel %vm902, %v933, %v937
      %v939 = vshrl.u32 %v896, 16
      %v941 = vor.u32 %v939, %v937
      %v943 = vshll.u32 %v897, 16
      %v945 = vrot.slane %v943, 1
      %v946 = vsel %vm902, %v941, %v945
      %v947 = vshrl.u32 %v897, 16
      %v949 = vor.u32 %v947, %v945
      %v951 = vshll.u32 %v901, 16
      %v953 = vrot.slane %v951, 1
      %v954 = vsel %vm902, %v949, %v953
      %v955 = vshrl.u32 %v901, 16
      %v957 = vor.u32 %v955, %v953
      %958 = vrot.lane.b32.xlu0 %v914, 32
      %v959 = vpop.permute.xlu0 %958
      %960 = vrot.lane.b32.xlu0 %v922, 32
      %v961 = vpop.permute.xlu0 %960
      %962 = vrot.lane.b32.xlu0 %v930, 32
      %v963 = vpop.permute.xlu0 %962
      %964 = vrot.lane.b32.xlu0 %v938, 32
      %v965 = vpop.permute.xlu0 %964
      %966 = vrot.lane.b32.xlu0 %v946, 32
      %v967 = vpop.permute.xlu0 %966
      %968 = vrot.lane.b32.xlu0 %v954, 32
      %v969 = vpop.permute.xlu0 %968
      %970 = vrot.lane.b32.xlu0 %v957, 32
      %v971 = vpop.permute.xlu0 %970
      %v973 = vunpack.c.l.b16 %v856
      %v974 = vpack.c.b16 %v880, %v973
      %vm975 = vcmask 1046528
      %v976 = vrot.slane %v974, 1
      %v977 = vrot.slane %v893, 1
      %v978 = vsel %vm975, %v976, %v977
      %v979 = vrot.slane %v894, 1
      %v980 = vsel %vm975, %v977, %v979
      %v981 = vrot.slane %v895, 1
      %v982 = vsel %vm975, %v979, %v981
      %v983 = vrot.slane %v896, 1
      %v984 = vsel %vm975, %v981, %v983
      %v985 = vrot.slane %v897, 1
      %v986 = vsel %vm975, %v983, %v985
      %v987 = vrot.slane %v901, 1
      %v988 = vsel %vm975, %v985, %v987
      %989 = vrot.lane.b32.xlu0 %v978, 64
      %v990 = vpop.permute.xlu0 %989
      %991 = vrot.lane.b32.xlu0 %v980, 64
      %v992 = vpop.permute.xlu0 %991
      %993 = vrot.lane.b32.xlu0 %v982, 64
      %v994 = vpop.permute.xlu0 %993
      %995 = vrot.lane.b32.xlu0 %v984, 64
      %v996 = vpop.permute.xlu0 %995
      %997 = vrot.lane.b32.xlu0 %v986, 64
      %v998 = vpop.permute.xlu0 %997
      %999 = vrot.lane.b32.xlu0 %v988, 64
      %v1000 = vpop.permute.xlu0 %999
      %1001 = vrot.lane.b32.xlu0 %v987, 64
      %v1002 = vpop.permute.xlu0 %1001
      %v1006 = vunpack.c.l.b16 %v857
      %v1007 = vunpack.c.l.b16 %v858
      %v1008 = vunpack.c.l.b16 %v859
      %v1009 = vpack.c.b16 %v881, %v1006
      %v1010 = vpack.c.b16 %v883, %v882
      %v1011 = vpack.c.b16 %v885, %v884
      %v1012 = vpack.c.b16 %v887, %v886
      %v1013 = vpack.c.b16 %v889, %v888
      %v1014 = vpack.c.b16 %v1007, %v890
      %v1015 = vpack.c.b16 %v1008, %v1008
      %v1016 = vrot.slane %v1009, 1
      %v1017 = vrot.slane %v1010, 1
      %v1018 = vsel %vm975, %v1016, %v1017
      %v1019 = vrot.slane %v1011, 1
      %v1020 = vsel %vm975, %v1017, %v1019
      %v1021 = vrot.slane %v1012, 1
      %v1022 = vsel %vm975, %v1019, %v1021
      %v1023 = vrot.slane %v1013, 1
      %v1024 = vsel %vm975, %v1021, %v1023
      %v1025 = vrot.slane %v1014, 1
      %v1026 = vsel %vm975, %v1023, %v1025
      %v1027 = vrot.slane %v1015, 1
      %v1028 = vsel %vm975, %v1025, %v1027
      %1029 = vrot.lane.b32.xlu0 %v1018, 96
      %v1030 = vpop.permute.xlu0 %1029
      %1031 = vrot.lane.b32.xlu0 %v1020, 96
      %v1032 = vpop.permute.xlu0 %1031
      %1033 = vrot.lane.b32.xlu0 %v1022, 96
      %v1034 = vpop.permute.xlu0 %1033
      %1035 = vrot.lane.b32.xlu0 %v1024, 96
      %v1036 = vpop.permute.xlu0 %1035
      %1037 = vrot.lane.b32.xlu0 %v1026, 96
      %v1038 = vpop.permute.xlu0 %1037
      %1039 = vrot.lane.b32.xlu0 %v1028, 96
      %v1040 = vpop.permute.xlu0 %1039
      %1041 = vrot.lane.b32.xlu0 %v1027, 96
      %v1042 = vpop.permute.xlu0 %1041
      %v1044 = vunpack.c.l.b16 %v860
      %v1045 = vpack.c.b16 %v1044, %v1044
      %vm1046 = vsmask.f32 6400
      %v1048 = vshrl.u32 %v1009, 16
      %v1050 = vrot.slane %v1048, 1
      %v1051 = vshll.u32 %v1009, 16
      %v1053 = vrot.slane %v1051, 2
      %v1054 = vor.u32 %v1050, %v1053
      %v1056 = vshrl.u32 %v1010, 16
      %v1058 = vrot.slane %v1056, 1
      %v1059 = vshll.u32 %v1010, 16
      %v1061 = vrot.slane %v1059, 2
      %v1062 = vor.u32 %v1058, %v1061
      %v1063 = vsel %vm1046, %v1054, %v1062
      %v1065 = vshrl.u32 %v1011, 16
      %v1067 = vrot.slane %v1065, 1
      %v1068 = vshll.u32 %v1011, 16
      %v1070 = vrot.slane %v1068, 2
      %v1071 = vor.u32 %v1067, %v1070
      %v1072 = vsel %vm1046, %v1062, %v1071
      %v1074 = vshrl.u32 %v1012, 16
      %v1076 = vrot.slane %v1074, 1
      %v1077 = vshll.u32 %v1012, 16
      %v1079 = vrot.slane %v1077, 2
      %v1080 = vor.u32 %v1076, %v1079
      %v1081 = vsel %vm1046, %v1071, %v1080
      %v1083 = vshrl.u32 %v1013, 16
      %v1085 = vrot.slane %v1083, 1
      %v1086 = vshll.u32 %v1013, 16
      %v1088 = vrot.slane %v1086, 2
      %v1089 = vor.u32 %v1085, %v1088
      %v1090 = vsel %vm1046, %v1080, %v1089
      %v1092 = vshrl.u32 %v1014, 16
      %v1094 = vrot.slane %v1092, 1
      %v1095 = vshll.u32 %v1014, 16
      %v1097 = vrot.slane %v1095, 2
      %v1098 = vor.u32 %v1094, %v1097
      %v1099 = vsel %vm1046, %v1089, %v1098
      %v1101 = vshrl.u32 %v1045, 16
      %v1103 = vrot.slane %v1101, 1
      %v1104 = vshll.u32 %v1045, 16
      %v1106 = vrot.slane %v1104, 2
      %v1107 = vor.u32 %v1103, %v1106
      %v1108 = vsel %vm1046, %v1098, %v1107
      %v1110 = vunpack.c.l.b16 %v861
      %v1111 = vpack.c.b16 %v881, %v1110
      %vm1112 = vcmask 1045504
      %v1113 = vrot.slane %v1111, 2
      %v1114 = vrot.slane %v1010, 2
      %v1115 = vsel %vm1112, %v1113, %v1114
      %v1116 = vrot.slane %v1011, 2
      %v1117 = vsel %vm1112, %v1114, %v1116
      %v1118 = vrot.slane %v1012, 2
      %v1119 = vsel %vm1112, %v1116, %v1118
      %v1120 = vrot.slane %v1013, 2
      %v1121 = vsel %vm1112, %v1118, %v1120
      %v1122 = vrot.slane %v1014, 2
      %v1123 = vsel %vm1112, %v1120, %v1122
      %v1124 = vrot.slane %v1045, 2
      %v1125 = vsel %vm1112, %v1122, %v1124
      %1126 = vrot.lane.b32.xlu0 %v1115, 32
      %v1127 = vpop.permute.xlu0 %1126
      %1128 = vrot.lane.b32.xlu0 %v1117, 32
      %v1129 = vpop.permute.xlu0 %1128
      %1130 = vrot.lane.b32.xlu0 %v1119, 32
      %v1131 = vpop.permute.xlu0 %1130
      %1132 = vrot.lane.b32.xlu0 %v1121, 32
      %v1133 = vpop.permute.xlu0 %1132
      %1134 = vrot.lane.b32.xlu0 %v1123, 32
      %v1135 = vpop.permute.xlu0 %1134
      %1136 = vrot.lane.b32.xlu0 %v1125, 32
      %v1137 = vpop.permute.xlu0 %1136
      %1138 = vrot.lane.b32.xlu0 %v1124, 32
      %v1139 = vpop.permute.xlu0 %1138
      %v1142 = vunpack.c.l.b16 %v862
      %v1143 = vunpack.c.l.b16 %v863
      %v1144 = vpack.c.b16 %v882, %v1142
      %v1145 = vpack.c.b16 %v1044, %v1007
      %v1146 = vpack.c.b16 %v1143, %v1143
      %v1147 = vrot.slane %v1144, 2
      %v1148 = vrot.slane %v894, 2
      %v1149 = vsel %vm1112, %v1147, %v1148
      %v1150 = vrot.slane %v895, 2
      %v1151 = vsel %vm1112, %v1148, %v1150
      %v1152 = vrot.slane %v896, 2
      %v1153 = vsel %vm1112, %v1150, %v1152
      %v1154 = vrot.slane %v897, 2
      %v1155 = vsel %vm1112, %v1152, %v1154
      %v1156 = vrot.slane %v1145, 2
      %v1157 = vsel %vm1112, %v1154, %v1156
      %v1158 = vrot.slane %v1146, 2
      %v1159 = vsel %vm1112, %v1156, %v1158
      %1160 = vrot.lane.b32.xlu0 %v1149, 64
      %v1161 = vpop.permute.xlu0 %1160
      %1162 = vrot.lane.b32.xlu0 %v1151, 64
      %v1163 = vpop.permute.xlu0 %1162
      %1164 = vrot.lane.b32.xlu0 %v1153, 64
      %v1165 = vpop.permute.xlu0 %1164
      %1166 = vrot.lane.b32.xlu0 %v1155, 64
      %v1167 = vpop.permute.xlu0 %1166
      %1168 = vrot.lane.b32.xlu0 %v1157, 64
      %v1169 = vpop.permute.xlu0 %1168
      %1170 = vrot.lane.b32.xlu0 %v1159, 64
      %v1171 = vpop.permute.xlu0 %1170
      %1172 = vrot.lane.b32.xlu0 %v1158, 64
      %v1173 = vpop.permute.xlu0 %1172
      %v1175 = vunpack.c.l.b16 %v864
      %v1176 = vpack.c.b16 %v1175, %v1143
      %vm1177 = vsmask.f32 5376
      %v1179 = vshrl.u32 %v1144, 16
      %v1181 = vrot.slane %v1179, 2
      %v1182 = vshll.u32 %v1144, 16
      %v1184 = vrot.slane %v1182, 3
      %v1185 = vor.u32 %v1181, %v1184
      %v1186 = vrot.slane %v923, 2
      %v1187 = vrot.slane %v919, 3
      %v1188 = vor.u32 %v1186, %v1187
      %v1189 = vsel %vm1177, %v1185, %v1188
      %v1190 = vrot.slane %v931, 2
      %v1191 = vrot.slane %v927, 3
      %v1192 = vor.u32 %v1190, %v1191
      %v1193 = vsel %vm1177, %v1188, %v1192
      %v1194 = vrot.slane %v939, 2
      %v1195 = vrot.slane %v935, 3
      %v1196 = vor.u32 %v1194, %v1195
      %v1197 = vsel %vm1177, %v1192, %v1196
      %v1198 = vrot.slane %v947, 2
      %v1199 = vrot.slane %v943, 3
      %v1200 = vor.u32 %v1198, %v1199
      %v1201 = vsel %vm1177, %v1196, %v1200
      %v1203 = vshrl.u32 %v1145, 16
      %v1205 = vrot.slane %v1203, 2
      %v1206 = vshll.u32 %v1145, 16
      %v1208 = vrot.slane %v1206, 3
      %v1209 = vor.u32 %v1205, %v1208
      %v1210 = vsel %vm1177, %v1200, %v1209
      %v1212 = vshrl.u32 %v1176, 16
      %v1214 = vrot.slane %v1212, 2
      %v1215 = vshll.u32 %v1176, 16
      %v1217 = vrot.slane %v1215, 3
      %v1218 = vor.u32 %v1214, %v1217
      %v1219 = vsel %vm1177, %v1209, %v1218
      %1220 = vrot.lane.b32.xlu0 %v1189, 96
      %v1221 = vpop.permute.xlu0 %1220
      %1222 = vrot.lane.b32.xlu0 %v1193, 96
      %v1223 = vpop.permute.xlu0 %1222
      %1224 = vrot.lane.b32.xlu0 %v1197, 96
      %v1225 = vpop.permute.xlu0 %1224
      %1226 = vrot.lane.b32.xlu0 %v1201, 96
      %v1227 = vpop.permute.xlu0 %1226
      %1228 = vrot.lane.b32.xlu0 %v1210, 96
      %v1229 = vpop.permute.xlu0 %1228
      %1230 = vrot.lane.b32.xlu0 %v1219, 96
      %v1231 = vpop.permute.xlu0 %1230
      %1232 = vrot.lane.b32.xlu0 %v1218, 96
      %v1233 = vpop.permute.xlu0 %1232
      %v1235 = vunpack.c.l.b16 %v865
      %v1236 = vpack.c.b16 %v882, %v1235
      %vm1237 = vcmask 1044480
      %v1238 = vrot.slane %v1236, 3
      %v1239 = vrot.slane %v894, 3
      %v1240 = vsel %vm1237, %v1238, %v1239
      %v1241 = vrot.slane %v895, 3
      %v1242 = vsel %vm1237, %v1239, %v1241
      %v1243 = vrot.slane %v896, 3
      %v1244 = vsel %vm1237, %v1241, %v1243
      %v1245 = vrot.slane %v897, 3
      %v1246 = vsel %vm1237, %v1243, %v1245
      %v1247 = vrot.slane %v1145, 3
      %v1248 = vsel %vm1237, %v1245, %v1247
      %v1249 = vrot.slane %v1176, 3
      %v1250 = vsel %vm1237, %v1247, %v1249
      %vm1251 = vcmask 261120
      %v1253 = vsel %vm1251, %v892, %v959
      %v1255 = vsel %vm1251, %v893, %v961
      %v1257 = vsel %vm1251, %v894, %v963
      %v1259 = vsel %vm1251, %v895, %v965
      %v1261 = vsel %vm1251, %v896, %v967
      %v1263 = vsel %vm1251, %v897, %v969
      %v1266 = vsel %vm1251, %v898, %v971
      %vm1267 = vcmask 523264
      %v1269 = vsel %vm1267, %v1253, %v990
      %v1271 = vsel %vm1267, %v1255, %v992
      %v1273 = vsel %vm1267, %v1257, %v994
      %v1275 = vsel %vm1267, %v1259, %v996
      %v1277 = vsel %vm1267, %v1261, %v998
      %v1279 = vsel %vm1267, %v1263, %v1000
      %v1281 = vsel %vm1267, %v1266, %v1002
      %vm1282 = vcmask 785408
      %v1284 = vsel %vm1282, %v1269, %v1030
      %v1287 = vsel %vm1282, %v1271, %v1032
      %v1290 = vsel %vm1282, %v1273, %v1034
      %v1293 = vsel %vm1282, %v1275, %v1036
      %v1296 = vsel %vm1282, %v1277, %v1038
      %v1299 = vsel %vm1282, %v1279, %v1040
      %v1302 = vsel %vm1282, %v1281, %v1042
      %v1306 = vsel %vm1251, %v1063, %v1127
      %v1309 = vsel %vm1251, %v1072, %v1129
      %v1312 = vsel %vm1251, %v1081, %v1131
      %v1315 = vsel %vm1251, %v1090, %v1133
      %v1318 = vsel %vm1251, %v1099, %v1135
      %v1321 = vsel %vm1251, %v1108, %v1137
      %v1324 = vsel %vm1251, %v1107, %v1139
      %v1326 = vsel %vm1267, %v1306, %v1161
      %v1328 = vsel %vm1267, %v1309, %v1163
      %v1330 = vsel %vm1267, %v1312, %v1165
      %v1332 = vsel %vm1267, %v1315, %v1167
      %v1334 = vsel %vm1267, %v1318, %v1169
      %v1336 = vsel %vm1267, %v1321, %v1171
      %v1338 = vsel %vm1267, %v1324, %v1173
      %v1340 = vsel %vm1282, %v1326, %v1221
      %v1343 = vsel %vm1282, %v1328, %v1223
      %v1346 = vsel %vm1282, %v1330, %v1225
      %v1349 = vsel %vm1282, %v1332, %v1227
      %v1352 = vsel %vm1282, %v1334, %v1229
      %v1355 = vsel %vm1282, %v1336, %v1231
      %v1358 = vsel %vm1282, %v1338, %v1233
      %v1360 = vld [vmem:[%s3] sm:$0xf]
      %v1361 = vld [vmem:[%s3 + $0x4] sm:$0xf]
      %v1362 = vld [vmem:[%s3 + $0x8] sm:$0xf]
      %v1363 = vld [vmem:[%s3 + $0xc] sm:$0xf]
      %v1364 = vld [vmem:[%s3 + $0x10] sm:$0xf]
      %v1365 = vld [vmem:[%s3 + $0x14] sm:$0xf]
      %v1366 = vld [vmem:[%s3 + $0x18] sm:$0xf]
      %v1367 = vld [vmem:[%s3 + $0x1c] sm:$0xf]
      %v1368 = vld [vmem:[%s3 + $0x20] sm:$0xf]
      %v1369 = vld [vmem:[%s3 + $0x24] sm:$0xf]
      %v1370 = vld [vmem:[%s3 + $0x28] sm:$0xf]
      %v1371 = vld [vmem:[%s3 + $0x2c] sm:$0xf]
      %v1372 = vld [vmem:[%s3 + $0x30] sm:$0xf]
      %v1373 = vld [vmem:[%s3 + $0x34] sm:$0xf]
      %v1374 = vld [vmem:[%s3 + $0x38] sm:$0xf]
      %v1375 = vld [vmem:[%s3 + $0x3c] sm:$0xf]
      %v1376 = vld [vmem:[%s3 + $0x40] sm:$0xf]
      %v1377 = vld [vmem:[%s3 + $0x44] sm:$0xf]
      %v1378 = vld [vmem:[%s3 + $0x48] sm:$0xf]
      %v1379 = vld [vmem:[%s3 + $0x4c] sm:$0xf]
      %v1380 = vld [vmem:[%s3 + $0x50] sm:$0xf]
      %v1381 = vld [vmem:[%s3 + $0x54] sm:$0xf]
      %v1382 = vld [vmem:[%s3 + $0x58] sm:$0xf]
      %v1383 = vld [vmem:[%s3 + $0x5c] sm:$0xf]
      %v1384 = vld [vmem:[%s3 + $0x60] sm:$0xf]
      %v1385 = vld [vmem:[%s3 + $0x64] sm:$0xf]
      %v1386 = vld [vmem:[%s3 + $0x68] sm:$0xf]
      %v1387 = vld [vmem:[%s3 + $0x6c] sm:$0xf]
      %v1388 = vld [vmem:[%s3 + $0x70] sm:$0xf]
      %v1389 = vld [vmem:[%s3 + $0x74] sm:$0xf]
      %v1390 = vld [vmem:[%s3 + $0x78] sm:$0xf]
      %v1391 = vld [vmem:[%s3 + $0x7c] sm:$0xf]
      %v1392 = vld [vmem:[%s3 + $0x80] sm:$0xf]
      %v1393 = vld [vmem:[%s3 + $0x84] sm:$0xf]
      %v1394 = vld [vmem:[%s3 + $0x88] sm:$0xf]
      %v1395 = vld [vmem:[%s3 + $0x8c] sm:$0xf]
      %v1396 = vld [vmem:[%s4] sm:$0x1]
      %v1398 = vperm.slane %v1396, 0
      %v1436 = vunpack.c.l.b16 %v1360
      %v1437 = vunpack.c.l.b16 %v1361
      %v1438 = vunpack.c.l.b16 %v1362
      %v1439 = vunpack.c.l.b16 %v1363
      %v1440 = vunpack.c.l.b16 %v1364
      %v1441 = vunpack.c.l.b16 %v1365
      %v1442 = vunpack.c.l.b16 %v1366
      %v1443 = vunpack.c.l.b16 %v1367
      %v1444 = vunpack.c.l.b16 %v1368
      %v1445 = vunpack.c.l.b16 %v1369
      %v1446 = vunpack.c.l.b16 %v1370
      %v1447 = vunpack.c.l.b16 %v1371
      %v1448 = vunpack.c.l.b16 %v1372
      %v1449 = vunpack.c.l.b16 %v1373
      %v1450 = vunpack.c.l.b16 %v1374
      %v1451 = vunpack.c.l.b16 %v1375
      %v1452 = vunpack.c.l.b16 %v1376
      %v1453 = vunpack.c.l.b16 %v1377
      %v1454 = vunpack.c.l.b16 %v1378
      %v1455 = vunpack.c.l.b16 %v1379
      %v1456 = vunpack.c.l.b16 %v1380
      %v1457 = vunpack.c.l.b16 %v1381
      %v1458 = vunpack.c.l.b16 %v1382
      %v1459 = vunpack.c.l.b16 %v1383
      %v1460 = vunpack.c.l.b16 %v1384
      %v1461 = vunpack.c.l.b16 %v1385
      %v1462 = vunpack.c.l.b16 %v1386
      %v1463 = vunpack.c.l.b16 %v1387
      %v1464 = vunpack.c.l.b16 %v1388
      %v1465 = vunpack.c.l.b16 %v1389
      %v1466 = vunpack.c.l.b16 %v1390
      %v1467 = vunpack.c.l.b16 %v1391
      %v1468 = vunpack.c.l.b16 %v1392
      %v1469 = vunpack.c.l.b16 %v1393
      %v1470 = vunpack.c.l.b16 %v1394
      %v1471 = vunpack.c.l.b16 %v1395
      %v1472 = vpack.c.b16 %v1437, %v1436
      %v1473 = vpack.c.b16 %v1439, %v1438
      %v1474 = vpack.c.b16 %v1441, %v1440
      %v1475 = vpack.c.b16 %v1443, %v1442
      %v1476 = vpack.c.b16 %v1445, %v1444
      %v1477 = vpack.c.b16 %v1447, %v1446
      %v1478 = vpack.c.b16 %v1449, %v1448
      %v1479 = vpack.c.b16 %v1451, %v1450
      %v1480 = vpack.c.b16 %v1453, %v1452
      %v1481 = vpack.c.b16 %v1455, %v1454
      %v1482 = vpack.c.b16 %v1457, %v1456
      %v1483 = vpack.c.b16 %v1459, %v1458
      %v1484 = vpack.c.b16 %v1461, %v1460
      %v1485 = vpack.c.b16 %v1463, %v1462
      %v1486 = vpack.c.b16 %v1465, %v1464
      %v1487 = vpack.c.b16 %v1467, %v1466
      %v1488 = vpack.c.b16 %v1469, %v1468
      %v1489 = vpack.c.b16 %v1471, %v1470
      %v1509 = vsel %vm1251, %v1240, 0
      %v1512 = vsel %vm1251, %v1242, 0
      %v1515 = vsel %vm1251, %v1244, 0
      %v1518 = vsel %vm1251, %v1246, 0
      %v1521 = vsel %vm1251, %v1248, 0
      %v1524 = vsel %vm1251, %v1250, 0
      %v1527 = vsel %vm1251, %v1249, 0
      %1529 = vmatpush.bf16.msra.mxu0 %v1479
      %1530 = vmatpush.bf16.msra.mxu0 %v1478
      %1531 = vmatpush.bf16.msra.mxu0 %v1477
      %1532 = vmatpush.bf16.msra.mxu0 %v1476
      %1533 = vmatpush.bf16.msra.mxu0 %v1475
      %1534 = vmatpush.bf16.msra.mxu0 %v1474
      %1535 = vmatpush.bf16.msra.mxu0 %v1473
      %1536 = vmatpush.bf16.msra.mxu0 %v1472
      %1537 = vmatmul.bf16.gmra.mxu0 %v1284
      %v1538 = vpop.f32.mrf.mxu0
      %v1539 = vadd.f32 %v1398, %v1538
      %v1540 = vpop.f32.mrf.mxu0
      %v1541 = vadd.f32 %v1398, %v1540
      %1542 = vmatmul.bf16.gmra.mxu0 %v1287
      %v1543 = vpop.f32.mrf.mxu0
      %v1544 = vadd.f32 %v1398, %v1543
      %v1545 = vpop.f32.mrf.mxu0
      %v1546 = vadd.f32 %v1398, %v1545
      %1547 = vmatmul.bf16.gmra.mxu0 %v1290
      %v1548 = vpop.f32.mrf.mxu0
      %v1549 = vadd.f32 %v1398, %v1548
      %v1550 = vpop.f32.mrf.mxu0
      %v1551 = vadd.f32 %v1398, %v1550
      %1552 = vmatmul.bf16.gmra.mxu0 %v1293
      %v1553 = vpop.f32.mrf.mxu0
      %v1554 = vadd.f32 %v1398, %v1553
      %v1555 = vpop.f32.mrf.mxu0
      %v1556 = vadd.f32 %v1398, %v1555
      %1557 = vmatmul.bf16.gmra.mxu0 %v1296
      %v1558 = vpop.f32.mrf.mxu0
      %v1559 = vadd.f32 %v1398, %v1558
      %v1560 = vpop.f32.mrf.mxu0
      %v1561 = vadd.f32 %v1398, %v1560
      %1562 = vmatmul.bf16.gmra.mxu0 %v1299
      %v1563 = vpop.f32.mrf.mxu0
      %v1564 = vadd.f32 %v1398, %v1563
      %v1565 = vpop.f32.mrf.mxu0
      %v1566 = vadd.f32 %v1398, %v1565
      %1567 = vmatmul.bf16.gmra.mxu0 %v1302
      %v1568 = vpop.f32.mrf.mxu0
      %v1569 = vadd.f32 %v1398, %v1568
      %v1570 = vpop.f32.mrf.mxu0
      %1571 = vdwg.mxu0
      %1572 = vmatpush.bf16.msra.mxu0 %v1487
      %1573 = vmatpush.bf16.msra.mxu0 %v1486
      %1574 = vmatpush.bf16.msra.mxu0 %v1485
      %1575 = vmatpush.bf16.msra.mxu0 %v1484
      %1576 = vmatpush.bf16.msra.mxu0 %v1483
      %1577 = vmatpush.bf16.msra.mxu0 %v1482
      %1578 = vmatpush.bf16.msra.mxu0 %v1481
      %1579 = vmatpush.bf16.msra.mxu0 %v1480
      %1580 = vmatmul.bf16.gmra.mxu0 %v1340
      %v1581 = vpop.f32.mrf.mxu0
      %v1582 = vadd.f32 %v1539, %v1581
      %v1583 = vpop.f32.mrf.mxu0
      %v1584 = vadd.f32 %v1541, %v1583
      %1585 = vmatmul.bf16.gmra.mxu0 %v1343
      %v1586 = vpop.f32.mrf.mxu0
      %v1587 = vadd.f32 %v1544, %v1586
      %v1588 = vpop.f32.mrf.mxu0
      %v1589 = vadd.f32 %v1546, %v1588
      %1590 = vmatmul.bf16.gmra.mxu0 %v1346
      %v1591 = vpop.f32.mrf.mxu0
      %v1592 = vadd.f32 %v1549, %v1591
      %v1593 = vpop.f32.mrf.mxu0
      %v1594 = vadd.f32 %v1551, %v1593
      %1595 = vmatmul.bf16.gmra.mxu0 %v1349
      %v1596 = vpop.f32.mrf.mxu0
      %v1597 = vadd.f32 %v1554, %v1596
      %v1598 = vpop.f32.mrf.mxu0
      %v1599 = vadd.f32 %v1556, %v1598
      %1600 = vmatmul.bf16.gmra.mxu0 %v1352
      %v1601 = vpop.f32.mrf.mxu0
      %v1602 = vadd.f32 %v1559, %v1601
      %v1603 = vpop.f32.mrf.mxu0
      %v1604 = vadd.f32 %v1561, %v1603
      %1605 = vmatmul.bf16.gmra.mxu0 %v1355
      %v1606 = vpop.f32.mrf.mxu0
      %v1607 = vadd.f32 %v1564, %v1606
      %v1608 = vpop.f32.mrf.mxu0
      %v1609 = vadd.f32 %v1566, %v1608
      %1610 = vmatmul.bf16.gmra.mxu0 %v1358
      %v1611 = vpop.f32.mrf.mxu0
      %v1612 = vadd.f32 %v1569, %v1611
      %v1613 = vpop.f32.mrf.mxu0
      %1614 = vdwg.mxu0
      %1615 = vmatpush.bf16.msra.mxu0 0
      %1616 = vmatpush.bf16.msra.mxu0 0
      %1617 = vmatpush.bf16.msra.mxu0 0
      %1618 = vmatpush.bf16.msra.mxu0 0
      %1619 = vmatpush.bf16.msra.mxu0 0
      %1620 = vmatpush.bf16.msra.mxu0 0
      %1621 = vmatpush.bf16.msra.mxu0 %v1489
      %1622 = vmatpush.bf16.msra.mxu0 %v1488
      %1623 = vmatmul.bf16.gmra.mxu0 %v1509
      %v1624 = vpop.f32.mrf.mxu0
      %v1625 = vadd.f32 %v1582, %v1624
      %v1626 = vpop.f32.mrf.mxu0
      %v1627 = vadd.f32 %v1584, %v1626
      %1628 = vmatmul.bf16.gmra.mxu0 %v1512
      %v1629 = vpop.f32.mrf.mxu0
      %v1630 = vadd.f32 %v1587, %v1629
      %v1631 = vpop.f32.mrf.mxu0
      %v1632 = vadd.f32 %v1589, %v1631
      %1633 = vmatmul.bf16.gmra.mxu0 %v1515
      %v1634 = vpop.f32.mrf.mxu0
      %v1635 = vadd.f32 %v1592, %v1634
      %v1636 = vpop.f32.mrf.mxu0
      %v1637 = vadd.f32 %v1594, %v1636
      %1638 = vmatmul.bf16.gmra.mxu0 %v1518
      %v1639 = vpop.f32.mrf.mxu0
      %v1640 = vadd.f32 %v1597, %v1639
      %v1641 = vpop.f32.mrf.mxu0
      %v1642 = vadd.f32 %v1599, %v1641
      %1643 = vmatmul.bf16.gmra.mxu0 %v1521
      %v1644 = vpop.f32.mrf.mxu0
      %v1645 = vadd.f32 %v1602, %v1644
      %v1646 = vpop.f32.mrf.mxu0
      %v1647 = vadd.f32 %v1604, %v1646
      %1648 = vmatmul.bf16.gmra.mxu0 %v1524
      %v1649 = vpop.f32.mrf.mxu0
      %v1650 = vadd.f32 %v1607, %v1649
      %v1651 = vpop.f32.mrf.mxu0
      %v1652 = vadd.f32 %v1609, %v1651
      %1653 = vmatmul.bf16.gmra.mxu0 %v1527
      %v1654 = vpop.f32.mrf.mxu0
      %v1655 = vadd.f32 %v1612, %v1654
      %v1656 = vpop.f32.mrf.mxu0
      %1657 = vdwg.mxu0
      %v1658 = vmax.f32 %v1625, 0.0
      %v1659 = vmax.f32 %v1627, 0.0
      %v1660 = vmax.f32 %v1630, 0.0
      %v1661 = vmax.f32 %v1632, 0.0
      %v1662 = vmax.f32 %v1635, 0.0
      %v1663 = vmax.f32 %v1637, 0.0
      %v1664 = vmax.f32 %v1640, 0.0
      %v1665 = vmax.f32 %v1642, 0.0
      %v1666 = vmax.f32 %v1645, 0.0
      %v1667 = vmax.f32 %v1647, 0.0
      %v1668 = vmax.f32 %v1650, 0.0
      %v1669 = vmax.f32 %v1652, 0.0
      %v1670 = vmax.f32 %v1655, 0.0
      %vm1683 = vcmask 1046528
      %v1684 = vrot.slane %v1658, 1
      %v1685 = vrot.slane %v1659, 1
      %v1686 = vsel %vm1683, %v1684, %v1685
      %v1687 = vrot.slane %v1660, 1
      %v1688 = vsel %vm1683, %v1685, %v1687
      %v1689 = vrot.slane %v1661, 1
      %v1690 = vsel %vm1683, %v1687, %v1689
      %v1691 = vrot.slane %v1662, 1
      %v1692 = vsel %vm1683, %v1689, %v1691
      %v1693 = vrot.slane %v1663, 1
      %v1694 = vsel %vm1683, %v1691, %v1693
      %v1695 = vrot.slane %v1664, 1
      %v1696 = vsel %vm1683, %v1693, %v1695
      %v1697 = vrot.slane %v1665, 1
      %v1698 = vsel %vm1683, %v1695, %v1697
      %v1699 = vrot.slane %v1666, 1
      %v1700 = vsel %vm1683, %v1697, %v1699
      %v1701 = vrot.slane %v1667, 1
      %v1702 = vsel %vm1683, %v1699, %v1701
      %v1703 = vrot.slane %v1668, 1
      %v1704 = vsel %vm1683, %v1701, %v1703
      %v1705 = vrot.slane %v1669, 1
      %v1706 = vsel %vm1683, %v1703, %v1705
      %v1719 = vmax.f32 %v1658, %v1686
      %v1720 = vmax.f32 %v1659, %v1688
      %v1721 = vmax.f32 %v1660, %v1690
      %v1722 = vmax.f32 %v1661, %v1692
      %v1723 = vmax.f32 %v1662, %v1694
      %v1724 = vmax.f32 %v1663, %v1696
      %v1725 = vmax.f32 %v1664, %v1698
      %v1726 = vmax.f32 %v1665, %v1700
      %v1727 = vmax.f32 %v1666, %v1702
      %v1728 = vmax.f32 %v1667, %v1704
      %v1729 = vmax.f32 %v1668, %v1706
      %v1730 = vmax.f32 %v1669, %v1705
      %v1732 = vrot.slane %v1670, 1
      %v1733 = vsel %vm1683, %v1705, %v1732
      %v1736 = vmax.f32 %v1669, %v1733
      %v1737 = vmax.f32 %v1670, %v1732
      %vm1750 = vcmask 1045504
      %v1751 = vrot.slane %v1720, 2
      %v1752 = vrot.slane %v1721, 2
      %v1753 = vsel %vm1750, %v1751, %v1752
      %v1754 = vrot.slane %v1722, 2
      %v1755 = vsel %vm1750, %v1752, %v1754
      %v1756 = vrot.slane %v1723, 2
      %v1757 = vsel %vm1750, %v1754, %v1756
      %v1758 = vrot.slane %v1724, 2
      %v1759 = vsel %vm1750, %v1756, %v1758
      %v1760 = vrot.slane %v1725, 2
      %v1761 = vsel %vm1750, %v1758, %v1760
      %v1762 = vrot.slane %v1726, 2
      %v1763 = vsel %vm1750, %v1760, %v1762
      %v1764 = vrot.slane %v1727, 2
      %v1765 = vsel %vm1750, %v1762, %v1764
      %v1766 = vrot.slane %v1728, 2
      %v1767 = vsel %vm1750, %v1764, %v1766
      %v1768 = vrot.slane %v1729, 2
      %v1769 = vsel %vm1750, %v1766, %v1768
      %v1770 = vrot.slane %v1736, 2
      %v1771 = vsel %vm1750, %v1768, %v1770
      %v1772 = vrot.slane %v1737, 2
      %v1773 = vsel %vm1750, %v1770, %v1772
      %v1786 = vmax.f32 %v1719, %v1753
      %v1787 = vmax.f32 %v1720, %v1755
      %v1788 = vmax.f32 %v1721, %v1757
      %v1789 = vmax.f32 %v1722, %v1759
      %v1790 = vmax.f32 %v1723, %v1761
      %v1791 = vmax.f32 %v1724, %v1763
      %v1792 = vmax.f32 %v1725, %v1765
      %v1793 = vmax.f32 %v1726, %v1767
      %v1794 = vmax.f32 %v1727, %v1769
      %v1795 = vmax.f32 %v1728, %v1771
      %v1796 = vmax.f32 %v1729, %v1773
      %v1797 = vmax.f32 %v1730, %v1772
      %1798 = vst.msk [vmem:[#allocation3] sm:$0xff] %vm1267, %v1786
      %1799 = vst.msk [vmem:[#allocation3 + $0x8] sm:$0xff] %vm1267, %v1787
      %1800 = vst.msk [vmem:[#allocation3 + $0x10] sm:$0xff] %vm1267, %v1788
      %1801 = vst.msk [vmem:[#allocation3 + $0x18] sm:$0xff] %vm1267, %v1789
      %1802 = vst.msk [vmem:[#allocation3 + $0x20] sm:$0xff] %vm1267, %v1790
      %1803 = vst.msk [vmem:[#allocation3 + $0x28] sm:$0xff] %vm1267, %v1791
      %1804 = vst.msk [vmem:[#allocation3 + $0x30] sm:$0xff] %vm1267, %v1792
      %1805 = vst.msk [vmem:[#allocation3 + $0x38] sm:$0xff] %vm1267, %v1793
      %1806 = vst.msk [vmem:[#allocation3 + $0x40] sm:$0xff] %vm1267, %v1794
      %1807 = vst.msk [vmem:[#allocation3 + $0x48] sm:$0xff] %vm1267, %v1795
      %1808 = vst.msk [vmem:[#allocation3 + $0x50] sm:$0xff] %vm1267, %v1796
      %1809 = vst.msk [vmem:[#allocation3 + $0x58] sm:$0x1] %vm465, %v1797
      %s1810 = scalar_lea.vmem [#allocation3], 11
      %v1811 = vld [vmem:[%s1810] ss:$2 sm:$0xf]
      %v1812 = vpack.c.bf16 %v1811, %v1811
      %v1814 = vrot.slane %v1812, 5
      %v1815 = vrot.slane %v1814, 4
      %vm1818 = vcmask 519171
      %1819 = vst.msk [vmem:[#allocation4 + $0x4] sm:$0x8] %vm1818, %v1814
      %1820 = vst.msk [vmem:[#allocation4 + $0x8] sm:$0x1] %vm465, %v1815
      %s1821 = scalar_lea.vmem [#allocation3], 31
      %v1822 = vld [vmem:[%s1821] ss:$2 sm:$0xf]
      %v1823 = vpack.c.bf16 %v1822, %v1822
      %v1825 = vrot.slane %v1823, 6
      %vm1827 = vcmask 519170
      %1828 = vst.msk [vmem:[#allocation4 + $0x8] sm:$0xc] %vm1827, %v1825
      %s1829 = scalar_lea.vmem [#allocation3], 51
      %v1830 = vld [vmem:[%s1829] ss:$2 sm:$0xf]
      %v1831 = vpack.c.bf16 %v1830, %v1830
      %v1833 = vrot.slane %v1831, 7
      %vm1835 = vcmask 518145
      %1836 = vst.msk [vmem:[#allocation4 + $0xc] sm:$0x6] %vm1835, %v1833
      %s1837 = scalar_lea.vmem [#allocation3], 71
      %v1838 = vld [vmem:[%s1837] ss:$2 sm:$0xf]
      %v1839 = vpack.c.bf16 %v1838, %v1838
      %vm1840 = vcmask 517120
      %1841 = vst.msk [vmem:[#allocation4 + $0x10] sm:$0x3] %vm1840, %v1839
      %v1842 = vld [vmem:[#allocation4] sm:$0xf]
      %v1843 = vld [vmem:[#allocation4 + $0x4] sm:$0xf]
      %v1844 = vld [vmem:[#allocation4 + $0x8] sm:$0xf]
      %v1845 = vld [vmem:[#allocation4 + $0xc] sm:$0xf]
      %v1846 = vld [vmem:[#allocation4 + $0x10] sm:$0x3]
      %v1847 = vld [vmem:[#allocation4 + $0x10] sm:$0x7]
      %v1848 = vld [vmem:[#allocation4] sm:$0xe]
      %v1849 = vld [vmem:[#allocation4] sm:$0x8]
      %v1850 = vld [vmem:[#allocation4 + $0x10] sm:$0xf]
      %v1851 = vld [vmem:[#allocation4 + $0x14] sm:$0x1]
      %v1852 = vld [vmem:[#allocation4 + $0x14] sm:$0x3]
      %v1853 = vld [vmem:[#allocation4 + $0x4] sm:$0xc]
      %v1854 = vld [vmem:[#allocation4 + $0x14] sm:$0xf]
      %v1855 = vld [vmem:[#allocation4 + $0x18] sm:$0x1]
      %v1856 = vld [vmem:[#allocation4 + $0x4] sm:$0x8]
      %v1862 = vunpack.c.l.b16 %v1842
      %v1863 = vunpack.c.l.b16 %v1843
      %v1864 = vunpack.c.l.b16 %v1844
      %v1865 = vunpack.c.l.b16 %v1845
      %v1866 = vunpack.c.l.b16 %v1846
      %v1867 = vpack.c.b16 %v1863, %v1862
      %v1868 = vpack.c.b16 %v1865, %v1864
      %v1869 = vpack.c.b16 %v1866, %v1866
      %v1871 = vunpack.c.l.b16 %v1847
      %v1872 = vpack.c.b16 %v1871, %v1871
      %v1874 = vshrl.u32 %v1867, 16
      %v1876 = vshll.u32 %v1867, 16
      %v1878 = vrot.slane %v1876, 1
      %v1879 = vor.u32 %v1874, %v1878
      %v1881 = vshll.u32 %v1868, 16
      %v1883 = vrot.slane %v1881, 1
      %v1884 = vsel %vm902, %v1879, %v1883
      %v1885 = vshrl.u32 %v1868, 16
      %v1887 = vor.u32 %v1885, %v1883
      %v1889 = vshll.u32 %v1872, 16
      %v1891 = vrot.slane %v1889, 1
      %v1892 = vsel %vm902, %v1887, %v1891
      %v1893 = vshrl.u32 %v1872, 16
      %v1895 = vor.u32 %v1893, %v1891
      %1896 = vrot.lane.b32.xlu0 %v1884, 64
      %v1897 = vpop.permute.xlu0 %1896
      %1898 = vrot.lane.b32.xlu0 %v1892, 64
      %v1899 = vpop.permute.xlu0 %1898
      %1900 = vrot.lane.b32.xlu0 %v1895, 64
      %v1901 = vpop.permute.xlu0 %1900
      %v1903 = vunpack.c.l.b16 %v1848
      %v1904 = vpack.c.b16 %v1863, %v1903
      %v1905 = vrot.slane %v1904, 1
      %v1906 = vrot.slane %v1868, 1
      %v1907 = vsel %vm975, %v1905, %v1906
      %v1908 = vrot.slane %v1872, 1
      %v1909 = vsel %vm975, %v1906, %v1908
      %v1913 = vunpack.c.l.b16 %v1849
      %v1914 = vunpack.c.l.b16 %v1850
      %v1915 = vunpack.c.l.b16 %v1851
      %v1916 = vpack.c.b16 %v1863, %v1913
      %v1917 = vpack.c.b16 %v1915, %v1914
      %v1918 = vrot.slane %v1916, 3
      %v1919 = vrot.slane %v1868, 3
      %v1920 = vsel %vm1237, %v1918, %v1919
      %v1921 = vrot.slane %v1917, 3
      %v1922 = vsel %vm1237, %v1919, %v1921
      %1923 = vrot.lane.b32.xlu0 %v1920, 64
      %v1924 = vpop.permute.xlu0 %1923
      %1925 = vrot.lane.b32.xlu0 %v1922, 64
      %v1926 = vpop.permute.xlu0 %1925
      %1927 = vrot.lane.b32.xlu0 %v1921, 64
      %v1928 = vpop.permute.xlu0 %1927
      %v1930 = vunpack.c.l.b16 %v1852
      %v1931 = vpack.c.b16 %v1930, %v1914
      %vm1932 = vsmask.f32 4352
      %v1934 = vshrl.u32 %v1916, 16
      %v1936 = vrot.slane %v1934, 3
      %v1937 = vshll.u32 %v1916, 16
      %v1939 = vrot.slane %v1937, 4
      %v1940 = vor.u32 %v1936, %v1939
      %v1941 = vrot.slane %v1885, 3
      %v1942 = vrot.slane %v1881, 4
      %v1943 = vor.u32 %v1941, %v1942
      %v1944 = vsel %vm1932, %v1940, %v1943
      %v1946 = vshrl.u32 %v1931, 16
      %v1948 = vrot.slane %v1946, 3
      %v1949 = vshll.u32 %v1931, 16
      %v1951 = vrot.slane %v1949, 4
      %v1952 = vor.u32 %v1948, %v1951
      %v1953 = vsel %vm1932, %v1943, %v1952
      %v1954 = vpack.c.b16 %v1864, %v1863
      %v1955 = vpack.c.b16 %v1914, %v1865
      %v1956 = vpack.c.b16 %v1930, %v1930
      %1957 = vrot.lane.b32.xlu0 %v1954, 64
      %v1958 = vpop.permute.xlu0 %1957
      %1959 = vrot.lane.b32.xlu0 %v1955, 64
      %v1960 = vpop.permute.xlu0 %1959
      %1961 = vrot.lane.b32.xlu0 %v1956, 64
      %v1962 = vpop.permute.xlu0 %1961
      %v1965 = vunpack.c.l.b16 %v1853
      %v1966 = vunpack.c.l.b16 %v1854
      %v1967 = vpack.c.b16 %v1864, %v1965
      %v1968 = vpack.c.b16 %v1966, %v1966
      %v1969 = vrot.slane %v1967, 2
      %v1970 = vrot.slane %v1955, 2
      %v1971 = vsel %vm1112, %v1969, %v1970
      %v1972 = vrot.slane %v1968, 2
      %v1973 = vsel %vm1112, %v1970, %v1972
      %v1975 = vunpack.c.l.b16 %v1855
      %v1976 = vpack.c.b16 %v1975, %v1966
      %v1978 = vshrl.u32 %v1967, 16
      %v1980 = vrot.slane %v1978, 2
      %v1981 = vshll.u32 %v1967, 16
      %v1983 = vrot.slane %v1981, 3
      %v1984 = vor.u32 %v1980, %v1983
      %v1986 = vshrl.u32 %v1955, 16
      %v1988 = vrot.slane %v1986, 2
      %v1989 = vshll.u32 %v1955, 16
      %v1991 = vrot.slane %v1989, 3
      %v1992 = vor.u32 %v1988, %v1991
      %v1993 = vsel %vm1177, %v1984, %v1992
      %v1995 = vshrl.u32 %v1976, 16
      %v1997 = vrot.slane %v1995, 2
      %v1998 = vshll.u32 %v1976, 16
      %v2000 = vrot.slane %v1998, 3
      %v2001 = vor.u32 %v1997, %v2000
      %v2002 = vsel %vm1177, %v1992, %v2001
      %2003 = vrot.lane.b32.xlu0 %v1993, 64
      %v2004 = vpop.permute.xlu0 %2003
      %2005 = vrot.lane.b32.xlu0 %v2002, 64
      %v2006 = vpop.permute.xlu0 %2005
      %2007 = vrot.lane.b32.xlu0 %v2001, 64
      %v2008 = vpop.permute.xlu0 %2007
      %v2010 = vunpack.c.l.b16 %v1856
      %v2011 = vpack.c.b16 %v1864, %v2010
      %v2012 = vrot.slane %v2011, 3
      %v2013 = vrot.slane %v1955, 3
      %v2014 = vsel %vm1237, %v2012, %v2013
      %v2015 = vrot.slane %v1976, 3
      %v2016 = vsel %vm1237, %v2013, %v2015
      %v2018 = vsel %vm1267, %v1867, %v1897
      %v2021 = vsel %vm1267, %v1868, %v1899
      %v2025 = vsel %vm1267, %v1869, %v1901
      %v2029 = vsel %vm1267, %v1907, %v1924
      %v2033 = vsel %vm1267, %v1909, %v1926
      %v2037 = vsel %vm1267, %v1908, %v1928
      %v2041 = vsel %vm1267, %v1944, %v1958
      %v2045 = vsel %vm1267, %v1953, %v1960
      %v2049 = vsel %vm1267, %v1952, %v1962
      %v2053 = vsel %vm1267, %v1971, %v2004
      %v2057 = vsel %vm1267, %v1973, %v2006
      %v2061 = vsel %vm1267, %v1972, %v2008
      %v2063 = vld [vmem:[%s5] sm:$0xf]
      %v2064 = vld [vmem:[%s5 + $0x4] sm:$0xf]
      %v2065 = vld [vmem:[%s5 + $0x8] sm:$0xf]
      %v2066 = vld [vmem:[%s5 + $0xc] sm:$0xf]
      %v2067 = vld [vmem:[%s5 + $0x10] sm:$0xf]
      %v2068 = vld [vmem:[%s5 + $0x14] sm:$0xf]
      %v2069 = vld [vmem:[%s5 + $0x18] sm:$0xf]
      %v2070 = vld [vmem:[%s5 + $0x1c] sm:$0xf]
      %v2071 = vld [vmem:[%s5 + $0x20] sm:$0xf]
      %v2072 = vld [vmem:[%s5 + $0x24] sm:$0xf]
      %v2073 = vld [vmem:[%s5 + $0x28] sm:$0xf]
      %v2074 = vld [vmem:[%s5 + $0x2c] sm:$0xf]
      %v2075 = vld [vmem:[%s5 + $0x30] sm:$0xf]
      %v2076 = vld [vmem:[%s5 + $0x34] sm:$0xf]
      %v2077 = vld [vmem:[%s5 + $0x38] sm:$0xf]
      %v2078 = vld [vmem:[%s5 + $0x3c] sm:$0xf]
      %v2079 = vld [vmem:[%s5 + $0x40] sm:$0xf]
      %v2080 = vld [vmem:[%s5 + $0x44] sm:$0xf]
      %v2081 = vld [vmem:[%s5 + $0x48] sm:$0xf]
      %v2082 = vld [vmem:[%s5 + $0x4c] sm:$0xf]
      %v2083 = vld [vmem:[%s5 + $0x50] sm:$0xf]
      %v2084 = vld [vmem:[%s5 + $0x54] sm:$0xf]
      %v2085 = vld [vmem:[%s5 + $0x58] sm:$0xf]
      %v2086 = vld [vmem:[%s5 + $0x5c] sm:$0xf]
      %v2087 = vld [vmem:[%s5 + $0x60] sm:$0xf]
      %v2088 = vld [vmem:[%s5 + $0x64] sm:$0xf]
      %v2089 = vld [vmem:[%s5 + $0x68] sm:$0xf]
      %v2090 = vld [vmem:[%s5 + $0x6c] sm:$0xf]
      %v2091 = vld [vmem:[%s5 + $0x70] sm:$0xf]
      %v2092 = vld [vmem:[%s5 + $0x74] sm:$0xf]
      %v2093 = vld [vmem:[%s5 + $0x78] sm:$0xf]
      %v2094 = vld [vmem:[%s5 + $0x7c] sm:$0xf]
      %v2095 = vld [vmem:[%s5 + $0x80] sm:$0xf]
      %v2096 = vld [vmem:[%s5 + $0x84] sm:$0xf]
      %v2097 = vld [vmem:[%s5 + $0x88] sm:$0xf]
      %v2098 = vld [vmem:[%s5 + $0x8c] sm:$0xf]
      %v2099 = vld [vmem:[%s5 + $0x90] sm:$0xf]
      %v2100 = vld [vmem:[%s5 + $0x94] sm:$0xf]
      %v2101 = vld [vmem:[%s5 + $0x98] sm:$0xf]
      %v2102 = vld [vmem:[%s5 + $0x9c] sm:$0xf]
      %v2103 = vld [vmem:[%s5 + $0xa0] sm:$0xf]
      %v2104 = vld [vmem:[%s5 + $0xa4] sm:$0xf]
      %v2105 = vld [vmem:[%s5 + $0xa8] sm:$0xf]
      %v2106 = vld [vmem:[%s5 + $0xac] sm:$0xf]
      %v2107 = vld [vmem:[%s5 + $0xb0] sm:$0xf]
      %v2108 = vld [vmem:[%s5 + $0xb4] sm:$0xf]
      %v2109 = vld [vmem:[%s5 + $0xb8] sm:$0xf]
      %v2110 = vld [vmem:[%s5 + $0xbc] sm:$0xf]
      %v2111 = vld [vmem:[%s5 + $0xc0] sm:$0xf]
      %v2112 = vld [vmem:[%s5 + $0xc4] sm:$0xf]
      %v2113 = vld [vmem:[%s5 + $0xc8] sm:$0xf]
      %v2114 = vld [vmem:[%s5 + $0xcc] sm:$0xf]
      %v2115 = vld [vmem:[%s5 + $0xd0] sm:$0xf]
      %v2116 = vld [vmem:[%s5 + $0xd4] sm:$0xf]
      %v2117 = vld [vmem:[%s5 + $0xd8] sm:$0xf]
      %v2118 = vld [vmem:[%s5 + $0xdc] sm:$0xf]
      %v2119 = vld [vmem:[%s5 + $0xe0] sm:$0xf]
      %v2120 = vld [vmem:[%s5 + $0xe4] sm:$0xf]
      %v2121 = vld [vmem:[%s5 + $0xe8] sm:$0xf]
      %v2122 = vld [vmem:[%s5 + $0xec] sm:$0xf]
      %v2123 = vld [vmem:[%s5 + $0xf0] sm:$0xf]
      %v2124 = vld [vmem:[%s5 + $0xf4] sm:$0xf]
      %v2125 = vld [vmem:[%s5 + $0xf8] sm:$0xf]
      %v2126 = vld [vmem:[%s5 + $0xfc] sm:$0xf]
      %v2127 = vld [vmem:[%s5 + $0x100] sm:$0xf]
      %v2128 = vld [vmem:[%s5 + $0x104] sm:$0xf]
      %v2129 = vld [vmem:[%s5 + $0x108] sm:$0xf]
      %v2130 = vld [vmem:[%s5 + $0x10c] sm:$0xf]
      %v2131 = vld [vmem:[%s5 + $0x110] sm:$0xf]
      %v2132 = vld [vmem:[%s5 + $0x114] sm:$0xf]
      %v2133 = vld [vmem:[%s5 + $0x118] sm:$0xf]
      %v2134 = vld [vmem:[%s5 + $0x11c] sm:$0xf]
      %v2135 = vld [vmem:[%s6] sm:$0x1]
      %v2137 = vperm.slane %v2135, 0
      %v2211 = vunpack.c.l.b16 %v2063
      %v2212 = vunpack.c.l.b16 %v2064
      %v2213 = vunpack.c.l.b16 %v2065
      %v2214 = vunpack.c.l.b16 %v2066
      %v2215 = vunpack.c.l.b16 %v2067
      %v2216 = vunpack.c.l.b16 %v2068
      %v2217 = vunpack.c.l.b16 %v2069
      %v2218 = vunpack.c.l.b16 %v2070
      %v2219 = vunpack.c.l.b16 %v2071
      %v2220 = vunpack.c.l.b16 %v2072
      %v2221 = vunpack.c.l.b16 %v2073
      %v2222 = vunpack.c.l.b16 %v2074
      %v2223 = vunpack.c.l.b16 %v2075
      %v2224 = vunpack.c.l.b16 %v2076
      %v2225 = vunpack.c.l.b16 %v2077
      %v2226 = vunpack.c.l.b16 %v2078
      %v2227 = vunpack.c.l.b16 %v2079
      %v2228 = vunpack.c.l.b16 %v2080
      %v2229 = vunpack.c.l.b16 %v2081
      %v2230 = vunpack.c.l.b16 %v2082
      %v2231 = vunpack.c.l.b16 %v2083
      %v2232 = vunpack.c.l.b16 %v2084
      %v2233 = vunpack.c.l.b16 %v2085
      %v2234 = vunpack.c.l.b16 %v2086
      %v2235 = vunpack.c.l.b16 %v2087
      %v2236 = vunpack.c.l.b16 %v2088
      %v2237 = vunpack.c.l.b16 %v2089
      %v2238 = vunpack.c.l.b16 %v2090
      %v2239 = vunpack.c.l.b16 %v2091
      %v2240 = vunpack.c.l.b16 %v2092
      %v2241 = vunpack.c.l.b16 %v2093
      %v2242 = vunpack.c.l.b16 %v2094
      %v2243 = vunpack.c.l.b16 %v2095
      %v2244 = vunpack.c.l.b16 %v2096
      %v2245 = vunpack.c.l.b16 %v2097
      %v2246 = vunpack.c.l.b16 %v2098
      %v2247 = vunpack.c.l.b16 %v2099
      %v2248 = vunpack.c.l.b16 %v2100
      %v2249 = vunpack.c.l.b16 %v2101
      %v2250 = vunpack.c.l.b16 %v2102
      %v2251 = vunpack.c.l.b16 %v2103
      %v2252 = vunpack.c.l.b16 %v2104
      %v2253 = vunpack.c.l.b16 %v2105
      %v2254 = vunpack.c.l.b16 %v2106
      %v2255 = vunpack.c.l.b16 %v2107
      %v2256 = vunpack.c.l.b16 %v2108
      %v2257 = vunpack.c.l.b16 %v2109
      %v2258 = vunpack.c.l.b16 %v2110
      %v2259 = vunpack.c.l.b16 %v2111
      %v2260 = vunpack.c.l.b16 %v2112
      %v2261 = vunpack.c.l.b16 %v2113
      %v2262 = vunpack.c.l.b16 %v2114
      %v2263 = vunpack.c.l.b16 %v2115
      %v2264 = vunpack.c.l.b16 %v2116
      %v2265 = vunpack.c.l.b16 %v2117
      %v2266 = vunpack.c.l.b16 %v2118
      %v2267 = vunpack.c.l.b16 %v2119
      %v2268 = vunpack.c.l.b16 %v2120
      %v2269 = vunpack.c.l.b16 %v2121
      %v2270 = vunpack.c.l.b16 %v2122
      %v2271 = vunpack.c.l.b16 %v2123
      %v2272 = vunpack.c.l.b16 %v2124
      %v2273 = vunpack.c.l.b16 %v2125
      %v2274 = vunpack.c.l.b16 %v2126
      %v2275 = vunpack.c.l.b16 %v2127
      %v2276 = vunpack.c.l.b16 %v2128
      %v2277 = vunpack.c.l.b16 %v2129
      %v2278 = vunpack.c.l.b16 %v2130
      %v2279 = vunpack.c.l.b16 %v2131
      %v2280 = vunpack.c.l.b16 %v2132
      %v2281 = vunpack.c.l.b16 %v2133
      %v2282 = vunpack.c.l.b16 %v2134
      %v2283 = vpack.c.b16 %v2212, %v2211
      %v2284 = vpack.c.b16 %v2214, %v2213
      %v2285 = vpack.c.b16 %v2216, %v2215
      %v2286 = vpack.c.b16 %v2218, %v2217
      %v2287 = vpack.c.b16 %v2220, %v2219
      %v2288 = vpack.c.b16 %v2222, %v2221
      %v2289 = vpack.c.b16 %v2224, %v2223
      %v2290 = vpack.c.b16 %v2226, %v2225
      %v2291 = vpack.c.b16 %v2228, %v2227
      %v2292 = vpack.c.b16 %v2230, %v2229
      %v2293 = vpack.c.b16 %v2232, %v2231
      %v2294 = vpack.c.b16 %v2234, %v2233
      %v2295 = vpack.c.b16 %v2236, %v2235
      %v2296 = vpack.c.b16 %v2238, %v2237
      %v2297 = vpack.c.b16 %v2240, %v2239
      %v2298 = vpack.c.b16 %v2242, %v2241
      %v2299 = vpack.c.b16 %v2244, %v2243
      %v2300 = vpack.c.b16 %v2246, %v2245
      %v2301 = vpack.c.b16 %v2248, %v2247
      %v2302 = vpack.c.b16 %v2250, %v2249
      %v2303 = vpack.c.b16 %v2252, %v2251
      %v2304 = vpack.c.b16 %v2254, %v2253
      %v2305 = vpack.c.b16 %v2256, %v2255
      %v2306 = vpack.c.b16 %v2258, %v2257
      %v2307 = vpack.c.b16 %v2260, %v2259
      %v2308 = vpack.c.b16 %v2262, %v2261
      %v2309 = vpack.c.b16 %v2264, %v2263
      %v2310 = vpack.c.b16 %v2266, %v2265
      %v2311 = vpack.c.b16 %v2268, %v2267
      %v2312 = vpack.c.b16 %v2270, %v2269
      %v2313 = vpack.c.b16 %v2272, %v2271
      %v2314 = vpack.c.b16 %v2274, %v2273
      %v2315 = vpack.c.b16 %v2276, %v2275
      %v2316 = vpack.c.b16 %v2278, %v2277
      %v2317 = vpack.c.b16 %v2280, %v2279
      %v2318 = vpack.c.b16 %v2282, %v2281
      %v2356 = vsel %vm1267, %v2014, 0
      %v2359 = vsel %vm1267, %v2016, 0
      %v2362 = vsel %vm1267, %v2015, 0
      %2364 = vmatpush.bf16.msra.mxu0 %v2290
      %2365 = vmatpush.bf16.msra.mxu0 %v2289
      %2366 = vmatpush.bf16.msra.mxu0 %v2288
      %2367 = vmatpush.bf16.msra.mxu0 %v2287
      %2368 = vmatpush.bf16.msra.mxu0 %v2286
      %2369 = vmatpush.bf16.msra.mxu0 %v2285
      %2370 = vmatpush.bf16.msra.mxu0 %v2284
      %2371 = vmatpush.bf16.msra.mxu0 %v2283
      %2372 = vmatmul.bf16.gmra.mxu0 %v2018
      %v2373 = vpop.f32.mrf.mxu0
      %v2374 = vadd.f32 %v2137, %v2373
      %v2375 = vpop.f32.mrf.mxu0
      %v2376 = vadd.f32 %v2137, %v2375
      %2377 = vmatmul.bf16.gmra.mxu0 %v2021
      %v2378 = vpop.f32.mrf.mxu0
      %v2379 = vadd.f32 %v2137, %v2378
      %v2380 = vpop.f32.mrf.mxu0
      %v2381 = vadd.f32 %v2137, %v2380
      %2382 = vmatmul.bf16.gmra.mxu0 %v2025
      %v2383 = vpop.f32.mrf.mxu0
      %v2384 = vadd.f32 %v2137, %v2383
      %v2385 = vpop.f32.mrf.mxu0
      %2386 = vdwg.mxu0
      %2387 = vmatpush.bf16.msra.mxu0 %v2298
      %2388 = vmatpush.bf16.msra.mxu0 %v2297
      %2389 = vmatpush.bf16.msra.mxu0 %v2296
      %2390 = vmatpush.bf16.msra.mxu0 %v2295
      %2391 = vmatpush.bf16.msra.mxu0 %v2294
      %2392 = vmatpush.bf16.msra.mxu0 %v2293
      %2393 = vmatpush.bf16.msra.mxu0 %v2292
      %2394 = vmatpush.bf16.msra.mxu0 %v2291
      %2395 = vmatmul.bf16.gmra.mxu0 %v2029
      %v2396 = vpop.f32.mrf.mxu0
      %v2397 = vadd.f32 %v2374, %v2396
      %v2398 = vpop.f32.mrf.mxu0
      %v2399 = vadd.f32 %v2376, %v2398
      %2400 = vmatmul.bf16.gmra.mxu0 %v2033
      %v2401 = vpop.f32.mrf.mxu0
      %v2402 = vadd.f32 %v2379, %v2401
      %v2403 = vpop.f32.mrf.mxu0
      %v2404 = vadd.f32 %v2381, %v2403
      %2405 = vmatmul.bf16.gmra.mxu0 %v2037
      %v2406 = vpop.f32.mrf.mxu0
      %v2407 = vadd.f32 %v2384, %v2406
      %v2408 = vpop.f32.mrf.mxu0
      %2409 = vdwg.mxu0
      %2410 = vmatpush.bf16.msra.mxu0 %v2306
      %2411 = vmatpush.bf16.msra.mxu0 %v2305
      %2412 = vmatpush.bf16.msra.mxu0 %v2304
      %2413 = vmatpush.bf16.msra.mxu0 %v2303
      %2414 = vmatpush.bf16.msra.mxu0 %v2302
      %2415 = vmatpush.bf16.msra.mxu0 %v2301
      %2416 = vmatpush.bf16.msra.mxu0 %v2300
      %2417 = vmatpush.bf16.msra.mxu0 %v2299
      %2418 = vmatmul.bf16.gmra.mxu0 %v2041
      %v2419 = vpop.f32.mrf.mxu0
      %v2420 = vadd.f32 %v2397, %v2419
      %v2421 = vpop.f32.mrf.mxu0
      %v2422 = vadd.f32 %v2399, %v2421
      %2423 = vmatmul.bf16.gmra.mxu0 %v2045
      %v2424 = vpop.f32.mrf.mxu0
      %v2425 = vadd.f32 %v2402, %v2424
      %v2426 = vpop.f32.mrf.mxu0
      %v2427 = vadd.f32 %v2404, %v2426
      %2428 = vmatmul.bf16.gmra.mxu0 %v2049
      %v2429 = vpop.f32.mrf.mxu0
      %v2430 = vadd.f32 %v2407, %v2429
      %v2431 = vpop.f32.mrf.mxu0
      %2432 = vdwg.mxu0
      %2433 = vmatpush.bf16.msra.mxu0 %v2314
      %2434 = vmatpush.bf16.msra.mxu0 %v2313
      %2435 = vmatpush.bf16.msra.mxu0 %v2312
      %2436 = vmatpush.bf16.msra.mxu0 %v2311
      %2437 = vmatpush.bf16.msra.mxu0 %v2310
      %2438 = vmatpush.bf16.msra.mxu0 %v2309
      %2439 = vmatpush.bf16.msra.mxu0 %v2308
      %2440 = vmatpush.bf16.msra.mxu0 %v2307
      %2441 = vmatmul.bf16.gmra.mxu0 %v2053
      %v2442 = vpop.f32.mrf.mxu0
      %v2443 = vadd.f32 %v2420, %v2442
      %v2444 = vpop.f32.mrf.mxu0
      %v2445 = vadd.f32 %v2422, %v2444
      %2446 = vmatmul.bf16.gmra.mxu0 %v2057
      %v2447 = vpop.f32.mrf.mxu0
      %v2448 = vadd.f32 %v2425, %v2447
      %v2449 = vpop.f32.mrf.mxu0
      %v2450 = vadd.f32 %v2427, %v2449
      %2451 = vmatmul.bf16.gmra.mxu0 %v2061
      %v2452 = vpop.f32.mrf.mxu0
      %v2453 = vadd.f32 %v2430, %v2452
      %v2454 = vpop.f32.mrf.mxu0
      %2455 = vdwg.mxu0
      %2456 = vmatpush.bf16.msra.mxu0 0
      %2457 = vmatpush.bf16.msra.mxu0 0
      %2458 = vmatpush.bf16.msra.mxu0 0
      %2459 = vmatpush.bf16.msra.mxu0 0
      %2460 = vmatpush.bf16.msra.mxu0 %v2318
      %2461 = vmatpush.bf16.msra.mxu0 %v2317
      %2462 = vmatpush.bf16.msra.mxu0 %v2316
      %2463 = vmatpush.bf16.msra.mxu0 %v2315
      %2464 = vmatmul.bf16.gmra.mxu0 %v2356
      %v2465 = vpop.f32.mrf.mxu0
      %v2466 = vadd.f32 %v2443, %v2465
      %v2467 = vpop.f32.mrf.mxu0
      %v2468 = vadd.f32 %v2445, %v2467
      %2469 = vmatmul.bf16.gmra.mxu0 %v2359
      %v2470 = vpop.f32.mrf.mxu0
      %v2471 = vadd.f32 %v2448, %v2470
      %v2472 = vpop.f32.mrf.mxu0
      %v2473 = vadd.f32 %v2450, %v2472
      %2474 = vmatmul.bf16.gmra.mxu0 %v2362
      %v2475 = vpop.f32.mrf.mxu0
      %v2476 = vadd.f32 %v2453, %v2475
      %v2477 = vpop.f32.mrf.mxu0
      %2478 = vdwg.mxu0
      %v2479 = vmax.f32 %v2466, 0.0
      %v2480 = vmax.f32 %v2468, 0.0
      %v2481 = vmax.f32 %v2471, 0.0
      %v2482 = vmax.f32 %v2473, 0.0
      %v2483 = vmax.f32 %v2476, 0.0
      %v2488 = vrot.slane %v2479, 1
      %v2489 = vrot.slane %v2480, 1
      %v2490 = vsel %vm1683, %v2488, %v2489
      %v2491 = vrot.slane %v2481, 1
      %v2492 = vsel %vm1683, %v2489, %v2491
      %v2493 = vrot.slane %v2482, 1
      %v2494 = vsel %vm1683, %v2491, %v2493
      %v2499 = vmax.f32 %v2479, %v2490
      %v2500 = vmax.f32 %v2480, %v2492
      %v2501 = vmax.f32 %v2481, %v2494
      %v2502 = vmax.f32 %v2482, %v2493
      %v2504 = vrot.slane %v2483, 1
      %v2505 = vsel %vm1683, %v2493, %v2504
      %v2508 = vmax.f32 %v2482, %v2505
      %v2509 = vmax.f32 %v2483, %v2504
      %vm2515 = vcmask 1041408
      %v2516 = vrot.slane %v2499, 6
      %v2517 = vrot.slane %v2500, 6
      %v2518 = vsel %vm2515, %v2516, %v2517
      %v2519 = vrot.slane %v2501, 6
      %v2520 = vsel %vm2515, %v2517, %v2519
      %v2521 = vrot.slane %v2508, 6
      %v2522 = vsel %vm2515, %v2519, %v2521
      %v2523 = vrot.slane %v2509, 6
      %v2524 = vsel %vm2515, %v2521, %v2523
      %v2529 = vmax.f32 %v2499, %v2518
      %v2530 = vmax.f32 %v2500, %v2520
      %v2531 = vmax.f32 %v2501, %v2522
      %v2532 = vmax.f32 %v2502, %v2524
      %2533 = vst [vmem:[#allocation5] sm:$0xff] %v2529
      %2534 = vst [vmem:[#allocation5 + $0x8] sm:$0xff] %v2530
      %2535 = vst [vmem:[#allocation5 + $0x10] sm:$0xff] %v2531
      %2536 = vst [vmem:[#allocation5 + $0x18] sm:$0x1f] %v2532
      %s2537 = scalar_lea.vmem [#allocation5], 7
      %v2538 = vld [vmem:[%s2537] ss:$2 sm:$0x3]
      %s2539 = scalar_lea.vmem [#allocation5], 19
      %v2540 = vld [vmem:[%s2539] ss:$2 sm:$0x3]
      %v2542 = vrot.slane %v2540, 6
      %v2544 = vsel %vm2515, %v2538, %v2542
      %v2545 = vpack.c.bf16 %v2544, %v2544
      %v2546 = vld [vmem:[%s7] sm:$0xff]
      %v2547 = vld [vmem:[%s7 + $0x8] sm:$0xff]
      %v2548 = vld [vmem:[%s7 + $0x10] sm:$0xff]
      %v2549 = vld [vmem:[%s7 + $0x18] sm:$0xff]
      %v2550 = vld [vmem:[%s7 + $0x20] sm:$0xff]
      %v2551 = vld [vmem:[%s7 + $0x28] sm:$0xff]
      %v2552 = vld [vmem:[%s7 + $0x30] sm:$0xff]
      %v2553 = vld [vmem:[%s7 + $0x38] sm:$0xff]
      %v2554 = vld [vmem:[%s7 + $0x40] sm:$0xff]
      %v2555 = vld [vmem:[%s7 + $0x48] sm:$0xff]
      %v2556 = vld [vmem:[%s7 + $0x50] sm:$0xff]
      %v2557 = vld [vmem:[%s7 + $0x58] sm:$0xff]
      %v2558 = vld [vmem:[%s7 + $0x60] sm:$0xff]
      %v2559 = vld [vmem:[%s7 + $0x68] sm:$0xff]
      %v2560 = vld [vmem:[%s7 + $0x70] sm:$0xff]
      %v2561 = vld [vmem:[%s7 + $0x78] sm:$0xff]
      %v2562 = vld [vmem:[%s8] sm:$0x3]
      %v2564 = vperm.slane %v2562, 0
      %v2565 = vperm.slane %v2562, 1
      %v2584 = vunpack.c.l.b16 %v2546
      %v2585 = vunpack.c.h.b16 %v2546
      %v2586 = vunpack.c.l.b16 %v2547
      %v2587 = vunpack.c.h.b16 %v2547
      %v2588 = vunpack.c.l.b16 %v2548
      %v2589 = vunpack.c.h.b16 %v2548
      %v2590 = vunpack.c.l.b16 %v2549
      %v2591 = vunpack.c.h.b16 %v2549
      %v2592 = vunpack.c.l.b16 %v2550
      %v2593 = vunpack.c.h.b16 %v2550
      %v2594 = vunpack.c.l.b16 %v2551
      %v2595 = vunpack.c.h.b16 %v2551
      %v2596 = vunpack.c.l.b16 %v2552
      %v2597 = vunpack.c.h.b16 %v2552
      %v2598 = vunpack.c.l.b16 %v2553
      %v2599 = vunpack.c.h.b16 %v2553
      %v2600 = vunpack.c.l.b16 %v2554
      %v2601 = vunpack.c.h.b16 %v2554
      %v2602 = vunpack.c.l.b16 %v2555
      %v2603 = vunpack.c.h.b16 %v2555
      %v2604 = vunpack.c.l.b16 %v2556
      %v2605 = vunpack.c.h.b16 %v2556
      %v2606 = vunpack.c.l.b16 %v2557
      %v2607 = vunpack.c.h.b16 %v2557
      %v2608 = vunpack.c.l.b16 %v2558
      %v2609 = vunpack.c.h.b16 %v2558
      %v2610 = vunpack.c.l.b16 %v2559
      %v2611 = vunpack.c.h.b16 %v2559
      %v2612 = vunpack.c.l.b16 %v2560
      %v2613 = vunpack.c.h.b16 %v2560
      %v2614 = vunpack.c.l.b16 %v2561
      %v2615 = vunpack.c.h.b16 %v2561
      %v2616 = vpack.c.b16 %v2586, %v2584
      %v2617 = vpack.c.b16 %v2587, %v2585
      %v2618 = vpack.c.b16 %v2590, %v2588
      %v2619 = vpack.c.b16 %v2591, %v2589
      %v2620 = vpack.c.b16 %v2594, %v2592
      %v2621 = vpack.c.b16 %v2595, %v2593
      %v2622 = vpack.c.b16 %v2598, %v2596
      %v2623 = vpack.c.b16 %v2599, %v2597
      %v2624 = vpack.c.b16 %v2602, %v2600
      %v2625 = vpack.c.b16 %v2603, %v2601
      %v2626 = vpack.c.b16 %v2606, %v2604
      %v2627 = vpack.c.b16 %v2607, %v2605
      %v2628 = vpack.c.b16 %v2610, %v2608
      %v2629 = vpack.c.b16 %v2611, %v2609
      %v2630 = vpack.c.b16 %v2614, %v2612
      %v2631 = vpack.c.b16 %v2615, %v2613
      %2648 = vmatpush.bf16.msra.mxu0 %v2630
      %2649 = vmatpush.bf16.msra.mxu0 %v2628
      %2650 = vmatpush.bf16.msra.mxu0 %v2626
      %2651 = vmatpush.bf16.msra.mxu0 %v2624
      %2652 = vmatpush.bf16.msra.mxu0 %v2622
      %2653 = vmatpush.bf16.msra.mxu0 %v2620
      %2654 = vmatpush.bf16.msra.mxu0 %v2618
      %2655 = vmatpush.bf16.msra.mxu0 %v2616
      %2656 = vmatmul.bf16.gmra.mxu0 %v2545
      %v2657 = vpop.f32.mrf.mxu0
      %v2658 = vadd.f32 %v2564, %v2657
      %v2659 = vpop.f32.mrf.mxu0
      %2660 = vdwg.mxu0
      %2661 = vmatpush.bf16.msra.mxu0 %v2631
      %2662 = vmatpush.bf16.msra.mxu0 %v2629
      %2663 = vmatpush.bf16.msra.mxu0 %v2627
      %2664 = vmatpush.bf16.msra.mxu0 %v2625
      %2665 = vmatpush.bf16.msra.mxu0 %v2623
      %2666 = vmatpush.bf16.msra.mxu0 %v2621
      %2667 = vmatpush.bf16.msra.mxu0 %v2619
      %2668 = vmatpush.bf16.msra.mxu0 %v2617
      %2669 = vmatmul.bf16.gmra.mxu0 %v2545
      %v2670 = vpop.f32.mrf.mxu0
      %v2671 = vadd.f32 %v2565, %v2670
      %v2672 = vpop.f32.mrf.mxu0
      %2673 = vdwg.mxu0
      %v2674 = vmax.f32 %v2658, 0.0
      %v2675 = vmax.f32 %v2671, 0.0
      %v2676 = vpack.c.bf16 %v2674, %v2674
      %v2677 = vpack.c.bf16 %v2675, %v2675
      %v2678 = vld [vmem:[%s9] sm:$0xff]
      %v2679 = vld [vmem:[%s9 + $0x8] sm:$0xff]
      %v2680 = vld [vmem:[%s9 + $0x10] sm:$0xff]
      %v2681 = vld [vmem:[%s9 + $0x18] sm:$0xff]
      %v2682 = vld [vmem:[%s9 + $0x20] sm:$0xff]
      %v2683 = vld [vmem:[%s9 + $0x28] sm:$0xff]
      %v2684 = vld [vmem:[%s9 + $0x30] sm:$0xff]
      %v2685 = vld [vmem:[%s9 + $0x38] sm:$0xff]
      %v2686 = vld [vmem:[%s9 + $0x40] sm:$0xff]
      %v2687 = vld [vmem:[%s9 + $0x48] sm:$0xff]
      %v2688 = vld [vmem:[%s9 + $0x50] sm:$0xff]
      %v2689 = vld [vmem:[%s9 + $0x58] sm:$0xff]
      %v2690 = vld [vmem:[%s9 + $0x60] sm:$0xff]
      %v2691 = vld [vmem:[%s9 + $0x68] sm:$0xff]
      %v2692 = vld [vmem:[%s9 + $0x70] sm:$0xff]
      %v2693 = vld [vmem:[%s9 + $0x78] sm:$0xff]
      %v2694 = vld [vmem:[%s9 + $0x80] sm:$0xff]
      %v2695 = vld [vmem:[%s9 + $0x88] sm:$0xff]
      %v2696 = vld [vmem:[%s9 + $0x90] sm:$0xff]
      %v2697 = vld [vmem:[%s9 + $0x98] sm:$0xff]
      %v2698 = vld [vmem:[%s9 + $0xa0] sm:$0xff]
      %v2699 = vld [vmem:[%s9 + $0xa8] sm:$0xff]
      %v2700 = vld [vmem:[%s9 + $0xb0] sm:$0xff]
      %v2701 = vld [vmem:[%s9 + $0xb8] sm:$0xff]
      %v2702 = vld [vmem:[%s9 + $0xc0] sm:$0xff]
      %v2703 = vld [vmem:[%s9 + $0xc8] sm:$0xff]
      %v2704 = vld [vmem:[%s9 + $0xd0] sm:$0xff]
      %v2705 = vld [vmem:[%s9 + $0xd8] sm:$0xff]
      %v2706 = vld [vmem:[%s9 + $0xe0] sm:$0xff]
      %v2707 = vld [vmem:[%s9 + $0xe8] sm:$0xff]
      %v2708 = vld [vmem:[%s9 + $0xf0] sm:$0xff]
      %v2709 = vld [vmem:[%s9 + $0xf8] sm:$0xff]
      %v2710 = vld [vmem:[%s9 + $0x100] sm:$0xff]
      %v2711 = vld [vmem:[%s9 + $0x108] sm:$0xff]
      %v2712 = vld [vmem:[%s9 + $0x110] sm:$0xff]
      %v2713 = vld [vmem:[%s9 + $0x118] sm:$0xff]
      %v2714 = vld [vmem:[%s9 + $0x120] sm:$0xff]
      %v2715 = vld [vmem:[%s9 + $0x128] sm:$0xff]
      %v2716 = vld [vmem:[%s9 + $0x130] sm:$0xff]
      %v2717 = vld [vmem:[%s9 + $0x138] sm:$0xff]
      %v2718 = vld [vmem:[%s9 + $0x140] sm:$0xff]
      %v2719 = vld [vmem:[%s9 + $0x148] sm:$0xff]
      %v2720 = vld [vmem:[%s9 + $0x150] sm:$0xff]
      %v2721 = vld [vmem:[%s9 + $0x158] sm:$0xff]
      %v2722 = vld [vmem:[%s9 + $0x160] sm:$0xff]
      %v2723 = vld [vmem:[%s9 + $0x168] sm:$0xff]
      %v2724 = vld [vmem:[%s9 + $0x170] sm:$0xff]
      %v2725 = vld [vmem:[%s9 + $0x178] sm:$0xff]
      %v2726 = vld [vmem:[%s9 + $0x180] sm:$0xff]
      %v2727 = vld [vmem:[%s9 + $0x188] sm:$0xff]
      %v2728 = vld [vmem:[%s9 + $0x190] sm:$0xff]
      %v2729 = vld [vmem:[%s9 + $0x198] sm:$0xff]
      %v2730 = vld [vmem:[%s9 + $0x1a0] sm:$0xff]
      %v2731 = vld [vmem:[%s9 + $0x1a8] sm:$0xff]
      %v2732 = vld [vmem:[%s9 + $0x1b0] sm:$0xff]
      %v2733 = vld [vmem:[%s9 + $0x1b8] sm:$0xff]
      %v2734 = vld [vmem:[%s9 + $0x1c0] sm:$0xff]
      %v2735 = vld [vmem:[%s9 + $0x1c8] sm:$0xff]
      %v2736 = vld [vmem:[%s9 + $0x1d0] sm:$0xff]
      %v2737 = vld [vmem:[%s9 + $0x1d8] sm:$0xff]
      %v2738 = vld [vmem:[%s9 + $0x1e0] sm:$0xff]
      %v2739 = vld [vmem:[%s9 + $0x1e8] sm:$0xff]
      %v2740 = vld [vmem:[%s9 + $0x1f0] sm:$0xff]
      %v2741 = vld [vmem:[%s9 + $0x1f8] sm:$0xff]
      %v2742 = vld [vmem:[%s10] sm:$0xf]
      %v2744 = vperm.slane %v2742, 0
      %v2745 = vperm.slane %v2742, 1
      %v2746 = vperm.slane %v2742, 2
      %v2747 = vperm.slane %v2742, 3
      %v2816 = vunpack.c.l.b16 %v2678
      %v2817 = vunpack.c.h.b16 %v2678
      %v2818 = vunpack.c.l.b16 %v2679
      %v2819 = vunpack.c.h.b16 %v2679
      %v2820 = vunpack.c.l.b16 %v2680
      %v2821 = vunpack.c.h.b16 %v2680
      %v2822 = vunpack.c.l.b16 %v2681
      %v2823 = vunpack.c.h.b16 %v2681
      %v2824 = vunpack.c.l.b16 %v2682
      %v2825 = vunpack.c.h.b16 %v2682
      %v2826 = vunpack.c.l.b16 %v2683
      %v2827 = vunpack.c.h.b16 %v2683
      %v2828 = vunpack.c.l.b16 %v2684
      %v2829 = vunpack.c.h.b16 %v2684
      %v2830 = vunpack.c.l.b16 %v2685
      %v2831 = vunpack.c.h.b16 %v2685
      %v2832 = vunpack.c.l.b16 %v2686
      %v2833 = vunpack.c.h.b16 %v2686
      %v2834 = vunpack.c.l.b16 %v2687
      %v2835 = vunpack.c.h.b16 %v2687
      %v2836 = vunpack.c.l.b16 %v2688
      %v2837 = vunpack.c.h.b16 %v2688
      %v2838 = vunpack.c.l.b16 %v2689
      %v2839 = vunpack.c.h.b16 %v2689
      %v2840 = vunpack.c.l.b16 %v2690
      %v2841 = vunpack.c.h.b16 %v2690
      %v2842 = vunpack.c.l.b16 %v2691
      %v2843 = vunpack.c.h.b16 %v2691
      %v2844 = vunpack.c.l.b16 %v2692
      %v2845 = vunpack.c.h.b16 %v2692
      %v2846 = vunpack.c.l.b16 %v2693
      %v2847 = vunpack.c.h.b16 %v2693
      %v2848 = vunpack.c.l.b16 %v2694
      %v2849 = vunpack.c.h.b16 %v2694
      %v2850 = vunpack.c.l.b16 %v2695
      %v2851 = vunpack.c.h.b16 %v2695
      %v2852 = vunpack.c.l.b16 %v2696
      %v2853 = vunpack.c.h.b16 %v2696
      %v2854 = vunpack.c.l.b16 %v2697
      %v2855 = vunpack.c.h.b16 %v2697
      %v2856 = vunpack.c.l.b16 %v2698
      %v2857 = vunpack.c.h.b16 %v2698
      %v2858 = vunpack.c.l.b16 %v2699
      %v2859 = vunpack.c.h.b16 %v2699
      %v2860 = vunpack.c.l.b16 %v2700
      %v2861 = vunpack.c.h.b16 %v2700
      %v2862 = vunpack.c.l.b16 %v2701
      %v2863 = vunpack.c.h.b16 %v2701
      %v2864 = vunpack.c.l.b16 %v2702
      %v2865 = vunpack.c.h.b16 %v2702
      %v2866 = vunpack.c.l.b16 %v2703
      %v2867 = vunpack.c.h.b16 %v2703
      %v2868 = vunpack.c.l.b16 %v2704
      %v2869 = vunpack.c.h.b16 %v2704
      %v2870 = vunpack.c.l.b16 %v2705
      %v2871 = vunpack.c.h.b16 %v2705
      %v2872 = vunpack.c.l.b16 %v2706
      %v2873 = vunpack.c.h.b16 %v2706
      %v2874 = vunpack.c.l.b16 %v2707
      %v2875 = vunpack.c.h.b16 %v2707
      %v2876 = vunpack.c.l.b16 %v2708
      %v2877 = vunpack.c.h.b16 %v2708
      %v2878 = vunpack.c.l.b16 %v2709
      %v2879 = vunpack.c.h.b16 %v2709
      %v2880 = vunpack.c.l.b16 %v2710
      %v2881 = vunpack.c.h.b16 %v2710
      %v2882 = vunpack.c.l.b16 %v2711
      %v2883 = vunpack.c.h.b16 %v2711
      %v2884 = vunpack.c.l.b16 %v2712
      %v2885 = vunpack.c.h.b16 %v2712
      %v2886 = vunpack.c.l.b16 %v2713
      %v2887 = vunpack.c.h.b16 %v2713
      %v2888 = vunpack.c.l.b16 %v2714
      %v2889 = vunpack.c.h.b16 %v2714
      %v2890 = vunpack.c.l.b16 %v2715
      %v2891 = vunpack.c.h.b16 %v2715
      %v2892 = vunpack.c.l.b16 %v2716
      %v2893 = vunpack.c.h.b16 %v2716
      %v2894 = vunpack.c.l.b16 %v2717
      %v2895 = vunpack.c.h.b16 %v2717
      %v2896 = vunpack.c.l.b16 %v2718
      %v2897 = vunpack.c.h.b16 %v2718
      %v2898 = vunpack.c.l.b16 %v2719
      %v2899 = vunpack.c.h.b16 %v2719
      %v2900 = vunpack.c.l.b16 %v2720
      %v2901 = vunpack.c.h.b16 %v2720
      %v2902 = vunpack.c.l.b16 %v2721
      %v2903 = vunpack.c.h.b16 %v2721
      %v2904 = vunpack.c.l.b16 %v2722
      %v2905 = vunpack.c.h.b16 %v2722
      %v2906 = vunpack.c.l.b16 %v2723
      %v2907 = vunpack.c.h.b16 %v2723
      %v2908 = vunpack.c.l.b16 %v2724
      %v2909 = vunpack.c.h.b16 %v2724
      %v2910 = vunpack.c.l.b16 %v2725
      %v2911 = vunpack.c.h.b16 %v2725
      %v2912 = vunpack.c.l.b16 %v2726
      %v2913 = vunpack.c.h.b16 %v2726
      %v2914 = vunpack.c.l.b16 %v2727
      %v2915 = vunpack.c.h.b16 %v2727
      %v2916 = vunpack.c.l.b16 %v2728
      %v2917 = vunpack.c.h.b16 %v2728
      %v2918 = vunpack.c.l.b16 %v2729
      %v2919 = vunpack.c.h.b16 %v2729
      %v2920 = vunpack.c.l.b16 %v2730
      %v2921 = vunpack.c.h.b16 %v2730
      %v2922 = vunpack.c.l.b16 %v2731
      %v2923 = vunpack.c.h.b16 %v2731
      %v2924 = vunpack.c.l.b16 %v2732
      %v2925 = vunpack.c.h.b16 %v2732
      %v2926 = vunpack.c.l.b16 %v2733
      %v2927 = vunpack.c.h.b16 %v2733
      %v2928 = vunpack.c.l.b16 %v2734
      %v2929 = vunpack.c.h.b16 %v2734
      %v2930 = vunpack.c.l.b16 %v2735
      %v2931 = vunpack.c.h.b16 %v2735
      %v2932 = vunpack.c.l.b16 %v2736
      %v2933 = vunpack.c.h.b16 %v2736
      %v2934 = vunpack.c.l.b16 %v2737
      %v2935 = vunpack.c.h.b16 %v2737
      %v2936 = vunpack.c.l.b16 %v2738
      %v2937 = vunpack.c.h.b16 %v2738
      %v2938 = vunpack.c.l.b16 %v2739
      %v2939 = vunpack.c.h.b16 %v2739
      %v2940 = vunpack.c.l.b16 %v2740
      %v2941 = vunpack.c.h.b16 %v2740
      %v2942 = vunpack.c.l.b16 %v2741
      %v2943 = vunpack.c.h.b16 %v2741
      %v2944 = vpack.c.b16 %v2820, %v2816
      %v2945 = vpack.c.b16 %v2821, %v2817
      %v2946 = vpack.c.b16 %v2822, %v2818
      %v2947 = vpack.c.b16 %v2823, %v2819
      %v2948 = vpack.c.b16 %v2828, %v2824
      %v2949 = vpack.c.b16 %v2829, %v2825
      %v2950 = vpack.c.b16 %v2830, %v2826
      %v2951 = vpack.c.b16 %v2831, %v2827
      %v2952 = vpack.c.b16 %v2836, %v2832
      %v2953 = vpack.c.b16 %v2837, %v2833
      %v2954 = vpack.c.b16 %v2838, %v2834
      %v2955 = vpack.c.b16 %v2839, %v2835
      %v2956 = vpack.c.b16 %v2844, %v2840
      %v2957 = vpack.c.b16 %v2845, %v2841
      %v2958 = vpack.c.b16 %v2846, %v2842
      %v2959 = vpack.c.b16 %v2847, %v2843
      %v2960 = vpack.c.b16 %v2852, %v2848
      %v2961 = vpack.c.b16 %v2853, %v2849
      %v2962 = vpack.c.b16 %v2854, %v2850
      %v2963 = vpack.c.b16 %v2855, %v2851
      %v2964 = vpack.c.b16 %v2860, %v2856
      %v2965 = vpack.c.b16 %v2861, %v2857
      %v2966 = vpack.c.b16 %v2862, %v2858
      %v2967 = vpack.c.b16 %v2863, %v2859
      %v2968 = vpack.c.b16 %v2868, %v2864
      %v2969 = vpack.c.b16 %v2869, %v2865
      %v2970 = vpack.c.b16 %v2870, %v2866
      %v2971 = vpack.c.b16 %v2871, %v2867
      %v2972 = vpack.c.b16 %v2876, %v2872
      %v2973 = vpack.c.b16 %v2877, %v2873
      %v2974 = vpack.c.b16 %v2878, %v2874
      %v2975 = vpack.c.b16 %v2879, %v2875
      %v2976 = vpack.c.b16 %v2884, %v2880
      %v2977 = vpack.c.b16 %v2885, %v2881
      %v2978 = vpack.c.b16 %v2886, %v2882
      %v2979 = vpack.c.b16 %v2887, %v2883
      %v2980 = vpack.c.b16 %v2892, %v2888
      %v2981 = vpack.c.b16 %v2893, %v2889
      %v2982 = vpack.c.b16 %v2894, %v2890
      %v2983 = vpack.c.b16 %v2895, %v2891
      %v2984 = vpack.c.b16 %v2900, %v2896
      %v2985 = vpack.c.b16 %v2901, %v2897
      %v2986 = vpack.c.b16 %v2902, %v2898
      %v2987 = vpack.c.b16 %v2903, %v2899
      %v2988 = vpack.c.b16 %v2908, %v2904
      %v2989 = vpack.c.b16 %v2909, %v2905
      %v2990 = vpack.c.b16 %v2910, %v2906
      %v2991 = vpack.c.b16 %v2911, %v2907
      %v2992 = vpack.c.b16 %v2916, %v2912
      %v2993 = vpack.c.b16 %v2917, %v2913
      %v2994 = vpack.c.b16 %v2918, %v2914
      %v2995 = vpack.c.b16 %v2919, %v2915
      %v2996 = vpack.c.b16 %v2924, %v2920
      %v2997 = vpack.c.b16 %v2925, %v2921
      %v2998 = vpack.c.b16 %v2926, %v2922
      %v2999 = vpack.c.b16 %v2927, %v2923
      %v3000 = vpack.c.b16 %v2932, %v2928
      %v3001 = vpack.c.b16 %v2933, %v2929
      %v3002 = vpack.c.b16 %v2934, %v2930
      %v3003 = vpack.c.b16 %v2935, %v2931
      %v3004 = vpack.c.b16 %v2940, %v2936
      %v3005 = vpack.c.b16 %v2941, %v2937
      %v3006 = vpack.c.b16 %v2942, %v2938
      %v3007 = vpack.c.b16 %v2943, %v2939
      %3072 = vmatpush.bf16.msra.mxu0 %v2972
      %3073 = vmatpush.bf16.msra.mxu0 %v2968
      %3074 = vmatpush.bf16.msra.mxu0 %v2964
      %3075 = vmatpush.bf16.msra.mxu0 %v2960
      %3076 = vmatpush.bf16.msra.mxu0 %v2956
      %3077 = vmatpush.bf16.msra.mxu0 %v2952
      %3078 = vmatpush.bf16.msra.mxu0 %v2948
      %3079 = vmatpush.bf16.msra.mxu0 %v2944
      %3080 = vmatmul.bf16.gmra.mxu0 %v2676
      %v3081 = vpop.f32.mrf.mxu0
      %v3082 = vadd.f32 %v2744, %v3081
      %v3083 = vpop.f32.mrf.mxu0
      %3084 = vdwg.mxu0
      %3085 = vmatpush.bf16.msra.mxu0 %v3004
      %3086 = vmatpush.bf16.msra.mxu0 %v3000
      %3087 = vmatpush.bf16.msra.mxu0 %v2996
      %3088 = vmatpush.bf16.msra.mxu0 %v2992
      %3089 = vmatpush.bf16.msra.mxu0 %v2988
      %3090 = vmatpush.bf16.msra.mxu0 %v2984
      %3091 = vmatpush.bf16.msra.mxu0 %v2980
      %3092 = vmatpush.bf16.msra.mxu0 %v2976
      %3093 = vmatmul.bf16.gmra.mxu0 %v2677
      %v3094 = vpop.f32.mrf.mxu0
      %v3095 = vadd.f32 %v3082, %v3094
      %v3096 = vpop.f32.mrf.mxu0
      %3097 = vdwg.mxu0
      %3098 = vmatpush.bf16.msra.mxu0 %v2973
      %3099 = vmatpush.bf16.msra.mxu0 %v2969
      %3100 = vmatpush.bf16.msra.mxu0 %v2965
      %3101 = vmatpush.bf16.msra.mxu0 %v2961
      %3102 = vmatpush.bf16.msra.mxu0 %v2957
      %3103 = vmatpush.bf16.msra.mxu0 %v2953
      %3104 = vmatpush.bf16.msra.mxu0 %v2949
      %3105 = vmatpush.bf16.msra.mxu0 %v2945
      %3106 = vmatmul.bf16.gmra.mxu0 %v2676
      %v3107 = vpop.f32.mrf.mxu0
      %v3108 = vadd.f32 %v2745, %v3107
      %v3109 = vpop.f32.mrf.mxu0
      %3110 = vdwg.mxu0
      %3111 = vmatpush.bf16.msra.mxu0 %v3005
      %3112 = vmatpush.bf16.msra.mxu0 %v3001
      %3113 = vmatpush.bf16.msra.mxu0 %v2997
      %3114 = vmatpush.bf16.msra.mxu0 %v2993
      %3115 = vmatpush.bf16.msra.mxu0 %v2989
      %3116 = vmatpush.bf16.msra.mxu0 %v2985
      %3117 = vmatpush.bf16.msra.mxu0 %v2981
      %3118 = vmatpush.bf16.msra.mxu0 %v2977
      %3119 = vmatmul.bf16.gmra.mxu0 %v2677
      %v3120 = vpop.f32.mrf.mxu0
      %v3121 = vadd.f32 %v3108, %v3120
      %v3122 = vpop.f32.mrf.mxu0
      %3123 = vdwg.mxu0
      %3124 = vmatpush.bf16.msra.mxu0 %v2974
      %3125 = vmatpush.bf16.msra.mxu0 %v2970
      %3126 = vmatpush.bf16.msra.mxu0 %v2966
      %3127 = vmatpush.bf16.msra.mxu0 %v2962
      %3128 = vmatpush.bf16.msra.mxu0 %v2958
      %3129 = vmatpush.bf16.msra.mxu0 %v2954
      %3130 = vmatpush.bf16.msra.mxu0 %v2950
      %3131 = vmatpush.bf16.msra.mxu0 %v2946
      %3132 = vmatmul.bf16.gmra.mxu0 %v2676
      %v3133 = vpop.f32.mrf.mxu0
      %v3134 = vadd.f32 %v2746, %v3133
      %v3135 = vpop.f32.mrf.mxu0
      %3136 = vdwg.mxu0
      %3137 = vmatpush.bf16.msra.mxu0 %v3006
      %3138 = vmatpush.bf16.msra.mxu0 %v3002
      %3139 = vmatpush.bf16.msra.mxu0 %v2998
      %3140 = vmatpush.bf16.msra.mxu0 %v2994
      %3141 = vmatpush.bf16.msra.mxu0 %v2990
      %3142 = vmatpush.bf16.msra.mxu0 %v2986
      %3143 = vmatpush.bf16.msra.mxu0 %v2982
      %3144 = vmatpush.bf16.msra.mxu0 %v2978
      %3145 = vmatmul.bf16.gmra.mxu0 %v2677
      %v3146 = vpop.f32.mrf.mxu0
      %v3147 = vadd.f32 %v3134, %v3146
      %v3148 = vpop.f32.mrf.mxu0
      %3149 = vdwg.mxu0
      %3150 = vmatpush.bf16.msra.mxu0 %v2975
      %3151 = vmatpush.bf16.msra.mxu0 %v2971
      %3152 = vmatpush.bf16.msra.mxu0 %v2967
      %3153 = vmatpush.bf16.msra.mxu0 %v2963
      %3154 = vmatpush.bf16.msra.mxu0 %v2959
      %3155 = vmatpush.bf16.msra.mxu0 %v2955
      %3156 = vmatpush.bf16.msra.mxu0 %v2951
      %3157 = vmatpush.bf16.msra.mxu0 %v2947
      %3158 = vmatmul.bf16.gmra.mxu0 %v2676
      %v3159 = vpop.f32.mrf.mxu0
      %v3160 = vadd.f32 %v2747, %v3159
      %v3161 = vpop.f32.mrf.mxu0
      %3162 = vdwg.mxu0
      %3163 = vmatpush.bf16.msra.mxu0 %v3007
      %3164 = vmatpush.bf16.msra.mxu0 %v3003
      %3165 = vmatpush.bf16.msra.mxu0 %v2999
      %3166 = vmatpush.bf16.msra.mxu0 %v2995
      %3167 = vmatpush.bf16.msra.mxu0 %v2991
      %3168 = vmatpush.bf16.msra.mxu0 %v2987
      %3169 = vmatpush.bf16.msra.mxu0 %v2983
      %3170 = vmatpush.bf16.msra.mxu0 %v2979
      %3171 = vmatmul.bf16.gmra.mxu0 %v2677
      %v3172 = vpop.f32.mrf.mxu0
      %v3173 = vadd.f32 %v3160, %v3172
      %v3174 = vpop.f32.mrf.mxu0
      %3175 = vdwg.mxu0
      %v3176 = vmax.f32 %v3095, 0.0
      %v3177 = vmax.f32 %v3121, 0.0
      %v3178 = vmax.f32 %v3147, 0.0
      %v3179 = vmax.f32 %v3173, 0.0
      %v3180 = vpack.c.bf16 %v3176, %v3176
      %v3181 = vpack.c.bf16 %v3177, %v3177
      %v3182 = vpack.c.bf16 %v3178, %v3178
      %v3183 = vpack.c.bf16 %v3179, %v3179
      %v3184 = vld [vmem:[%s11] sm:$0xf]
      %v3185 = vld [vmem:[%s11 + $0x4] sm:$0xf]
      %v3186 = vld [vmem:[%s11 + $0x8] sm:$0xf]
      %v3187 = vld [vmem:[%s11 + $0xc] sm:$0xf]
      %v3188 = vld [vmem:[%s11 + $0x10] sm:$0xf]
      %v3189 = vld [vmem:[%s11 + $0x14] sm:$0xf]
      %v3190 = vld [vmem:[%s11 + $0x18] sm:$0xf]
      %v3191 = vld [vmem:[%s11 + $0x1c] sm:$0xf]
      %v3192 = vld [vmem:[%s11 + $0x20] sm:$0xf]
      %v3193 = vld [vmem:[%s11 + $0x24] sm:$0xf]
      %v3194 = vld [vmem:[%s11 + $0x28] sm:$0xf]
      %v3195 = vld [vmem:[%s11 + $0x2c] sm:$0xf]
      %v3196 = vld [vmem:[%s11 + $0x30] sm:$0xf]
      %v3197 = vld [vmem:[%s11 + $0x34] sm:$0xf]
      %v3198 = vld [vmem:[%s11 + $0x38] sm:$0xf]
      %v3199 = vld [vmem:[%s11 + $0x3c] sm:$0xf]
      %v3200 = vld [vmem:[%s11 + $0x40] sm:$0xf]
      %v3201 = vld [vmem:[%s11 + $0x44] sm:$0xf]
      %v3202 = vld [vmem:[%s11 + $0x48] sm:$0xf]
      %v3203 = vld [vmem:[%s11 + $0x4c] sm:$0xf]
      %v3204 = vld [vmem:[%s11 + $0x50] sm:$0xf]
      %v3205 = vld [vmem:[%s11 + $0x54] sm:$0xf]
      %v3206 = vld [vmem:[%s11 + $0x58] sm:$0xf]
      %v3207 = vld [vmem:[%s11 + $0x5c] sm:$0xf]
      %v3208 = vld [vmem:[%s11 + $0x60] sm:$0xf]
      %v3209 = vld [vmem:[%s11 + $0x64] sm:$0xf]
      %v3210 = vld [vmem:[%s11 + $0x68] sm:$0xf]
      %v3211 = vld [vmem:[%s11 + $0x6c] sm:$0xf]
      %v3212 = vld [vmem:[%s11 + $0x70] sm:$0xf]
      %v3213 = vld [vmem:[%s11 + $0x74] sm:$0xf]
      %v3214 = vld [vmem:[%s11 + $0x78] sm:$0xf]
      %v3215 = vld [vmem:[%s11 + $0x7c] sm:$0xf]
      %v3216 = vld [vmem:[%s11 + $0x80] sm:$0xf]
      %v3217 = vld [vmem:[%s11 + $0x84] sm:$0xf]
      %v3218 = vld [vmem:[%s11 + $0x88] sm:$0xf]
      %v3219 = vld [vmem:[%s11 + $0x8c] sm:$0xf]
      %v3220 = vld [vmem:[%s11 + $0x90] sm:$0xf]
      %v3221 = vld [vmem:[%s11 + $0x94] sm:$0xf]
      %v3222 = vld [vmem:[%s11 + $0x98] sm:$0xf]
      %v3223 = vld [vmem:[%s11 + $0x9c] sm:$0xf]
      %v3224 = vld [vmem:[%s11 + $0xa0] sm:$0xf]
      %v3225 = vld [vmem:[%s11 + $0xa4] sm:$0xf]
      %v3226 = vld [vmem:[%s11 + $0xa8] sm:$0xf]
      %v3227 = vld [vmem:[%s11 + $0xac] sm:$0xf]
      %v3228 = vld [vmem:[%s11 + $0xb0] sm:$0xf]
      %v3229 = vld [vmem:[%s11 + $0xb4] sm:$0xf]
      %v3230 = vld [vmem:[%s11 + $0xb8] sm:$0xf]
      %v3231 = vld [vmem:[%s11 + $0xbc] sm:$0xf]
      %v3232 = vld [vmem:[%s11 + $0xc0] sm:$0xf]
      %v3233 = vld [vmem:[%s11 + $0xc4] sm:$0xf]
      %v3234 = vld [vmem:[%s11 + $0xc8] sm:$0xf]
      %v3235 = vld [vmem:[%s11 + $0xcc] sm:$0xf]
      %v3236 = vld [vmem:[%s11 + $0xd0] sm:$0xf]
      %v3237 = vld [vmem:[%s11 + $0xd4] sm:$0xf]
      %v3238 = vld [vmem:[%s11 + $0xd8] sm:$0xf]
      %v3239 = vld [vmem:[%s11 + $0xdc] sm:$0xf]
      %v3240 = vld [vmem:[%s11 + $0xe0] sm:$0xf]
      %v3241 = vld [vmem:[%s11 + $0xe4] sm:$0xf]
      %v3242 = vld [vmem:[%s11 + $0xe8] sm:$0xf]
      %v3243 = vld [vmem:[%s11 + $0xec] sm:$0xf]
      %v3244 = vld [vmem:[%s11 + $0xf0] sm:$0xf]
      %v3245 = vld [vmem:[%s11 + $0xf4] sm:$0xf]
      %v3246 = vld [vmem:[%s11 + $0xf8] sm:$0xf]
      %v3247 = vld [vmem:[%s11 + $0xfc] sm:$0xf]
      %v3248 = vld [vmem:[%s12] sm:$0x1]
      %v3250 = vperm.slane %v3248, 0
      %v3316 = vunpack.c.l.b16 %v3184
      %v3317 = vunpack.c.l.b16 %v3185
      %v3318 = vunpack.c.l.b16 %v3186
      %v3319 = vunpack.c.l.b16 %v3187
      %v3320 = vunpack.c.l.b16 %v3188
      %v3321 = vunpack.c.l.b16 %v3189
      %v3322 = vunpack.c.l.b16 %v3190
      %v3323 = vunpack.c.l.b16 %v3191
      %v3324 = vunpack.c.l.b16 %v3192
      %v3325 = vunpack.c.l.b16 %v3193
      %v3326 = vunpack.c.l.b16 %v3194
      %v3327 = vunpack.c.l.b16 %v3195
      %v3328 = vunpack.c.l.b16 %v3196
      %v3329 = vunpack.c.l.b16 %v3197
      %v3330 = vunpack.c.l.b16 %v3198
      %v3331 = vunpack.c.l.b16 %v3199
      %v3332 = vunpack.c.l.b16 %v3200
      %v3333 = vunpack.c.l.b16 %v3201
      %v3334 = vunpack.c.l.b16 %v3202
      %v3335 = vunpack.c.l.b16 %v3203
      %v3336 = vunpack.c.l.b16 %v3204
      %v3337 = vunpack.c.l.b16 %v3205
      %v3338 = vunpack.c.l.b16 %v3206
      %v3339 = vunpack.c.l.b16 %v3207
      %v3340 = vunpack.c.l.b16 %v3208
      %v3341 = vunpack.c.l.b16 %v3209
      %v3342 = vunpack.c.l.b16 %v3210
      %v3343 = vunpack.c.l.b16 %v3211
      %v3344 = vunpack.c.l.b16 %v3212
      %v3345 = vunpack.c.l.b16 %v3213
      %v3346 = vunpack.c.l.b16 %v3214
      %v3347 = vunpack.c.l.b16 %v3215
      %v3348 = vunpack.c.l.b16 %v3216
      %v3349 = vunpack.c.l.b16 %v3217
      %v3350 = vunpack.c.l.b16 %v3218
      %v3351 = vunpack.c.l.b16 %v3219
      %v3352 = vunpack.c.l.b16 %v3220
      %v3353 = vunpack.c.l.b16 %v3221
      %v3354 = vunpack.c.l.b16 %v3222
      %v3355 = vunpack.c.l.b16 %v3223
      %v3356 = vunpack.c.l.b16 %v3224
      %v3357 = vunpack.c.l.b16 %v3225
      %v3358 = vunpack.c.l.b16 %v3226
      %v3359 = vunpack.c.l.b16 %v3227
      %v3360 = vunpack.c.l.b16 %v3228
      %v3361 = vunpack.c.l.b16 %v3229
      %v3362 = vunpack.c.l.b16 %v3230
      %v3363 = vunpack.c.l.b16 %v3231
      %v3364 = vunpack.c.l.b16 %v3232
      %v3365 = vunpack.c.l.b16 %v3233
      %v3366 = vunpack.c.l.b16 %v3234
      %v3367 = vunpack.c.l.b16 %v3235
      %v3368 = vunpack.c.l.b16 %v3236
      %v3369 = vunpack.c.l.b16 %v3237
      %v3370 = vunpack.c.l.b16 %v3238
      %v3371 = vunpack.c.l.b16 %v3239
      %v3372 = vunpack.c.l.b16 %v3240
      %v3373 = vunpack.c.l.b16 %v3241
      %v3374 = vunpack.c.l.b16 %v3242
      %v3375 = vunpack.c.l.b16 %v3243
      %v3376 = vunpack.c.l.b16 %v3244
      %v3377 = vunpack.c.l.b16 %v3245
      %v3378 = vunpack.c.l.b16 %v3246
      %v3379 = vunpack.c.l.b16 %v3247
      %v3380 = vpack.c.b16 %v3317, %v3316
      %v3381 = vpack.c.b16 %v3319, %v3318
      %v3382 = vpack.c.b16 %v3321, %v3320
      %v3383 = vpack.c.b16 %v3323, %v3322
      %v3384 = vpack.c.b16 %v3325, %v3324
      %v3385 = vpack.c.b16 %v3327, %v3326
      %v3386 = vpack.c.b16 %v3329, %v3328
      %v3387 = vpack.c.b16 %v3331, %v3330
      %v3388 = vpack.c.b16 %v3333, %v3332
      %v3389 = vpack.c.b16 %v3335, %v3334
      %v3390 = vpack.c.b16 %v3337, %v3336
      %v3391 = vpack.c.b16 %v3339, %v3338
      %v3392 = vpack.c.b16 %v3341, %v3340
      %v3393 = vpack.c.b16 %v3343, %v3342
      %v3394 = vpack.c.b16 %v3345, %v3344
      %v3395 = vpack.c.b16 %v3347, %v3346
      %v3396 = vpack.c.b16 %v3349, %v3348
      %v3397 = vpack.c.b16 %v3351, %v3350
      %v3398 = vpack.c.b16 %v3353, %v3352
      %v3399 = vpack.c.b16 %v3355, %v3354
      %v3400 = vpack.c.b16 %v3357, %v3356
      %v3401 = vpack.c.b16 %v3359, %v3358
      %v3402 = vpack.c.b16 %v3361, %v3360
      %v3403 = vpack.c.b16 %v3363, %v3362
      %v3404 = vpack.c.b16 %v3365, %v3364
      %v3405 = vpack.c.b16 %v3367, %v3366
      %v3406 = vpack.c.b16 %v3369, %v3368
      %v3407 = vpack.c.b16 %v3371, %v3370
      %v3408 = vpack.c.b16 %v3373, %v3372
      %v3409 = vpack.c.b16 %v3375, %v3374
      %v3410 = vpack.c.b16 %v3377, %v3376
      %v3411 = vpack.c.b16 %v3379, %v3378
      %3444 = vmatpush.bf16.msra.mxu0 %v3387
      %3445 = vmatpush.bf16.msra.mxu0 %v3386
      %3446 = vmatpush.bf16.msra.mxu0 %v3385
      %3447 = vmatpush.bf16.msra.mxu0 %v3384
      %3448 = vmatpush.bf16.msra.mxu0 %v3383
      %3449 = vmatpush.bf16.msra.mxu0 %v3382
      %3450 = vmatpush.bf16.msra.mxu0 %v3381
      %3451 = vmatpush.bf16.msra.mxu0 %v3380
      %3452 = vmatmul.bf16.gmra.mxu0 %v3180
      %v3453 = vpop.f32.mrf.mxu0
      %v3454 = vadd.f32 %v3250, %v3453
      %v3455 = vpop.f32.mrf.mxu0
      %3456 = vdwg.mxu0
      %3457 = vmatpush.bf16.msra.mxu0 %v3395
      %3458 = vmatpush.bf16.msra.mxu0 %v3394
      %3459 = vmatpush.bf16.msra.mxu0 %v3393
      %3460 = vmatpush.bf16.msra.mxu0 %v3392
      %3461 = vmatpush.bf16.msra.mxu0 %v3391
      %3462 = vmatpush.bf16.msra.mxu0 %v3390
      %3463 = vmatpush.bf16.msra.mxu0 %v3389
      %3464 = vmatpush.bf16.msra.mxu0 %v3388
      %3465 = vmatmul.bf16.gmra.mxu0 %v3181
      %v3466 = vpop.f32.mrf.mxu0
      %v3467 = vadd.f32 %v3454, %v3466
      %v3468 = vpop.f32.mrf.mxu0
      %3469 = vdwg.mxu0
      %3470 = vmatpush.bf16.msra.mxu0 %v3403
      %3471 = vmatpush.bf16.msra.mxu0 %v3402
      %3472 = vmatpush.bf16.msra.mxu0 %v3401
      %3473 = vmatpush.bf16.msra.mxu0 %v3400
      %3474 = vmatpush.bf16.msra.mxu0 %v3399
      %3475 = vmatpush.bf16.msra.mxu0 %v3398
      %3476 = vmatpush.bf16.msra.mxu0 %v3397
      %3477 = vmatpush.bf16.msra.mxu0 %v3396
      %3478 = vmatmul.bf16.gmra.mxu0 %v3182
      %v3479 = vpop.f32.mrf.mxu0
      %v3480 = vadd.f32 %v3467, %v3479
      %v3481 = vpop.f32.mrf.mxu0
      %3482 = vdwg.mxu0
      %3483 = vmatpush.bf16.msra.mxu0 %v3411
      %3484 = vmatpush.bf16.msra.mxu0 %v3410
      %3485 = vmatpush.bf16.msra.mxu0 %v3409
      %3486 = vmatpush.bf16.msra.mxu0 %v3408
      %3487 = vmatpush.bf16.msra.mxu0 %v3407
      %3488 = vmatpush.bf16.msra.mxu0 %v3406
      %3489 = vmatpush.bf16.msra.mxu0 %v3405
      %3490 = vmatpush.bf16.msra.mxu0 %v3404
      %3491 = vmatmul.bf16.gmra.mxu0 %v3183
      %v3492 = vpop.f32.mrf.mxu0
      %v3493 = vadd.f32 %v3480, %v3492
      %v3494 = vpop.f32.mrf.mxu0
      %3495 = vdwg.mxu0
      %3496 = vst.msk [vmem:[#allocation6] sm:$0xf] %vm458, %v3493
      %v3497 = vld [vmem:[#allocation6] ss:$2 sm:$0x3]
      %s3498 = scalar_lea.vmem [#allocation6], 1
      %v3499 = vld [vmem:[%s3498] ss:$2 sm:$0x3]
      %3501 = vrot.lane.b32.xlu0 %v3499, 64
      %v3502 = vpop.permute.xlu0 %3501
      %v3504 = vsel %vm1267, %v3497, %v3502
      %v3505 = vsub.f32 0.0, %v3504
      %v3506 = vmul.f32 %v3505, 1.442695
      %v3507 = vpow.pop %v3506
      %v3508 = vadd.f32 %v3507, 1.0
      %v3509 = vrcp.pop %v3508
      %3510 = vst [vmem:[%s438] sm:$0x3] %v3509
      %p3511 = scmp.lt.s32.totalorder %s24, 1
      %s3512 = scalar_select %p3511, %s24, 1
      %s3513 = smul.addr %s3512, 2
      %s3514 = scalar_lea.vmem %s13, %s3513
      // Predicated region
      $region73: #{deep_conv_autoencoder.1} parent=71 // pred_check
        %p3515 = pneg %p320
      $region74: #{deep_conv_autoencoder.1} parent=71 // pred_check_branch
        %3517 = sbr.rel (%p3515) target = $region76
      $region75: #{deep_conv_autoencoder.1} parent=71 // pred_region
        _
      $region76: #{deep_conv_autoencoder.1} parent=71 // pred_fallthru
        _
    $region72: #{deep_conv_autoencoder.1} parent=5 // pred_fallthru
      _
    %p3518 = scmp.le.s32.totalorder 2, %s19
    // Predicated region
    $region77: #{deep_conv_autoencoder.1} parent=5 // pred_check
      %p3519 = pneg %p3518
    $region78: #{deep_conv_autoencoder.1} parent=5 // pred_check_branch
      %3521 = sbr.rel (%p3519) target = $region80
    $region79: #{deep_conv_autoencoder.1} parent=5 // pred_region
      %s3522 = ssub.s32 %s19, 2
      // Predicated region
      $region81: #{deep_conv_autoencoder.1} parent=79 // pred_check
        %p3523 = pneg %p326
      $region82: #{deep_conv_autoencoder.1} parent=79 // pred_check_branch
        %3525 = sbr.rel (%p3523) target = $region84
      $region83: #{deep_conv_autoencoder.1} parent=79 // pred_region
        %p3526 = scmp.lt.s32.totalorder %s25, 1
        %s3527 = scalar_select %p3526, %s25, 1
        %s3528 = smul.addr %s3527, 2
        %s3529 = scalar_lea.vmem %s13, %s3528
      $region84: #{deep_conv_autoencoder.1} parent=79 // pred_fallthru
        _
    $region80: #{deep_conv_autoencoder.1} parent=5 // pred_fallthru
      _
  $region6: #{deep_conv_autoencoder.1} parent=0 // loop_footer
    %s23 = sadd.s32 1, %s19
  $region7: #{deep_conv_autoencoder.1} parent=0 // loop_footer_branch
    %18 = sbr.rel target = $region3
  $region8: #{deep_conv_autoencoder.1} parent=0 // loop_exit
    _

</llo_original>
